<compile_context>
chip_gen: v7x
topology: tpu7x:2x2x1
jax: 0.10.0
libtpu: 0.0.40
codegen_flags: <defaults>
</compile_context>

<pallas_src>
import functools

import jax
import jax.numpy as jnp
from jax.experimental import pallas as pl
from jax.experimental.pallas import tpu as pltpu

MXU_DTYPE = jnp.bfloat16   # matmul-input / matmul-only-intermediate dtype
ACC_DTYPE = jnp.float32    # accumulator & elementwise (BN / ReLU / residual) dtype


def _row_block(m, sub):
    """Row-block size: one full block for small M, or 2 parallel steps for larger M."""
    if m >= 256 and (m // 2) % sub == 0:
        return m // 2
    return m


# ----------------------------- Pallas kernels -----------------------------

def _make_conv_kernel(shortcut, has_act):
    """Conv-as-matmul kernel with a compile-time-selected fused epilogue.

    shortcut: None | 'id' (residual add) | 'proj' (1x1 projection-shortcut matmul add)
    has_act : also fuse `relu(acc * scale + shift)` (folded inference BN + ReLU)
    Ref order: a, w, [residual | (a_short, w_short)], [scale, shift], out
    """
    def kernel(*refs):
        idx = 0
        a_ref = refs[idx]; idx += 1
        w_ref = refs[idx]; idx += 1
        acc = jnp.dot(a_ref[...], w_ref[...], preferred_element_type=ACC_DTYPE)
        if shortcut == 'id':
            r_ref = refs[idx]; idx += 1
            acc = acc + r_ref[...]
        elif shortcut == 'proj':
            as_ref = refs[idx]; ws_ref = refs[idx + 1]; idx += 2
            acc = acc + jnp.dot(as_ref[...], ws_ref[...],
                                preferred_element_type=ACC_DTYPE)
        if has_act:
            s_ref = refs[idx]; b_ref = refs[idx + 1]; idx += 2
            acc = jnp.maximum(acc * s_ref[...] + b_ref[...], 0.0)
        o_ref = refs[idx]
        o_ref[...] = acc.astype(o_ref.dtype)

    return kernel


def _bn_relu_kernel(x_ref, scale_ref, shift_ref, o_ref):
    o_ref[...] = jnp.maximum(x_ref[...] * scale_ref[...] + shift_ref[...], 0.0)


def _head_kernel(x_ref, scale_ref, shift_ref, w_ref, b_ref, o_ref):
    # BN + ReLU + global-avg-pool over HW + FC + bias, all fused.
    y = jnp.maximum(x_ref[...].astype(ACC_DTYPE) * scale_ref[...] + shift_ref[...], 0.0)
    pooled = jnp.mean(y, axis=1)                                            # (N, C)
    o_ref[...] = (jnp.dot(pooled, w_ref[...], preferred_element_type=ACC_DTYPE)
                  + b_ref[...])


# ----------------------------- kernel wrappers -----------------------------

def conv_matmul(a, w, *, act=None, residual=None, a_short=None, w_short=None,
                out_dtype=ACC_DTYPE):
    """One fused im2col-conv kernel.

    a: (M, K) patches, w: (K, Cout) reshaped conv weight.  Optional fused epilogues:
      * residual (M, Cout) f32                 -> identity-shortcut add
      * a_short (M, Ks) / w_short (Ks, Cout)   -> 1x1 projection-shortcut matmul add
      * act = (scale, shift), each (Cout,)     -> folded-BN + ReLU on the accumulator
    Result stored as `out_dtype` (bf16 when the only consumers are further matmuls).
    """
    M, K = a.shape
    Cout = w.shape[1]
    bm = _row_block(M, sub=16)
    shortcut = 'id' if residual is not None else ('proj' if a_short is not None else None)

    in_specs = [pl.BlockSpec((bm, K), lambda i: (i, 0)),
                pl.BlockSpec((K, Cout), lambda i: (0, 0))]
    args = [a.astype(MXU_DTYPE), w.astype(MXU_DTYPE)]
    if shortcut == 'id':
        in_specs.append(pl.BlockSpec((bm, Cout), lambda i: (i, 0)))
        args.append(residual.astype(ACC_DTYPE))
    elif shortcut == 'proj':
        Ks = a_short.shape[1]
        in_specs += [pl.BlockSpec((bm, Ks), lambda i: (i, 0)),
                     pl.BlockSpec((Ks, Cout), lambda i: (0, 0))]
        args += [a_short.astype(MXU_DTYPE), w_short.astype(MXU_DTYPE)]
    if act is not None:
        scale, shift = act
        in_specs += [pl.BlockSpec((1, Cout), lambda i: (0, 0)),
                     pl.BlockSpec((1, Cout), lambda i: (0, 0))]
        args += [scale.reshape(1, Cout).astype(ACC_DTYPE),
                 shift.reshape(1, Cout).astype(ACC_DTYPE)]

    return pl.pallas_call(
        _make_conv_kernel(shortcut, act is not None),
        out_shape=jax.ShapeDtypeStruct((M, Cout), out_dtype),
        grid=(M // bm,),
        in_specs=in_specs,
        out_specs=pl.BlockSpec((bm, Cout), lambda i: (i, 0)),
        compiler_params=pltpu.CompilerParams(dimension_semantics=("parallel",)),
    )(*args)


def pallas_bn_relu(x2d, scale, shift):
    """Standalone inference BN + ReLU (only needed for identity-shortcut blocks,
    whose raw input must survive for the residual).  x2d: (M, C) f32."""
    M, C = x2d.shape
    bm = _row_block(M, sub=8)
    return pl.pallas_call(
        _bn_relu_kernel,
        out_shape=jax.ShapeDtypeStruct((M, C), ACC_DTYPE),
        grid=(M // bm,),
        in_specs=[pl.BlockSpec((bm, C), lambda i: (i, 0)),
                  pl.BlockSpec((1, C), lambda i: (0, 0)),
                  pl.BlockSpec((1, C), lambda i: (0, 0))],
        out_specs=pl.BlockSpec((bm, C), lambda i: (i, 0)),
        compiler_params=pltpu.CompilerParams(dimension_semantics=("parallel",)),
    )(x2d.astype(ACC_DTYPE), scale.reshape(1, C), shift.reshape(1, C))


def branch_head(x, p):
    """Fused BN + ReLU -> global-avg-pool -> FC + bias.  x: (N, H, W, C) NHWC."""
    N, H, W, C = x.shape
    scale, shift = _fold_bn(p['bn'])
    num_classes = p['fc_w'].shape[1]
    return pl.pallas_call(
        _head_kernel,
        out_shape=jax.ShapeDtypeStruct((N, num_classes), ACC_DTYPE),
        grid=(1,),
        in_specs=[pl.BlockSpec((N, H * W, C), lambda i: (0, 0, 0)),
                  pl.BlockSpec((1, 1, C), lambda i: (0, 0, 0)),
                  pl.BlockSpec((1, 1, C), lambda i: (0, 0, 0)),
                  pl.BlockSpec((C, num_classes), lambda i: (0, 0)),
                  pl.BlockSpec((1, num_classes), lambda i: (0, 0))],
        out_specs=pl.BlockSpec((N, num_classes), lambda i: (0, 0)),
        compiler_params=pltpu.CompilerParams(dimension_semantics=("parallel",)),
    )(x.reshape(N, H * W, C),
      scale.reshape(1, 1, C), shift.reshape(1, 1, C),
      p['fc_w'].astype(ACC_DTYPE), p['fc_b'].astype(ACC_DTYPE))


# ----------------------------- JAX glue (fused under jit) -----------------------------

def _fold_bn(bn, eps=1e-5):
    scale = bn['gamma'] / jnp.sqrt(bn['var'] + eps)
    shift = bn['beta'] - bn['mean'] * scale
    return scale, shift


def _im2col(x, kh, kw, stride, pad):
    """x: (N, H, W, C) NHWC -> ((N*Ho*Wo, kh*kw*C), Ho, Wo).  Zero padding."""
    N, H, W, C = x.shape
    Ho = (H + 2 * pad - kh) // stride + 1
    Wo = (W + 2 * pad - kw) // stride + 1
    xp = jnp.pad(x, ((0, 0), (pad, pad), (pad, pad), (0, 0)))
    cols = []
    for i in range(kh):
        for j in range(kw):
            cols.append(xp[:, i:i + (Ho - 1) * stride + 1:stride,
                           j:j + (Wo - 1) * stride + 1:stride, :])
    patches = jnp.concatenate(cols, axis=-1)
    return patches.reshape(N * Ho * Wo, kh * kw * C), Ho, Wo


def basic_block(x, p, stride, *, input_pre_activated, fuse_next_act):
    """Pre-activation WideResNet basic block.

    input_pre_activated: x is already relu(bn1(x_raw)) (fused into the producer kernel);
                         only legal for projection-shortcut blocks (raw input unused).
    fuse_next_act      : (scale, shift) of the NEXT block's bn1 to fuse into this block's
                         conv2 epilogue, or None (output stays raw f32 for the head).
    """
    N, H, W, cin = x.shape
    cout = p['conv1'].shape[-1]
    equal_in_out = (cin == cout) and (stride == 1)
    s2, b2 = _fold_bn(p['bn2'])

    if input_pre_activated:
        o = x                                  # already relu(bn1(x_raw)); raw not needed
    else:
        s1, b1 = _fold_bn(p['bn1'])
        o = pallas_bn_relu(x.reshape(N * H * W, cin), s1, b1).reshape(N, H, W, cin)

    # conv1 (3x3, stride) with BN2 + ReLU fused into the matmul epilogue.
    a1, Ho, Wo = _im2col(o, 3, 3, stride, 1)
    out1 = conv_matmul(a1, p['conv1'].reshape(9 * cin, cout),
                       act=(s2, b2), out_dtype=MXU_DTYPE)           # (N*Ho*Wo, cout)

    # conv2 (3x3, stride 1) with the shortcut (and optionally the next block's
    # pre-activation) fused into the epilogue.
    a2, _, _ = _im2col(out1.reshape(N, Ho, Wo, cout), 3, 3, 1, 1)
    w2 = p['conv2'].reshape(9 * cout, cout)
    out_dtype = MXU_DTYPE if fuse_next_act is not None else ACC_DTYPE
    if equal_in_out:
        y = conv_matmul(a2, w2, residual=x.reshape(N * Ho * Wo, cout),
                        act=fuse_next_act, out_dtype=out_dtype)
    else:
        o_s = o[:, ::stride, ::stride, :].reshape(N * Ho * Wo, cin)  # strided 1x1 tap
        y = conv_matmul(a2, w2, a_short=o_s,
                        w_short=p['conv_short'].reshape(cin, cout),
                        act=fuse_next_act, out_dtype=out_dtype)
    return y.reshape(N, Ho, Wo, cout)


def forward_pruned(params, x_nchw, *, inference_branch):
    """Multi-exit WideResNet computing only the selected exit (later work pruned)."""
    assert 0 <= inference_branch < 3
    x = jnp.transpose(x_nchw, (0, 2, 3, 1)).astype(ACC_DTYPE)        # NCHW -> NHWC
    N = x.shape[0]
    nblocks = inference_branch + 1
    strides = (1, 2, 2)[:nblocks]
    blocks = [params[f'block{i + 1}'] for i in range(nblocks)]

    def preact_of(i):
        """bn1+relu of block i as a fusable (scale, shift), or None if block i needs
        its raw input (identity shortcut) or the producer feeds the branch head."""
        if i >= nblocks:
            return None
        conv1 = blocks[i]['conv1']
        cin, cout = conv1.shape[2], conv1.shape[3]
        if cin == cout and strides[i] == 1:
            return None
        return _fold_bn(blocks[i]['bn1'])

    # Stem conv (3x3, stride 1, pad 1), with block1's pre-activation fused in when legal.
    a0, Ho, Wo = _im2col(x, 3, 3, 1, 1)
    c0 = params['conv1'].shape[-1]
    fs = preact_of(0)
    out = conv_matmul(a0, params['conv1'].reshape(-1, c0), act=fs,
                      out_dtype=MXU_DTYPE if fs is not None else ACC_DTYPE
                      ).reshape(N, Ho, Wo, c0)
    pre_activated = fs is not None

    for i in range(nblocks):
        nfs = preact_of(i + 1)
        out = basic_block(out, blocks[i], strides[i],
                          input_pre_activated=pre_activated, fuse_next_act=nfs)
        pre_activated = nfs is not None

    # `out` is the raw stage output (the last block never fuses a next activation).
    return branch_head(out, params[f'branch{inference_branch + 1}'])


class WrapperModel:
    """JAX/Pallas equivalent of the PyTorch `wrapper_model`: returns branch
    `inference_branch` logits.  The forward is jitted and pruned at trace time."""

    def __init__(self, params, inference_branch):
        self.params = params
        self.inference_branch = inference_branch
        self._fwd = jax.jit(functools.partial(forward_pruned,
                                              inference_branch=inference_branch))

    def __call__(self, x_nchw):
        return self._fwd(self.params, x_nchw)


# ----------------------------- deterministic parameter init -----------------------------

def _init_bn(key, c):
    k1, k2 = jax.random.split(key)
    return {
        'gamma': 1.0 + 0.1 * jax.random.normal(k1, (c,), jnp.float32),
        'beta': 0.1 * jax.random.normal(k2, (c,), jnp.float32),
        'mean': jnp.zeros((c,), jnp.float32),
        'var': jnp.ones((c,), jnp.float32),
    }


def _init_conv(key, kh, kw, cin, cout):
    std = (2.0 / (kh * kw * cin)) ** 0.5
    return std * jax.random.normal(key, (kh, kw, cin, cout), jnp.float32)


def init_params(key, num_classes=10):
    channels = (8, 16, 32, 64)
    keys = iter(jax.random.split(key, 32))
    params = {'conv1': _init_conv(next(keys), 3, 3, 3, channels[0])}
    cin = channels[0]
    for i, cout in enumerate(channels[1:], start=1):
        params[f'block{i}'] = {
            'bn1': _init_bn(next(keys), cin),
            'conv1': _init_conv(next(keys), 3, 3, cin, cout),
            'bn2': _init_bn(next(keys), cout),
            'conv2': _init_conv(next(keys), 3, 3, cout, cout),
            'conv_short': _init_conv(next(keys), 1, 1, cin, cout),
        }
        params[f'branch{i}'] = {
            'bn': _init_bn(next(keys), cout),
            'fc_w': (1.0 / cout ** 0.5)
                    * jax.random.normal(next(keys), (cout, num_classes), jnp.float32),
            'fc_b': jnp.zeros((1, num_classes), jnp.float32),
        }
        cin = cout
    return params


if __name__ == "__main__":
    key = jax.random.PRNGKey(0)
    pkey, xkey = jax.random.split(key)
    params = init_params(pkey, num_classes=10)

    # NCHW input like the PyTorch reference (small shapes: batch=2, 3x16x16).
    x = jax.random.normal(xkey, (2, 3, 16, 16), jnp.float32)

    # Exercise a mid exit and the deepest exit.
    out1 = WrapperModel(params, inference_branch=1)(x)
    jax.block_until_ready(out1)
    assert out1.shape == (2, 10), out1.shape
    assert out1.dtype == jnp.float32

    out2 = WrapperModel(params, inference_branch=2)(x)
    jax.block_until_ready(out2)
    assert out2.shape == (2, 10), out2.shape

    print("KERNEL_OK")
</pallas_src>

<mosaic_0001>
module attributes {stable_mosaic.version = 11 : i64} {
  func.func @kernel(%arg0: i32, %arg1: memref<256x27xbf16, #tpu.memory_space<vmem>>, %arg2: memref<27x8xbf16, #tpu.memory_space<vmem>>, %arg3: memref<1x8xf32, #tpu.memory_space<vmem>>, %arg4: memref<1x8xf32, #tpu.memory_space<vmem>>, %arg5: memref<256x8xbf16, #tpu.memory_space<vmem>>) attributes {dimension_semantics = [#tpu.dimension_semantics<parallel>], iteration_bounds = array<i64: 2>, scalar_prefetch = 0 : i64, scratch_operands = 0 : i64, tpu.core_type = #tpu.core_type<tc>, window_params = [{transform_indices = @transform_0, window_bounds = array<i64: 256, 27>}, {pipeline_mode = #tpu.pipeline_mode<synchronous>, transform_indices = @transform_1, window_bounds = array<i64: 27, 8>}, {pipeline_mode = #tpu.pipeline_mode<synchronous>, transform_indices = @transform_2, window_bounds = array<i64: 1, 8>}, {pipeline_mode = #tpu.pipeline_mode<synchronous>, transform_indices = @transform_3, window_bounds = array<i64: 1, 8>}, {transform_indices = @transform_4, window_bounds = array<i64: 256, 8>}]} {
    %c0 = arith.constant 0 : index
    %c0_0 = arith.constant 0 : index
    %0 = vector.load %arg1[%c0, %c0_0] : memref<256x27xbf16, #tpu.memory_space<vmem>>, vector<256x27xbf16>
    %c0_1 = arith.constant 0 : index
    %c0_2 = arith.constant 0 : index
    %1 = vector.load %arg2[%c0_1, %c0_2] : memref<27x8xbf16, #tpu.memory_space<vmem>>, vector<27x8xbf16>
    %cst = arith.constant dense<0.000000e+00> : vector<256x8xf32>
    %2 = tpu.matmul %0, %1, %cst {dimension_numbers = #tpu.dot_dimension_numbers<[1], [0], [0], [1], [0, 0, 1, 1], [], []>} : vector<256x27xbf16>, vector<27x8xbf16>, vector<256x8xf32> -> vector<256x8xf32>
    %c0_3 = arith.constant 0 : index
    %c0_4 = arith.constant 0 : index
    %3 = vector.load %arg3[%c0_3, %c0_4] : memref<1x8xf32, #tpu.memory_space<vmem>>, vector<1x8xf32>
    %4 = vector.broadcast %3 : vector<1x8xf32> to vector<256x8xf32>
    %5 = arith.mulf %2, %4 : vector<256x8xf32>
    %c0_5 = arith.constant 0 : index
    %c0_6 = arith.constant 0 : index
    %6 = vector.load %arg4[%c0_5, %c0_6] : memref<1x8xf32, #tpu.memory_space<vmem>>, vector<1x8xf32>
    %7 = vector.broadcast %6 : vector<1x8xf32> to vector<256x8xf32>
    %8 = arith.addf %5, %7 : vector<256x8xf32>
    %cst_7 = arith.constant 0.000000e+00 : f32
    %9 = vector.broadcast %cst_7 : f32 to vector<256x8xf32>
    %10 = arith.maximumf %8, %9 : vector<256x8xf32>
    %11 = arith.truncf %10 : vector<256x8xf32> to vector<256x8xbf16>
    %c0_8 = arith.constant 0 : index
    %c0_9 = arith.constant 0 : index
    %12 = vector.load %arg5[%c0_8, %c0_9] : memref<256x8xbf16, #tpu.memory_space<vmem>>, vector<256x8xbf16>
    tpu.vector_store %arg5[%c0_8, %c0_9], %11 {strides = array<i32>} : memref<256x8xbf16, #tpu.memory_space<vmem>>, vector<256x8xbf16>,
    return
  }
  func.func @transform_0(%arg0: i32) -> (i32, i32) {
    %c0_i32 = arith.constant 0 : i32
    %c0_i32_0 = arith.constant 0 : i32
    return %arg0, %c0_i32 : i32, i32
  }
  func.func @transform_1(%arg0: i32) -> (i32, i32) {
    %c0_i32 = arith.constant 0 : i32
    %c0_i32_0 = arith.constant 0 : i32
    %c0_i32_1 = arith.constant 0 : i32
    return %c0_i32, %c0_i32_0 : i32, i32
  }
  func.func @transform_2(%arg0: i32) -> (i32, i32) {
    %c0_i32 = arith.constant 0 : i32
    %c0_i32_0 = arith.constant 0 : i32
    %c0_i32_1 = arith.constant 0 : i32
    return %c0_i32, %c0_i32_0 : i32, i32
  }
  func.func @transform_3(%arg0: i32) -> (i32, i32) {
    %c0_i32 = arith.constant 0 : i32
    %c0_i32_0 = arith.constant 0 : i32
    %c0_i32_1 = arith.constant 0 : i32
    return %c0_i32, %c0_i32_0 : i32, i32
  }
  func.func @transform_4(%arg0: i32) -> (i32, i32) {
    %c0_i32 = arith.constant 0 : i32
    %c0_i32_0 = arith.constant 0 : i32
    return %arg0, %c0_i32 : i32, i32
  }
}

module attributes {stable_mosaic.version = 11 : i64} {
  func.func @kernel(%arg0: i32, %arg1: memref<256x72xbf16, #tpu.memory_space<vmem>>, %arg2: memref<72x16xbf16, #tpu.memory_space<vmem>>, %arg3: memref<1x16xf32, #tpu.memory_space<vmem>>, %arg4: memref<1x16xf32, #tpu.memory_space<vmem>>, %arg5: memref<256x16xbf16, #tpu.memory_space<vmem>>) attributes {dimension_semantics = [#tpu.dimension_semantics<parallel>], iteration_bounds = array<i64: 2>, scalar_prefetch = 0 : i64, scratch_operands = 0 : i64, tpu.core_type = #tpu.core_type<tc>, window_params = [{transform_indices = @transform_0, window_bounds = array<i64: 256, 72>}, {pipeline_mode = #tpu.pipeline_mode<synchronous>, transform_indices = @transform_1, window_bounds = array<i64: 72, 16>}, {pipeline_mode = #tpu.pipeline_mode<synchronous>, transform_indices = @transform_2, window_bounds = array<i64: 1, 16>}, {pipeline_mode = #tpu.pipeline_mode<synchronous>, transform_indices = @transform_3, window_bounds = array<i64: 1, 16>}, {transform_indices = @transform_4, window_bounds = array<i64: 256, 16>}]} {
    %c0 = arith.constant 0 : index
    %c0_0 = arith.constant 0 : index
    %0 = vector.load %arg1[%c0, %c0_0] : memref<256x72xbf16, #tpu.memory_space<vmem>>, vector<256x72xbf16>
    %c0_1 = arith.constant 0 : index
    %c0_2 = arith.constant 0 : index
    %1 = vector.load %arg2[%c0_1, %c0_2] : memref<72x16xbf16, #tpu.memory_space<vmem>>, vector<72x16xbf16>
    %cst = arith.constant dense<0.000000e+00> : vector<256x16xf32>
    %2 = tpu.matmul %0, %1, %cst {dimension_numbers = #tpu.dot_dimension_numbers<[1], [0], [0], [1], [0, 0, 1, 1], [], []>} : vector<256x72xbf16>, vector<72x16xbf16>, vector<256x16xf32> -> vector<256x16xf32>
    %c0_3 = arith.constant 0 : index
    %c0_4 = arith.constant 0 : index
    %3 = vector.load %arg3[%c0_3, %c0_4] : memref<1x16xf32, #tpu.memory_space<vmem>>, vector<1x16xf32>
    %4 = vector.broadcast %3 : vector<1x16xf32> to vector<256x16xf32>
    %5 = arith.mulf %2, %4 : vector<256x16xf32>
    %c0_5 = arith.constant 0 : index
    %c0_6 = arith.constant 0 : index
    %6 = vector.load %arg4[%c0_5, %c0_6] : memref<1x16xf32, #tpu.memory_space<vmem>>, vector<1x16xf32>
    %7 = vector.broadcast %6 : vector<1x16xf32> to vector<256x16xf32>
    %8 = arith.addf %5, %7 : vector<256x16xf32>
    %cst_7 = arith.constant 0.000000e+00 : f32
    %9 = vector.broadcast %cst_7 : f32 to vector<256x16xf32>
    %10 = arith.maximumf %8, %9 : vector<256x16xf32>
    %11 = arith.truncf %10 : vector<256x16xf32> to vector<256x16xbf16>
    %c0_8 = arith.constant 0 : index
    %c0_9 = arith.constant 0 : index
    %12 = vector.load %arg5[%c0_8, %c0_9] : memref<256x16xbf16, #tpu.memory_space<vmem>>, vector<256x16xbf16>
    tpu.vector_store %arg5[%c0_8, %c0_9], %11 {strides = array<i32>} : memref<256x16xbf16, #tpu.memory_space<vmem>>, vector<256x16xbf16>,
    return
  }
  func.func @transform_0(%arg0: i32) -> (i32, i32) {
    %c0_i32 = arith.constant 0 : i32
    %c0_i32_0 = arith.constant 0 : i32
    return %arg0, %c0_i32 : i32, i32
  }
  func.func @transform_1(%arg0: i32) -> (i32, i32) {
    %c0_i32 = arith.constant 0 : i32
    %c0_i32_0 = arith.constant 0 : i32
    %c0_i32_1 = arith.constant 0 : i32
    return %c0_i32, %c0_i32_0 : i32, i32
  }
  func.func @transform_2(%arg0: i32) -> (i32, i32) {
    %c0_i32 = arith.constant 0 : i32
    %c0_i32_0 = arith.constant 0 : i32
    %c0_i32_1 = arith.constant 0 : i32
    return %c0_i32, %c0_i32_0 : i32, i32
  }
  func.func @transform_3(%arg0: i32) -> (i32, i32) {
    %c0_i32 = arith.constant 0 : i32
    %c0_i32_0 = arith.constant 0 : i32
    %c0_i32_1 = arith.constant 0 : i32
    return %c0_i32, %c0_i32_0 : i32, i32
  }
  func.func @transform_4(%arg0: i32) -> (i32, i32) {
    %c0_i32 = arith.constant 0 : i32
    %c0_i32_0 = arith.constant 0 : i32
    return %arg0, %c0_i32 : i32, i32
  }
}

module attributes {stable_mosaic.version = 11 : i64} {
  func.func @kernel(%arg0: i32, %arg1: memref<256x144xbf16, #tpu.memory_space<vmem>>, %arg2: memref<144x16xbf16, #tpu.memory_space<vmem>>, %arg3: memref<256x8xbf16, #tpu.memory_space<vmem>>, %arg4: memref<8x16xbf16, #tpu.memory_space<vmem>>, %arg5: memref<1x16xf32, #tpu.memory_space<vmem>>, %arg6: memref<1x16xf32, #tpu.memory_space<vmem>>, %arg7: memref<256x16xbf16, #tpu.memory_space<vmem>>) attributes {dimension_semantics = [#tpu.dimension_semantics<parallel>], iteration_bounds = array<i64: 2>, scalar_prefetch = 0 : i64, scratch_operands = 0 : i64, tpu.core_type = #tpu.core_type<tc>, window_params = [{transform_indices = @transform_0, window_bounds = array<i64: 256, 144>}, {pipeline_mode = #tpu.pipeline_mode<synchronous>, transform_indices = @transform_1, window_bounds = array<i64: 144, 16>}, {transform_indices = @transform_2, window_bounds = array<i64: 256, 8>}, {pipeline_mode = #tpu.pipeline_mode<synchronous>, transform_indices = @transform_3, window_bounds = array<i64: 8, 16>}, {pipeline_mode = #tpu.pipeline_mode<synchronous>, transform_indices = @transform_4, window_bounds = array<i64: 1, 16>}, {pipeline_mode = #tpu.pipeline_mode<synchronous>, transform_indices = @transform_5, window_bounds = array<i64: 1, 16>}, {transform_indices = @transform_6, window_bounds = array<i64: 256, 16>}]} {
    %c0 = arith.constant 0 : index
    %c0_0 = arith.constant 0 : index
    %0 = vector.load %arg1[%c0, %c0_0] : memref<256x144xbf16, #tpu.memory_space<vmem>>, vector<256x144xbf16>
    %c0_1 = arith.constant 0 : index
    %c0_2 = arith.constant 0 : index
    %1 = vector.load %arg2[%c0_1, %c0_2] : memref<144x16xbf16, #tpu.memory_space<vmem>>, vector<144x16xbf16>
    %cst = arith.constant dense<0.000000e+00> : vector<256x16xf32>
    %2 = tpu.matmul %0, %1, %cst {dimension_numbers = #tpu.dot_dimension_numbers<[1], [0], [0], [1], [0, 0, 1, 1], [], []>} : vector<256x144xbf16>, vector<144x16xbf16>, vector<256x16xf32> -> vector<256x16xf32>
    %c0_3 = arith.constant 0 : index
    %c0_4 = arith.constant 0 : index
    %3 = vector.load %arg3[%c0_3, %c0_4] : memref<256x8xbf16, #tpu.memory_space<vmem>>, vector<256x8xbf16>
    %c0_5 = arith.constant 0 : index
    %c0_6 = arith.constant 0 : index
    %4 = vector.load %arg4[%c0_5, %c0_6] : memref<8x16xbf16, #tpu.memory_space<vmem>>, vector<8x16xbf16>
    %cst_7 = arith.constant dense<0.000000e+00> : vector<256x16xf32>
    %5 = tpu.matmul %3, %4, %cst_7 {dimension_numbers = #tpu.dot_dimension_numbers<[1], [0], [0], [1], [0, 0, 1, 1], [], []>} : vector<256x8xbf16>, vector<8x16xbf16>, vector<256x16xf32> -> vector<256x16xf32>
    %6 = arith.addf %2, %5 : vector<256x16xf32>
    %c0_8 = arith.constant 0 : index
    %c0_9 = arith.constant 0 : index
    %7 = vector.load %arg5[%c0_8, %c0_9] : memref<1x16xf32, #tpu.memory_space<vmem>>, vector<1x16xf32>
    %8 = vector.broadcast %7 : vector<1x16xf32> to vector<256x16xf32>
    %9 = arith.mulf %6, %8 : vector<256x16xf32>
    %c0_10 = arith.constant 0 : index
    %c0_11 = arith.constant 0 : index
    %10 = vector.load %arg6[%c0_10, %c0_11] : memref<1x16xf32, #tpu.memory_space<vmem>>, vector<1x16xf32>
    %11 = vector.broadcast %10 : vector<1x16xf32> to vector<256x16xf32>
    %12 = arith.addf %9, %11 : vector<256x16xf32>
    %cst_12 = arith.constant 0.000000e+00 : f32
    %13 = vector.broadcast %cst_12 : f32 to vector<256x16xf32>
    %14 = arith.maximumf %12, %13 : vector<256x16xf32>
    %15 = arith.truncf %14 : vector<256x16xf32> to vector<256x16xbf16>
    %c0_13 = arith.constant 0 : index
    %c0_14 = arith.constant 0 : index
    %16 = vector.load %arg7[%c0_13, %c0_14] : memref<256x16xbf16, #tpu.memory_space<vmem>>, vector<256x16xbf16>
    tpu.vector_store %arg7[%c0_13, %c0_14], %15 {strides = array<i32>} : memref<256x16xbf16, #tpu.memory_space<vmem>>, vector<256x16xbf16>,
    return
  }
  func.func @transform_0(%arg0: i32) -> (i32, i32) {
    %c0_i32 = arith.constant 0 : i32
    %c0_i32_0 = arith.constant 0 : i32
    return %arg0, %c0_i32 : i32, i32
  }
  func.func @transform_1(%arg0: i32) -> (i32, i32) {
    %c0_i32 = arith.constant 0 : i32
    %c0_i32_0 = arith.constant 0 : i32
    %c0_i32_1 = arith.constant 0 : i32
    return %c0_i32, %c0_i32_0 : i32, i32
  }
  func.func @transform_2(%arg0: i32) -> (i32, i32) {
    %c0_i32 = arith.constant 0 : i32
    %c0_i32_0 = arith.constant 0 : i32
    return %arg0, %c0_i32 : i32, i32
  }
  func.func @transform_3(%arg0: i32) -> (i32, i32) {
    %c0_i32 = arith.constant 0 : i32
    %c0_i32_0 = arith.constant 0 : i32
    %c0_i32_1 = arith.constant 0 : i32
    return %c0_i32, %c0_i32_0 : i32, i32
  }
  func.func @transform_4(%arg0: i32) -> (i32, i32) {
    %c0_i32 = arith.constant 0 : i32
    %c0_i32_0 = arith.constant 0 : i32
    %c0_i32_1 = arith.constant 0 : i32
    return %c0_i32, %c0_i32_0 : i32, i32
  }
  func.func @transform_5(%arg0: i32) -> (i32, i32) {
    %c0_i32 = arith.constant 0 : i32
    %c0_i32_0 = arith.constant 0 : i32
    %c0_i32_1 = arith.constant 0 : i32
    return %c0_i32, %c0_i32_0 : i32, i32
  }
  func.func @transform_6(%arg0: i32) -> (i32, i32) {
    %c0_i32 = arith.constant 0 : i32
    %c0_i32_0 = arith.constant 0 : i32
    return %arg0, %c0_i32 : i32, i32
  }
}

module attributes {stable_mosaic.version = 11 : i64} {
  func.func @kernel(%arg0: i32, %arg1: memref<128x144xbf16, #tpu.memory_space<vmem>>, %arg2: memref<144x32xbf16, #tpu.memory_space<vmem>>, %arg3: memref<1x32xf32, #tpu.memory_space<vmem>>, %arg4: memref<1x32xf32, #tpu.memory_space<vmem>>, %arg5: memref<128x32xbf16, #tpu.memory_space<vmem>>) attributes {dimension_semantics = [#tpu.dimension_semantics<parallel>], iteration_bounds = array<i64: 1>, scalar_prefetch = 0 : i64, scratch_operands = 0 : i64, tpu.core_type = #tpu.core_type<tc>, window_params = [{transform_indices = @transform_0, window_bounds = array<i64: 128, 144>}, {pipeline_mode = #tpu.pipeline_mode<synchronous>, transform_indices = @transform_1, window_bounds = array<i64: 144, 32>}, {pipeline_mode = #tpu.pipeline_mode<synchronous>, transform_indices = @transform_2, window_bounds = array<i64: 1, 32>}, {pipeline_mode = #tpu.pipeline_mode<synchronous>, transform_indices = @transform_3, window_bounds = array<i64: 1, 32>}, {transform_indices = @transform_4, window_bounds = array<i64: 128, 32>}]} {
    %c0 = arith.constant 0 : index
    %c0_0 = arith.constant 0 : index
    %0 = vector.load %arg1[%c0, %c0_0] : memref<128x144xbf16, #tpu.memory_space<vmem>>, vector<128x144xbf16>
    %c0_1 = arith.constant 0 : index
    %c0_2 = arith.constant 0 : index
    %1 = vector.load %arg2[%c0_1, %c0_2] : memref<144x32xbf16, #tpu.memory_space<vmem>>, vector<144x32xbf16>
    %cst = arith.constant dense<0.000000e+00> : vector<128x32xf32>
    %2 = tpu.matmul %0, %1, %cst {dimension_numbers = #tpu.dot_dimension_numbers<[1], [0], [0], [1], [0, 0, 1, 1], [], []>} : vector<128x144xbf16>, vector<144x32xbf16>, vector<128x32xf32> -> vector<128x32xf32>
    %c0_3 = arith.constant 0 : index
    %c0_4 = arith.constant 0 : index
    %3 = vector.load %arg3[%c0_3, %c0_4] : memref<1x32xf32, #tpu.memory_space<vmem>>, vector<1x32xf32>
    %4 = vector.broadcast %3 : vector<1x32xf32> to vector<128x32xf32>
    %5 = arith.mulf %2, %4 : vector<128x32xf32>
    %c0_5 = arith.constant 0 : index
    %c0_6 = arith.constant 0 : index
    %6 = vector.load %arg4[%c0_5, %c0_6] : memref<1x32xf32, #tpu.memory_space<vmem>>, vector<1x32xf32>
    %7 = vector.broadcast %6 : vector<1x32xf32> to vector<128x32xf32>
    %8 = arith.addf %5, %7 : vector<128x32xf32>
    %cst_7 = arith.constant 0.000000e+00 : f32
    %9 = vector.broadcast %cst_7 : f32 to vector<128x32xf32>
    %10 = arith.maximumf %8, %9 : vector<128x32xf32>
    %11 = arith.truncf %10 : vector<128x32xf32> to vector<128x32xbf16>
    %c0_8 = arith.constant 0 : index
    %c0_9 = arith.constant 0 : index
    %12 = vector.load %arg5[%c0_8, %c0_9] : memref<128x32xbf16, #tpu.memory_space<vmem>>, vector<128x32xbf16>
    tpu.vector_store %arg5[%c0_8, %c0_9], %11 {strides = array<i32>} : memref<128x32xbf16, #tpu.memory_space<vmem>>, vector<128x32xbf16>,
    return
  }
  func.func @transform_0(%arg0: i32) -> (i32, i32) {
    %c0_i32 = arith.constant 0 : i32
    %c0_i32_0 = arith.constant 0 : i32
    return %arg0, %c0_i32 : i32, i32
  }
  func.func @transform_1(%arg0: i32) -> (i32, i32) {
    %c0_i32 = arith.constant 0 : i32
    %c0_i32_0 = arith.constant 0 : i32
    %c0_i32_1 = arith.constant 0 : i32
    return %c0_i32, %c0_i32_0 : i32, i32
  }
  func.func @transform_2(%arg0: i32) -> (i32, i32) {
    %c0_i32 = arith.constant 0 : i32
    %c0_i32_0 = arith.constant 0 : i32
    %c0_i32_1 = arith.constant 0 : i32
    return %c0_i32, %c0_i32_0 : i32, i32
  }
  func.func @transform_3(%arg0: i32) -> (i32, i32) {
    %c0_i32 = arith.constant 0 : i32
    %c0_i32_0 = arith.constant 0 : i32
    %c0_i32_1 = arith.constant 0 : i32
    return %c0_i32, %c0_i32_0 : i32, i32
  }
  func.func @transform_4(%arg0: i32) -> (i32, i32) {
    %c0_i32 = arith.constant 0 : i32
    %c0_i32_0 = arith.constant 0 : i32
    return %arg0, %c0_i32 : i32, i32
  }
}

module attributes {stable_mosaic.version = 11 : i64} {
  func.func @_head_kernel(%arg0: i32, %arg1: memref<2x64x32xf32, #tpu.memory_space<vmem>>, %arg2: memref<1x1x32xf32, #tpu.memory_space<vmem>>, %arg3: memref<1x1x32xf32, #tpu.memory_space<vmem>>, %arg4: memref<32x10xf32, #tpu.memory_space<vmem>>, %arg5: memref<1x10xf32, #tpu.memory_space<vmem>>, %arg6: memref<2x10xf32, #tpu.memory_space<vmem>>) attributes {dimension_semantics = [#tpu.dimension_semantics<parallel>], iteration_bounds = array<i64: 1>, scalar_prefetch = 0 : i64, scratch_operands = 0 : i64, tpu.core_type = #tpu.core_type<tc>, window_params = [{pipeline_mode = #tpu.pipeline_mode<synchronous>, transform_indices = @transform_0, window_bounds = array<i64: 2, 64, 32>}, {pipeline_mode = #tpu.pipeline_mode<synchronous>, transform_indices = @transform_1, window_bounds = array<i64: 1, 1, 32>}, {pipeline_mode = #tpu.pipeline_mode<synchronous>, transform_indices = @transform_2, window_bounds = array<i64: 1, 1, 32>}, {pipeline_mode = #tpu.pipeline_mode<synchronous>, transform_indices = @transform_3, window_bounds = array<i64: 32, 10>}, {pipeline_mode = #tpu.pipeline_mode<synchronous>, transform_indices = @transform_4, window_bounds = array<i64: 1, 10>}, {pipeline_mode = #tpu.pipeline_mode<synchronous>, transform_indices = @transform_5, window_bounds = array<i64: 2, 10>}]} {
    %c0 = arith.constant 0 : index
    %c0_0 = arith.constant 0 : index
    %c0_1 = arith.constant 0 : index
    %0 = vector.load %arg1[%c0, %c0_0, %c0_1] : memref<2x64x32xf32, #tpu.memory_space<vmem>>, vector<2x64x32xf32>
    %c0_2 = arith.constant 0 : index
    %c0_3 = arith.constant 0 : index
    %c0_4 = arith.constant 0 : index
    %1 = vector.load %arg2[%c0_2, %c0_3, %c0_4] : memref<1x1x32xf32, #tpu.memory_space<vmem>>, vector<1x1x32xf32>
    %2 = vector.broadcast %1 : vector<1x1x32xf32> to vector<2x64x32xf32>
    %3 = arith.mulf %0, %2 : vector<2x64x32xf32>
    %c0_5 = arith.constant 0 : index
    %c0_6 = arith.constant 0 : index
    %c0_7 = arith.constant 0 : index
    %4 = vector.load %arg3[%c0_5, %c0_6, %c0_7] : memref<1x1x32xf32, #tpu.memory_space<vmem>>, vector<1x1x32xf32>
    %5 = vector.broadcast %4 : vector<1x1x32xf32> to vector<2x64x32xf32>
    %6 = arith.addf %3, %5 : vector<2x64x32xf32>
    %cst = arith.constant 0.000000e+00 : f32
    %7 = vector.broadcast %cst : f32 to vector<2x64x32xf32>
    %8 = arith.maximumf %6, %7 : vector<2x64x32xf32>
    %cst_8 = arith.constant dense<0.000000e+00> : vector<2x32xf32>
    %9 = vector.multi_reduction <add>, %8, %cst_8 [1] : vector<2x64x32xf32> to vector<2x32xf32>
    %cst_9 = arith.constant 6.400000e+01 : f32
    %10 = vector.broadcast %cst_9 : f32 to vector<2x32xf32>
    %11 = arith.divf %9, %10 : vector<2x32xf32>
    %c0_10 = arith.constant 0 : index
    %c0_11 = arith.constant 0 : index
    %12 = vector.load %arg4[%c0_10, %c0_11] : memref<32x10xf32, #tpu.memory_space<vmem>>, vector<32x10xf32>
    %cst_12 = arith.constant dense<0.000000e+00> : vector<2x10xf32>
    %13 = tpu.matmul %11, %12, %cst_12 {dimension_numbers = #tpu.dot_dimension_numbers<[1], [0], [0], [1], [0, 0, 1, 1], [], []>} : vector<2x32xf32>, vector<32x10xf32>, vector<2x10xf32> -> vector<2x10xf32>
    %c0_13 = arith.constant 0 : index
    %c0_14 = arith.constant 0 : index
    %14 = vector.load %arg5[%c0_13, %c0_14] : memref<1x10xf32, #tpu.memory_space<vmem>>, vector<1x10xf32>
    %15 = vector.broadcast %14 : vector<1x10xf32> to vector<2x10xf32>
    %16 = arith.addf %13, %15 : vector<2x10xf32>
    %c0_15 = arith.constant 0 : index
    %c0_16 = arith.constant 0 : index
    %17 = vector.load %arg6[%c0_15, %c0_16] : memref<2x10xf32, #tpu.memory_space<vmem>>, vector<2x10xf32>
    tpu.vector_store %arg6[%c0_15, %c0_16], %16 {strides = array<i32>} : memref<2x10xf32, #tpu.memory_space<vmem>>, vector<2x10xf32>,
    return
  }
  func.func @transform_0(%arg0: i32) -> (i32, i32, i32) {
    %c0_i32 = arith.constant 0 : i32
    %c0_i32_0 = arith.constant 0 : i32
    %c0_i32_1 = arith.constant 0 : i32
    %c0_i32_2 = arith.constant 0 : i32
    return %c0_i32, %c0_i32_0, %c0_i32_1 : i32, i32, i32
  }
  func.func @transform_1(%arg0: i32) -> (i32, i32, i32) {
    %c0_i32 = arith.constant 0 : i32
    %c0_i32_0 = arith.constant 0 : i32
    %c0_i32_1 = arith.constant 0 : i32
    %c0_i32_2 = arith.constant 0 : i32
    return %c0_i32, %c0_i32_0, %c0_i32_1 : i32, i32, i32
  }
  func.func @transform_2(%arg0: i32) -> (i32, i32, i32) {
    %c0_i32 = arith.constant 0 : i32
    %c0_i32_0 = arith.constant 0 : i32
    %c0_i32_1 = arith.constant 0 : i32
    %c0_i32_2 = arith.constant 0 : i32
    return %c0_i32, %c0_i32_0, %c0_i32_1 : i32, i32, i32
  }
  func.func @transform_3(%arg0: i32) -> (i32, i32) {
    %c0_i32 = arith.constant 0 : i32
    %c0_i32_0 = arith.constant 0 : i32
    %c0_i32_1 = arith.constant 0 : i32
    return %c0_i32, %c0_i32_0 : i32, i32
  }
  func.func @transform_4(%arg0: i32) -> (i32, i32) {
    %c0_i32 = arith.constant 0 : i32
    %c0_i32_0 = arith.constant 0 : i32
    %c0_i32_1 = arith.constant 0 : i32
    return %c0_i32, %c0_i32_0 : i32, i32
  }
  func.func @transform_5(%arg0: i32) -> (i32, i32) {
    %c0_i32 = arith.constant 0 : i32
    %c0_i32_0 = arith.constant 0 : i32
    %c0_i32_1 = arith.constant 0 : i32
    return %c0_i32, %c0_i32_0 : i32, i32
  }
}

module attributes {stable_mosaic.version = 11 : i64} {
  func.func @kernel(%arg0: i32, %arg1: memref<128x288xbf16, #tpu.memory_space<vmem>>, %arg2: memref<288x32xbf16, #tpu.memory_space<vmem>>, %arg3: memref<128x16xbf16, #tpu.memory_space<vmem>>, %arg4: memref<16x32xbf16, #tpu.memory_space<vmem>>, %arg5: memref<128x32xf32, #tpu.memory_space<vmem>>) attributes {dimension_semantics = [#tpu.dimension_semantics<parallel>], iteration_bounds = array<i64: 1>, scalar_prefetch = 0 : i64, scratch_operands = 0 : i64, tpu.core_type = #tpu.core_type<tc>, window_params = [{transform_indices = @transform_0, window_bounds = array<i64: 128, 288>}, {pipeline_mode = #tpu.pipeline_mode<synchronous>, transform_indices = @transform_1, window_bounds = array<i64: 288, 32>}, {transform_indices = @transform_2, window_bounds = array<i64: 128, 16>}, {pipeline_mode = #tpu.pipeline_mode<synchronous>, transform_indices = @transform_3, window_bounds = array<i64: 16, 32>}, {transform_indices = @transform_4, window_bounds = array<i64: 128, 32>}]} {
    %c0 = arith.constant 0 : index
    %c0_0 = arith.constant 0 : index
    %0 = vector.load %arg1[%c0, %c0_0] : memref<128x288xbf16, #tpu.memory_space<vmem>>, vector<128x288xbf16>
    %c0_1 = arith.constant 0 : index
    %c0_2 = arith.constant 0 : index
    %1 = vector.load %arg2[%c0_1, %c0_2] : memref<288x32xbf16, #tpu.memory_space<vmem>>, vector<288x32xbf16>
    %cst = arith.constant dense<0.000000e+00> : vector<128x32xf32>
    %2 = tpu.matmul %0, %1, %cst {dimension_numbers = #tpu.dot_dimension_numbers<[1], [0], [0], [1], [0, 0, 1, 1], [], []>} : vector<128x288xbf16>, vector<288x32xbf16>, vector<128x32xf32> -> vector<128x32xf32>
    %c0_3 = arith.constant 0 : index
    %c0_4 = arith.constant 0 : index
    %3 = vector.load %arg3[%c0_3, %c0_4] : memref<128x16xbf16, #tpu.memory_space<vmem>>, vector<128x16xbf16>
    %c0_5 = arith.constant 0 : index
    %c0_6 = arith.constant 0 : index
    %4 = vector.load %arg4[%c0_5, %c0_6] : memref<16x32xbf16, #tpu.memory_space<vmem>>, vector<16x32xbf16>
    %cst_7 = arith.constant dense<0.000000e+00> : vector<128x32xf32>
    %5 = tpu.matmul %3, %4, %cst_7 {dimension_numbers = #tpu.dot_dimension_numbers<[1], [0], [0], [1], [0, 0, 1, 1], [], []>} : vector<128x16xbf16>, vector<16x32xbf16>, vector<128x32xf32> -> vector<128x32xf32>
    %6 = arith.addf %2, %5 : vector<128x32xf32>
    %c0_8 = arith.constant 0 : index
    %c0_9 = arith.constant 0 : index
    %7 = vector.load %arg5[%c0_8, %c0_9] : memref<128x32xf32, #tpu.memory_space<vmem>>, vector<128x32xf32>
    tpu.vector_store %arg5[%c0_8, %c0_9], %6 {strides = array<i32>} : memref<128x32xf32, #tpu.memory_space<vmem>>, vector<128x32xf32>,
    return
  }
  func.func @transform_0(%arg0: i32) -> (i32, i32) {
    %c0_i32 = arith.constant 0 : i32
    %c0_i32_0 = arith.constant 0 : i32
    return %arg0, %c0_i32 : i32, i32
  }
  func.func @transform_1(%arg0: i32) -> (i32, i32) {
    %c0_i32 = arith.constant 0 : i32
    %c0_i32_0 = arith.constant 0 : i32
    %c0_i32_1 = arith.constant 0 : i32
    return %c0_i32, %c0_i32_0 : i32, i32
  }
  func.func @transform_2(%arg0: i32) -> (i32, i32) {
    %c0_i32 = arith.constant 0 : i32
    %c0_i32_0 = arith.constant 0 : i32
    return %arg0, %c0_i32 : i32, i32
  }
  func.func @transform_3(%arg0: i32) -> (i32, i32) {
    %c0_i32 = arith.constant 0 : i32
    %c0_i32_0 = arith.constant 0 : i32
    %c0_i32_1 = arith.constant 0 : i32
    return %c0_i32, %c0_i32_0 : i32, i32
  }
  func.func @transform_4(%arg0: i32) -> (i32, i32) {
    %c0_i32 = arith.constant 0 : i32
    %c0_i32_0 = arith.constant 0 : i32
    return %arg0, %c0_i32 : i32, i32
  }
}

</mosaic_0001>

<llo_original>
// kernel: forward_pruned.6
$region0: #{forward_pruned.6}
  #allocation0 [shape = 'u32[]', space=smem, size = 0x4, offset = 0x4, fixed_abs, tag = 'smem constant byte address 0x4 - core index']
  #allocation1 [shape = 'u32[144,128]{1,0:T(1,128)}', space=vmem, size = 0x12000, scoped, tag = 'internal scratch']
  %s0 = inlined_call_operand.vmem [shape: bf16[512,27], index: 0, kind: input, shape index: {}]
  %s1 = inlined_call_operand.vmem [shape: bf16[27,8], index: 1, kind: input, shape index: {}]
  %s2 = inlined_call_operand.vmem [shape: f32[1,8], index: 2, kind: input, shape index: {}]
  %s3 = inlined_call_operand.vmem [shape: f32[1,8], index: 3, kind: input, shape index: {}]
  %s4 = inlined_call_operand.vmem [shape: bf16[512,8], index: 4, kind: output, shape index: {}]
  %s5 = sld [smem:[#allocation0]]
  $region49: #{forward_pruned.6} parent=0
    _
  %s7 = ssub.s32 1, %s5
  %s8 = scalar_select 0, %s7, %s5
  loop: start=0, step=1, limit=4
  $region2: #{forward_pruned.6} parent=0 // loop_pre_header
    _
  $region3: #{forward_pruned.6} parent=0 // loop_header
    %s10 = sphi 0, %s14
    %p11 = scmp.ge.s32.totalorder %s10, 4
    %s20 = sphi 0, %s22
    %s23 = sphi 0, %s20
    %s24 = sphi 0, %s23
    %s40 = sphi 0, %s24
    %s44 = sphi 0, %s44
    %s46 = sphi 0, %s44
    %s47 = sphi 0, %s46
    %s61 = sphi 0, %s47
    %s65 = sphi 0, %s65
    %s67 = sphi 0, %s65
    %s68 = sphi 0, %s67
    %s82 = sphi 0, %s68
    %s86 = sphi 0, %s86
    %s88 = sphi 0, %s86
    %s89 = sphi 0, %s88
    %s103 = sphi 0, %s89
    %s109 = sphi 0, %s111
    %s112 = sphi 0, %s109
    %s113 = sphi 0, %s112
    %s129 = sphi 0, %s113
  $region4: #{forward_pruned.6} parent=0 // loop_header_branch
    %13 = sbr.rel (%p11) target = $region8
  $region5: #{forward_pruned.6} parent=0 // loop_body
    %s15 = ssub.s32 %s10, 1
    %s16 = ssub.s32 %s10, 2
    %s17 = sadd.s32 %s10, 1
    %s18 = ssub.s32 %s10, %s17
    %p19 = scmp.eq.s32.totalorder %s18, 0
    %s21 = sadd.s32 %s20, 1
    %s22 = scalar_select %p19, %s20, %s21
    %p25 = pneg %p19
    %p26 = scmp.eq.s32.totalorder %s10, 1
    %p27 = por %p25, %p26
    %p28 = scmp.ne.s32.totalorder %s20, %s23
    %p29 = scmp.eq.s32.totalorder %s10, 0
    %p30 = por %p28, %p29
    %p31 = scmp.ne.s32.totalorder %s20, %s23
    %p32 = scmp.eq.s32.totalorder %s15, 1
    %p33 = por %p31, %p32
    %p34 = scmp.ne.s32.totalorder %s23, %s24
    %p35 = scmp.eq.s32.totalorder %s15, 0
    %p36 = por %p34, %p35
    %p37 = scmp.ne.s32.totalorder %s23, %s24
    %p38 = scmp.eq.s32.totalorder %s16, 1
    %p39 = por %p37, %p38
    %p41 = scmp.ne.s32.totalorder %s24, %s40
    %p42 = scmp.eq.s32.totalorder %s16, 0
    %p43 = por %p41, %p42
    %s45 = sadd.s32 %s44, 1
    %p48 = scmp.eq.s32.totalorder %s10, 1
    %p49 = scmp.ne.s32.totalorder %s44, %s46
    %p50 = scmp.eq.s32.totalorder %s10, 0
    %p51 = por %p49, %p50
    %p52 = scmp.ne.s32.totalorder %s44, %s46
    %p53 = scmp.eq.s32.totalorder %s15, 1
    %p54 = por %p52, %p53
    %p55 = scmp.ne.s32.totalorder %s46, %s47
    %p56 = scmp.eq.s32.totalorder %s15, 0
    %p57 = por %p55, %p56
    %p58 = scmp.ne.s32.totalorder %s46, %s47
    %p59 = scmp.eq.s32.totalorder %s16, 1
    %p60 = por %p58, %p59
    %p62 = scmp.ne.s32.totalorder %s47, %s61
    %p63 = scmp.eq.s32.totalorder %s16, 0
    %p64 = por %p62, %p63
    %s66 = sadd.s32 %s65, 1
    %p69 = scmp.eq.s32.totalorder %s10, 1
    %p70 = scmp.ne.s32.totalorder %s65, %s67
    %p71 = scmp.eq.s32.totalorder %s10, 0
    %p72 = por %p70, %p71
    %p73 = scmp.ne.s32.totalorder %s65, %s67
    %p74 = scmp.eq.s32.totalorder %s15, 1
    %p75 = por %p73, %p74
    %p76 = scmp.ne.s32.totalorder %s67, %s68
    %p77 = scmp.eq.s32.totalorder %s15, 0
    %p78 = por %p76, %p77
    %p79 = scmp.ne.s32.totalorder %s67, %s68
    %p80 = scmp.eq.s32.totalorder %s16, 1
    %p81 = por %p79, %p80
    %p83 = scmp.ne.s32.totalorder %s68, %s82
    %p84 = scmp.eq.s32.totalorder %s16, 0
    %p85 = por %p83, %p84
    %s87 = sadd.s32 %s86, 1
    %p90 = scmp.eq.s32.totalorder %s10, 1
    %p91 = scmp.ne.s32.totalorder %s86, %s88
    %p92 = scmp.eq.s32.totalorder %s10, 0
    %p93 = por %p91, %p92
    %p94 = scmp.ne.s32.totalorder %s86, %s88
    %p95 = scmp.eq.s32.totalorder %s15, 1
    %p96 = por %p94, %p95
    %p97 = scmp.ne.s32.totalorder %s88, %s89
    %p98 = scmp.eq.s32.totalorder %s15, 0
    %p99 = por %p97, %p98
    %p100 = scmp.ne.s32.totalorder %s88, %s89
    %p101 = scmp.eq.s32.totalorder %s16, 1
    %p102 = por %p100, %p101
    %p104 = scmp.ne.s32.totalorder %s89, %s103
    %p105 = scmp.eq.s32.totalorder %s16, 0
    %p106 = por %p104, %p105
    %s107 = ssub.s32 %s10, %s17
    %p108 = scmp.eq.s32.totalorder %s107, 0
    %s110 = sadd.s32 %s109, 1
    %s111 = scalar_select %p108, %s109, %s110
    %p114 = pneg %p108
    %p115 = scmp.eq.s32.totalorder %s10, 1
    %p116 = por %p114, %p115
    %p117 = scmp.ne.s32.totalorder %s109, %s112
    %p118 = scmp.eq.s32.totalorder %s10, 0
    %p119 = por %p117, %p118
    %p120 = scmp.ne.s32.totalorder %s109, %s112
    %p121 = scmp.eq.s32.totalorder %s15, 1
    %p122 = por %p120, %p121
    %p123 = scmp.ne.s32.totalorder %s112, %s113
    %p124 = scmp.eq.s32.totalorder %s15, 0
    %p125 = por %p123, %p124
    %p126 = scmp.ne.s32.totalorder %s112, %s113
    %p127 = scmp.eq.s32.totalorder %s16, 1
    %p128 = por %p126, %p127
    %p130 = scmp.ne.s32.totalorder %s113, %s129
    %p131 = scmp.eq.s32.totalorder %s16, 0
    %p132 = por %p130, %p131
    %p133 = scmp.le.s32.totalorder 1, %s10
    %p134 = scmp.lt.s32.totalorder %s10, 3
    %p135 = pnand %p133, %p134
    %p136 = pneg %p135
    // Predicated region
    $region9: #{forward_pruned.6} parent=5 // pred_check
      _
    $region10: #{forward_pruned.6} parent=5 // pred_check_branch
      %138 = sbr.rel (%p135) target = $region12
    $region11: #{forward_pruned.6} parent=5 // pred_region
      %s139 = ssub.s32 %s10, 1
      // Predicated region
      $region13: #{forward_pruned.6} parent=11 // pred_check
        %p140 = pneg %p57
      $region14: #{forward_pruned.6} parent=11 // pred_check_branch
        %142 = sbr.rel (%p140) target = $region16
      $region15: #{forward_pruned.6} parent=11 // pred_region
        _
      $region16: #{forward_pruned.6} parent=11 // pred_fallthru
        _
      // Predicated region
      $region17: #{forward_pruned.6} parent=11 // pred_check
        %p143 = pneg %p78
      $region18: #{forward_pruned.6} parent=11 // pred_check_branch
        %145 = sbr.rel (%p143) target = $region20
      $region19: #{forward_pruned.6} parent=11 // pred_region
        _
      $region20: #{forward_pruned.6} parent=11 // pred_fallthru
        _
      // Predicated region
      $region21: #{forward_pruned.6} parent=11 // pred_check
        %p146 = pneg %p99
      $region22: #{forward_pruned.6} parent=11 // pred_check_branch
        %148 = sbr.rel (%p146) target = $region24
      $region23: #{forward_pruned.6} parent=11 // pred_region
        _
      $region24: #{forward_pruned.6} parent=11 // pred_fallthru
        _
    $region12: #{forward_pruned.6} parent=5 // pred_fallthru
      _
    %p149 = scmp.lt.s32.totalorder %s10, 2
    // Predicated region
    $region25: #{forward_pruned.6} parent=5 // pred_check
      %p150 = pneg %p149
    $region26: #{forward_pruned.6} parent=5 // pred_check_branch
      %152 = sbr.rel (%p150) target = $region28
    $region27: #{forward_pruned.6} parent=5 // pred_region
      // Predicated region
      $region29: #{forward_pruned.6} parent=27 // pred_check
        %p153 = pneg %p30
      $region30: #{forward_pruned.6} parent=27 // pred_check_branch
        %155 = sbr.rel (%p153) target = $region32
      $region31: #{forward_pruned.6} parent=27 // pred_region
        %s156 = smul.u32 32, %s10
        %p157 = scmp.lt.s32.totalorder %s156, 63
        %s158 = scalar_select %p157, %s156, 63
        %s159 = smul.addr %s158, 4
        %s160 = scalar_lea.vmem %s0, %s159
        %s161 = smul.u32 32, %s10
      $region32: #{forward_pruned.6} parent=27 // pred_fallthru
        _
    $region28: #{forward_pruned.6} parent=5 // pred_fallthru
      _
    %p162 = scmp.le.s32.totalorder 1, %s10
    %p163 = scmp.lt.s32.totalorder %s10, 3
    %p164 = pnand %p162, %p163
    %p165 = pneg %p164
    // Predicated region
    $region33: #{forward_pruned.6} parent=5 // pred_check
      _
    $region34: #{forward_pruned.6} parent=5 // pred_check_branch
      %167 = sbr.rel (%p164) target = $region36
    $region35: #{forward_pruned.6} parent=5 // pred_region
      %s168 = ssub.s32 %s10, 1
      %s169 = smul.u32 32, %s15
      %p170 = scmp.lt.s32.totalorder %s169, 63
      %s171 = scalar_select %p170, %s169, 63
      %s172 = smul.addr %s171, 4
      %s173 = scalar_lea.vmem %s0, %s172
      %p174 = pneg %p36
      %p175 = pneg %p33
      %p176 = pneg %p57
      %p177 = pneg %p54
      %p178 = pneg %p78
      %p179 = pneg %p75
      %p180 = pneg %p99
      %p181 = pneg %p96
      %p182 = pneg %p125
      %p183 = pneg %p122
      %s184 = smul.u32 32, %s15
      %p185 = scmp.lt.s32.totalorder %s184, 63
      %s186 = scalar_select %p185, %s184, 63
      %s187 = smul.addr %s186, 4
      %s188 = scalar_lea.vmem %s4, %s187
      %s189 = smul.u32 32, %s15
      %p190 = scmp.lt.s32.totalorder %s189, 63
      %s191 = scalar_select %p190, %s189, 63
      %s192 = smul.addr %s191, 4
      %s193 = scalar_lea.vmem %s0, %s192
      %s194 = smul.u32 32, %s15
      %s195 = smul.u32 32, %s15
      %p196 = scmp.lt.s32.totalorder %s195, 63
      %s197 = scalar_select %p196, %s195, 63
      %s198 = smul.addr %s197, 4
      %s199 = scalar_lea.vmem %s4, %s198
      %s200 = smul.u32 32, %s15
      %v202 = vld [vmem:[%s193] sm:$0xf]
      %v203 = vld [vmem:[%s193 + $0x4] sm:$0xf]
      %v204 = vld [vmem:[%s193 + $0x8] sm:$0xf]
      %v205 = vld [vmem:[%s193 + $0xc] sm:$0xf]
      %v206 = vld [vmem:[%s193 + $0x10] sm:$0xf]
      %v207 = vld [vmem:[%s193 + $0x14] sm:$0xf]
      %v208 = vld [vmem:[%s193 + $0x18] sm:$0xf]
      %v209 = vld [vmem:[%s193 + $0x1c] sm:$0xf]
      %v210 = vld [vmem:[%s193 + $0x20] sm:$0xf]
      %v211 = vld [vmem:[%s193 + $0x24] sm:$0xf]
      %v212 = vld [vmem:[%s193 + $0x28] sm:$0xf]
      %v213 = vld [vmem:[%s193 + $0x2c] sm:$0xf]
      %v214 = vld [vmem:[%s193 + $0x30] sm:$0xf]
      %v215 = vld [vmem:[%s193 + $0x34] sm:$0xf]
      %v216 = vld [vmem:[%s193 + $0x38] sm:$0xf]
      %v217 = vld [vmem:[%s193 + $0x3c] sm:$0xf]
      %v218 = vld [vmem:[%s193 + $0x40] sm:$0xf]
      %v219 = vld [vmem:[%s193 + $0x44] sm:$0xf]
      %v220 = vld [vmem:[%s193 + $0x48] sm:$0xf]
      %v221 = vld [vmem:[%s193 + $0x4c] sm:$0xf]
      %v222 = vld [vmem:[%s193 + $0x50] sm:$0xf]
      %v223 = vld [vmem:[%s193 + $0x54] sm:$0xf]
      %v224 = vld [vmem:[%s193 + $0x58] sm:$0xf]
      %v225 = vld [vmem:[%s193 + $0x5c] sm:$0xf]
      %v226 = vld [vmem:[%s193 + $0x60] sm:$0xf]
      %v227 = vld [vmem:[%s193 + $0x64] sm:$0xf]
      %v228 = vld [vmem:[%s193 + $0x68] sm:$0xf]
      %v229 = vld [vmem:[%s193 + $0x6c] sm:$0xf]
      %v230 = vld [vmem:[%s193 + $0x70] sm:$0xf]
      %v231 = vld [vmem:[%s193 + $0x74] sm:$0xf]
      %v232 = vld [vmem:[%s193 + $0x78] sm:$0xf]
      %v233 = vld [vmem:[%s193 + $0x7c] sm:$0xf]
      %v234 = vld [vmem:[%s1] sm:$0xf]
      %v235 = vld [vmem:[%s1 + $0x4] sm:$0xf]
      %v236 = vld [vmem:[%s1 + $0x8] sm:$0xf]
      %v237 = vld [vmem:[%s1 + $0xc] sm:$0x3]
      %v270 = vunpack.c.l.b16 %v202
      %v271 = vunpack.c.l.b16 %v203
      %v272 = vunpack.c.l.b16 %v204
      %v273 = vunpack.c.l.b16 %v205
      %v274 = vunpack.c.l.b16 %v206
      %v275 = vunpack.c.l.b16 %v207
      %v276 = vunpack.c.l.b16 %v208
      %v277 = vunpack.c.l.b16 %v209
      %v278 = vunpack.c.l.b16 %v210
      %v279 = vunpack.c.l.b16 %v211
      %v280 = vunpack.c.l.b16 %v212
      %v281 = vunpack.c.l.b16 %v213
      %v282 = vunpack.c.l.b16 %v214
      %v283 = vunpack.c.l.b16 %v215
      %v284 = vunpack.c.l.b16 %v216
      %v285 = vunpack.c.l.b16 %v217
      %v286 = vunpack.c.l.b16 %v218
      %v287 = vunpack.c.l.b16 %v219
      %v288 = vunpack.c.l.b16 %v220
      %v289 = vunpack.c.l.b16 %v221
      %v290 = vunpack.c.l.b16 %v222
      %v291 = vunpack.c.l.b16 %v223
      %v292 = vunpack.c.l.b16 %v224
      %v293 = vunpack.c.l.b16 %v225
      %v294 = vunpack.c.l.b16 %v226
      %v295 = vunpack.c.l.b16 %v227
      %v296 = vunpack.c.l.b16 %v228
      %v297 = vunpack.c.l.b16 %v229
      %v298 = vunpack.c.l.b16 %v230
      %v299 = vunpack.c.l.b16 %v231
      %v300 = vunpack.c.l.b16 %v232
      %v301 = vunpack.c.l.b16 %v233
      %v302 = vpack.c.b16 %v271, %v270
      %v303 = vpack.c.b16 %v273, %v272
      %v304 = vpack.c.b16 %v275, %v274
      %v305 = vpack.c.b16 %v277, %v276
      %v306 = vpack.c.b16 %v279, %v278
      %v307 = vpack.c.b16 %v281, %v280
      %v308 = vpack.c.b16 %v283, %v282
      %v309 = vpack.c.b16 %v285, %v284
      %v310 = vpack.c.b16 %v287, %v286
      %v311 = vpack.c.b16 %v289, %v288
      %v312 = vpack.c.b16 %v291, %v290
      %v313 = vpack.c.b16 %v293, %v292
      %v314 = vpack.c.b16 %v295, %v294
      %v315 = vpack.c.b16 %v297, %v296
      %v316 = vpack.c.b16 %v299, %v298
      %v317 = vpack.c.b16 %v301, %v300
      %v322 = vunpack.c.l.b16 %v234
      %v323 = vunpack.c.l.b16 %v235
      %v324 = vunpack.c.l.b16 %v236
      %v325 = vunpack.c.l.b16 %v237
      %v326 = vpack.c.b16 %v323, %v322
      %v327 = vpack.c.b16 %v325, %v324
      %vm329 = vcmask 220160
      %v331 = vsel %vm329, %v302, 0
      %v334 = vsel %vm329, %v303, 0
      %v337 = vsel %vm329, %v304, 0
      %v340 = vsel %vm329, %v305, 0
      %v343 = vsel %vm329, %v306, 0
      %v346 = vsel %vm329, %v307, 0
      %v349 = vsel %vm329, %v308, 0
      %v352 = vsel %vm329, %v309, 0
      %v355 = vsel %vm329, %v310, 0
      %v358 = vsel %vm329, %v311, 0
      %v361 = vsel %vm329, %v312, 0
      %v364 = vsel %vm329, %v313, 0
      %v367 = vsel %vm329, %v314, 0
      %v370 = vsel %vm329, %v315, 0
      %v373 = vsel %vm329, %v316, 0
      %v376 = vsel %vm329, %v317, 0
      %vm378 = vcmask 1044480
      %vm379 = vcmask 1045504
      %v380 = vsel %vm378, 4294967295, 65535
      %v381 = vsel %vm379, %v380, 0
      %v383 = vand.u32 %v327, %v381
      %385 = vmatprep.subr.bf16.mxu0 0
      %386 = vmatpush1.bf16.msra.mxu0 %v326
      %387 = vmatprep.subr.bf16.mxu0 0
      %388 = vmatpush1.bf16.msra.mxu0 %v383
      %389 = vmatprep.subr.bf16.mxu0 0
      %390 = vmatpush1.bf16.msra.mxu0 0
      %391 = vmatprep.subr.bf16.mxu0 0
      %392 = vmatpush1.bf16.msra.mxu0 0
      %393 = vmatprep.subr.bf16.mxu0 0
      %394 = vmatpush1.bf16.msra.mxu0 0
      %395 = vmatprep.subr.bf16.mxu0 0
      %396 = vmatpush1.bf16.msra.mxu0 0
      %397 = vmatprep.subr.bf16.mxu0 0
      %398 = vmatpush1.bf16.msra.mxu0 0
      %399 = vmatprep.subr.bf16.mxu0 0
      %400 = vmatpush1.bf16.msra.mxu0 0
      %401 = vmatprep.subr.bf16.mxu0 0
      %402 = vmatpush1.bf16.msra.mxu0 0
      %403 = vmatprep.subr.bf16.mxu0 0
      %404 = vmatpush1.bf16.msra.mxu0 0
      %405 = vmatprep.subr.bf16.mxu0 0
      %406 = vmatpush1.bf16.msra.mxu0 0
      %407 = vmatprep.subr.bf16.mxu0 0
      %408 = vmatpush1.bf16.msra.mxu0 0
      %409 = vmatprep.subr.bf16.mxu0 0
      %410 = vmatpush1.bf16.msra.mxu0 0
      %411 = vmatprep.subr.bf16.mxu0 0
      %412 = vmatpush1.bf16.msra.mxu0 0
      %413 = vmatprep.subr.bf16.mxu0 0
      %414 = vmatpush1.bf16.msra.mxu0 0
      %415 = vmatprep.subr.bf16.mxu0 0
      %416 = vmatpush1.bf16.msra.mxu0 0
      %417 = vmatprep.mubr.bf16.mxu0 0
      %418 = vmatmul.mubr.bf16.gmra.mrb[0].mxu0 %v331
      %v419 = vpop.f32.mrb[0].mxu0
      %v420 = vadd.f32 0.0, %v419
      %v421 = vpop.f32.mrb[0].mxu0
      %v422 = vpop.f32.mrb[0].mxu0
      %v423 = vadd.f32 0.0, %v422
      %v424 = vpop.f32.mrb[0].mxu0
      %425 = vmatprep.mubr.bf16.mxu0 0
      %426 = vmatmul.mubr.bf16.gmra.mrb[0].mxu0 %v334
      %v427 = vpop.f32.mrb[0].mxu0
      %v428 = vadd.f32 0.0, %v427
      %v429 = vpop.f32.mrb[0].mxu0
      %v430 = vpop.f32.mrb[0].mxu0
      %v431 = vadd.f32 0.0, %v430
      %v432 = vpop.f32.mrb[0].mxu0
      %433 = vmatprep.mubr.bf16.mxu0 0
      %434 = vmatmul.mubr.bf16.gmra.mrb[0].mxu0 %v337
      %v435 = vpop.f32.mrb[0].mxu0
      %v436 = vadd.f32 0.0, %v435
      %v437 = vpop.f32.mrb[0].mxu0
      %v438 = vpop.f32.mrb[0].mxu0
      %v439 = vadd.f32 0.0, %v438
      %v440 = vpop.f32.mrb[0].mxu0
      %441 = vmatprep.mubr.bf16.mxu0 0
      %442 = vmatmul.mubr.bf16.gmra.mrb[0].mxu0 %v340
      %v443 = vpop.f32.mrb[0].mxu0
      %v444 = vadd.f32 0.0, %v443
      %v445 = vpop.f32.mrb[0].mxu0
      %v446 = vpop.f32.mrb[0].mxu0
      %v447 = vadd.f32 0.0, %v446
      %v448 = vpop.f32.mrb[0].mxu0
      %449 = vmatprep.mubr.bf16.mxu0 0
      %450 = vmatmul.mubr.bf16.gmra.mrb[0].mxu0 %v343
      %v451 = vpop.f32.mrb[0].mxu0
      %v452 = vadd.f32 0.0, %v451
      %v453 = vpop.f32.mrb[0].mxu0
      %v454 = vpop.f32.mrb[0].mxu0
      %v455 = vadd.f32 0.0, %v454
      %v456 = vpop.f32.mrb[0].mxu0
      %457 = vmatprep.mubr.bf16.mxu0 0
      %458 = vmatmul.mubr.bf16.gmra.mrb[0].mxu0 %v346
      %v459 = vpop.f32.mrb[0].mxu0
      %v460 = vadd.f32 0.0, %v459
      %v461 = vpop.f32.mrb[0].mxu0
      %v462 = vpop.f32.mrb[0].mxu0
      %v463 = vadd.f32 0.0, %v462
      %v464 = vpop.f32.mrb[0].mxu0
      %465 = vmatprep.mubr.bf16.mxu0 0
      %466 = vmatmul.mubr.bf16.gmra.mrb[0].mxu0 %v349
      %v467 = vpop.f32.mrb[0].mxu0
      %v468 = vadd.f32 0.0, %v467
      %v469 = vpop.f32.mrb[0].mxu0
      %v470 = vpop.f32.mrb[0].mxu0
      %v471 = vadd.f32 0.0, %v470
      %v472 = vpop.f32.mrb[0].mxu0
      %473 = vmatprep.mubr.bf16.mxu0 0
      %474 = vmatmul.mubr.bf16.gmra.mrb[0].mxu0 %v352
      %v475 = vpop.f32.mrb[0].mxu0
      %v476 = vadd.f32 0.0, %v475
      %v477 = vpop.f32.mrb[0].mxu0
      %v478 = vpop.f32.mrb[0].mxu0
      %v479 = vadd.f32 0.0, %v478
      %v480 = vpop.f32.mrb[0].mxu0
      %481 = vmatprep.mubr.bf16.mxu0 0
      %482 = vmatmul.mubr.bf16.gmra.mrb[0].mxu0 %v355
      %v483 = vpop.f32.mrb[0].mxu0
      %v484 = vadd.f32 0.0, %v483
      %v485 = vpop.f32.mrb[0].mxu0
      %v486 = vpop.f32.mrb[0].mxu0
      %v487 = vadd.f32 0.0, %v486
      %v488 = vpop.f32.mrb[0].mxu0
      %489 = vmatprep.mubr.bf16.mxu0 0
      %490 = vmatmul.mubr.bf16.gmra.mrb[0].mxu0 %v358
      %v491 = vpop.f32.mrb[0].mxu0
      %v492 = vadd.f32 0.0, %v491
      %v493 = vpop.f32.mrb[0].mxu0
      %v494 = vpop.f32.mrb[0].mxu0
      %v495 = vadd.f32 0.0, %v494
      %v496 = vpop.f32.mrb[0].mxu0
      %497 = vmatprep.mubr.bf16.mxu0 0
      %498 = vmatmul.mubr.bf16.gmra.mrb[0].mxu0 %v361
      %v499 = vpop.f32.mrb[0].mxu0
      %v500 = vadd.f32 0.0, %v499
      %v501 = vpop.f32.mrb[0].mxu0
      %v502 = vpop.f32.mrb[0].mxu0
      %v503 = vadd.f32 0.0, %v502
      %v504 = vpop.f32.mrb[0].mxu0
      %505 = vmatprep.mubr.bf16.mxu0 0
      %506 = vmatmul.mubr.bf16.gmra.mrb[0].mxu0 %v364
      %v507 = vpop.f32.mrb[0].mxu0
      %v508 = vadd.f32 0.0, %v507
      %v509 = vpop.f32.mrb[0].mxu0
      %v510 = vpop.f32.mrb[0].mxu0
      %v511 = vadd.f32 0.0, %v510
      %v512 = vpop.f32.mrb[0].mxu0
      %513 = vmatprep.mubr.bf16.mxu0 0
      %514 = vmatmul.mubr.bf16.gmra.mrb[0].mxu0 %v367
      %v515 = vpop.f32.mrb[0].mxu0
      %v516 = vadd.f32 0.0, %v515
      %v517 = vpop.f32.mrb[0].mxu0
      %v518 = vpop.f32.mrb[0].mxu0
      %v519 = vadd.f32 0.0, %v518
      %v520 = vpop.f32.mrb[0].mxu0
      %521 = vmatprep.mubr.bf16.mxu0 0
      %522 = vmatmul.mubr.bf16.gmra.mrb[0].mxu0 %v370
      %v523 = vpop.f32.mrb[0].mxu0
      %v524 = vadd.f32 0.0, %v523
      %v525 = vpop.f32.mrb[0].mxu0
      %v526 = vpop.f32.mrb[0].mxu0
      %v527 = vadd.f32 0.0, %v526
      %v528 = vpop.f32.mrb[0].mxu0
      %529 = vmatprep.mubr.bf16.mxu0 0
      %530 = vmatmul.mubr.bf16.gmra.mrb[0].mxu0 %v373
      %v531 = vpop.f32.mrb[0].mxu0
      %v532 = vadd.f32 0.0, %v531
      %v533 = vpop.f32.mrb[0].mxu0
      %v534 = vpop.f32.mrb[0].mxu0
      %v535 = vadd.f32 0.0, %v534
      %v536 = vpop.f32.mrb[0].mxu0
      %537 = vmatprep.mubr.bf16.mxu0 0
      %538 = vmatmul.mubr.bf16.gmra.mrb[0].mxu0 %v376
      %v539 = vpop.f32.mrb[0].mxu0
      %v540 = vadd.f32 0.0, %v539
      %v541 = vpop.f32.mrb[0].mxu0
      %v542 = vpop.f32.mrb[0].mxu0
      %v543 = vadd.f32 0.0, %v542
      %v544 = vpop.f32.mrb[0].mxu0
      %545 = vdwg.mxu0
      %v546 = vld [vmem:[%s2] sm:$0x1]
      %v548 = vlaneseq
      %v549 = vshrl.u32 %v548, 7
      %v550 = vsub.s32 0, %v549
      %v551 = vrot.slane %v546, %v550
      %v553 = vmul.f32 %v420, %v551
      %v554 = vmul.f32 %v423, %v551
      %v555 = vmul.f32 %v428, %v551
      %v556 = vmul.f32 %v431, %v551
      %v557 = vmul.f32 %v436, %v551
      %v558 = vmul.f32 %v439, %v551
      %v559 = vmul.f32 %v444, %v551
      %v560 = vmul.f32 %v447, %v551
      %v561 = vmul.f32 %v452, %v551
      %v562 = vmul.f32 %v455, %v551
      %v563 = vmul.f32 %v460, %v551
      %v564 = vmul.f32 %v463, %v551
      %v565 = vmul.f32 %v468, %v551
      %v566 = vmul.f32 %v471, %v551
      %v567 = vmul.f32 %v476, %v551
      %v568 = vmul.f32 %v479, %v551
      %v569 = vmul.f32 %v484, %v551
      %v570 = vmul.f32 %v487, %v551
      %v571 = vmul.f32 %v492, %v551
      %v572 = vmul.f32 %v495, %v551
      %v573 = vmul.f32 %v500, %v551
      %v574 = vmul.f32 %v503, %v551
      %v575 = vmul.f32 %v508, %v551
      %v576 = vmul.f32 %v511, %v551
      %v577 = vmul.f32 %v516, %v551
      %v578 = vmul.f32 %v519, %v551
      %v579 = vmul.f32 %v524, %v551
      %v580 = vmul.f32 %v527, %v551
      %v581 = vmul.f32 %v532, %v551
      %v582 = vmul.f32 %v535, %v551
      %v583 = vmul.f32 %v540, %v551
      %v584 = vmul.f32 %v543, %v551
      %v585 = vld [vmem:[%s3] sm:$0x1]
      %v587 = vlaneseq
      %v588 = vshrl.u32 %v587, 7
      %v589 = vsub.s32 0, %v588
      %v590 = vrot.slane %v585, %v589
      %v592 = vadd.f32 %v553, %v590
      %v593 = vadd.f32 %v554, %v590
      %v594 = vadd.f32 %v555, %v590
      %v595 = vadd.f32 %v556, %v590
      %v596 = vadd.f32 %v557, %v590
      %v597 = vadd.f32 %v558, %v590
      %v598 = vadd.f32 %v559, %v590
      %v599 = vadd.f32 %v560, %v590
      %v600 = vadd.f32 %v561, %v590
      %v601 = vadd.f32 %v562, %v590
      %v602 = vadd.f32 %v563, %v590
      %v603 = vadd.f32 %v564, %v590
      %v604 = vadd.f32 %v565, %v590
      %v605 = vadd.f32 %v566, %v590
      %v606 = vadd.f32 %v567, %v590
      %v607 = vadd.f32 %v568, %v590
      %v608 = vadd.f32 %v569, %v590
      %v609 = vadd.f32 %v570, %v590
      %v610 = vadd.f32 %v571, %v590
      %v611 = vadd.f32 %v572, %v590
      %v612 = vadd.f32 %v573, %v590
      %v613 = vadd.f32 %v574, %v590
      %v614 = vadd.f32 %v575, %v590
      %v615 = vadd.f32 %v576, %v590
      %v616 = vadd.f32 %v577, %v590
      %v617 = vadd.f32 %v578, %v590
      %v618 = vadd.f32 %v579, %v590
      %v619 = vadd.f32 %v580, %v590
      %v620 = vadd.f32 %v581, %v590
      %v621 = vadd.f32 %v582, %v590
      %v622 = vadd.f32 %v583, %v590
      %v623 = vadd.f32 %v584, %v590
      %v624 = vmax.f32 %v592, 0.0
      %v625 = vmax.f32 %v593, 0.0
      %v626 = vmax.f32 %v594, 0.0
      %v627 = vmax.f32 %v595, 0.0
      %v628 = vmax.f32 %v596, 0.0
      %v629 = vmax.f32 %v597, 0.0
      %v630 = vmax.f32 %v598, 0.0
      %v631 = vmax.f32 %v599, 0.0
      %v632 = vmax.f32 %v600, 0.0
      %v633 = vmax.f32 %v601, 0.0
      %v634 = vmax.f32 %v602, 0.0
      %v635 = vmax.f32 %v603, 0.0
      %v636 = vmax.f32 %v604, 0.0
      %v637 = vmax.f32 %v605, 0.0
      %v638 = vmax.f32 %v606, 0.0
      %v639 = vmax.f32 %v607, 0.0
      %v640 = vmax.f32 %v608, 0.0
      %v641 = vmax.f32 %v609, 0.0
      %v642 = vmax.f32 %v610, 0.0
      %v643 = vmax.f32 %v611, 0.0
      %v644 = vmax.f32 %v612, 0.0
      %v645 = vmax.f32 %v613, 0.0
      %v646 = vmax.f32 %v614, 0.0
      %v647 = vmax.f32 %v615, 0.0
      %v648 = vmax.f32 %v616, 0.0
      %v649 = vmax.f32 %v617, 0.0
      %v650 = vmax.f32 %v618, 0.0
      %v651 = vmax.f32 %v619, 0.0
      %v652 = vmax.f32 %v620, 0.0
      %v653 = vmax.f32 %v621, 0.0
      %v654 = vmax.f32 %v622, 0.0
      %v655 = vmax.f32 %v623, 0.0
      %v656 = vpack.c.bf16 %v625, %v624
      %v657 = vpack.c.bf16 %v627, %v626
      %v658 = vpack.c.bf16 %v629, %v628
      %v659 = vpack.c.bf16 %v631, %v630
      %v660 = vpack.c.bf16 %v633, %v632
      %v661 = vpack.c.bf16 %v635, %v634
      %v662 = vpack.c.bf16 %v637, %v636
      %v663 = vpack.c.bf16 %v639, %v638
      %v664 = vpack.c.bf16 %v641, %v640
      %v665 = vpack.c.bf16 %v643, %v642
      %v666 = vpack.c.bf16 %v645, %v644
      %v667 = vpack.c.bf16 %v647, %v646
      %v668 = vpack.c.bf16 %v649, %v648
      %v669 = vpack.c.bf16 %v651, %v650
      %v670 = vpack.c.bf16 %v653, %v652
      %v671 = vpack.c.bf16 %v655, %v654
      %v688 = vunpack.c.l.b16 %v656
      %v689 = vunpack.c.h.b16 %v656
      %v690 = vunpack.c.l.b16 %v657
      %v691 = vunpack.c.h.b16 %v657
      %v692 = vunpack.c.l.b16 %v658
      %v693 = vunpack.c.h.b16 %v658
      %v694 = vunpack.c.l.b16 %v659
      %v695 = vunpack.c.h.b16 %v659
      %v696 = vunpack.c.l.b16 %v660
      %v697 = vunpack.c.h.b16 %v660
      %v698 = vunpack.c.l.b16 %v661
      %v699 = vunpack.c.h.b16 %v661
      %v700 = vunpack.c.l.b16 %v662
      %v701 = vunpack.c.h.b16 %v662
      %v702 = vunpack.c.l.b16 %v663
      %v703 = vunpack.c.h.b16 %v663
      %v704 = vunpack.c.l.b16 %v664
      %v705 = vunpack.c.h.b16 %v664
      %v706 = vunpack.c.l.b16 %v665
      %v707 = vunpack.c.h.b16 %v665
      %v708 = vunpack.c.l.b16 %v666
      %v709 = vunpack.c.h.b16 %v666
      %v710 = vunpack.c.l.b16 %v667
      %v711 = vunpack.c.h.b16 %v667
      %v712 = vunpack.c.l.b16 %v668
      %v713 = vunpack.c.h.b16 %v668
      %v714 = vunpack.c.l.b16 %v669
      %v715 = vunpack.c.h.b16 %v669
      %v716 = vunpack.c.l.b16 %v670
      %v717 = vunpack.c.h.b16 %v670
      %v718 = vunpack.c.l.b16 %v671
      %v719 = vunpack.c.h.b16 %v671
      %v720 = vpack.c.b16 %v688, %v688
      %v721 = vpack.c.b16 %v689, %v689
      %v722 = vpack.c.b16 %v690, %v690
      %v723 = vpack.c.b16 %v691, %v691
      %v724 = vpack.c.b16 %v692, %v692
      %v725 = vpack.c.b16 %v693, %v693
      %v726 = vpack.c.b16 %v694, %v694
      %v727 = vpack.c.b16 %v695, %v695
      %v728 = vpack.c.b16 %v696, %v696
      %v729 = vpack.c.b16 %v697, %v697
      %v730 = vpack.c.b16 %v698, %v698
      %v731 = vpack.c.b16 %v699, %v699
      %v732 = vpack.c.b16 %v700, %v700
      %v733 = vpack.c.b16 %v701, %v701
      %v734 = vpack.c.b16 %v702, %v702
      %v735 = vpack.c.b16 %v703, %v703
      %v736 = vpack.c.b16 %v704, %v704
      %v737 = vpack.c.b16 %v705, %v705
      %v738 = vpack.c.b16 %v706, %v706
      %v739 = vpack.c.b16 %v707, %v707
      %v740 = vpack.c.b16 %v708, %v708
      %v741 = vpack.c.b16 %v709, %v709
      %v742 = vpack.c.b16 %v710, %v710
      %v743 = vpack.c.b16 %v711, %v711
      %v744 = vpack.c.b16 %v712, %v712
      %v745 = vpack.c.b16 %v713, %v713
      %v746 = vpack.c.b16 %v714, %v714
      %v747 = vpack.c.b16 %v715, %v715
      %v748 = vpack.c.b16 %v716, %v716
      %v749 = vpack.c.b16 %v717, %v717
      %v750 = vpack.c.b16 %v718, %v718
      %v751 = vpack.c.b16 %v719, %v719
      %vm784 = vcmask 60416
      %785 = vst.msk [vmem:[%s199] sm:$0xf] %vm784, %v720
      %786 = vst.msk [vmem:[%s199 + $0x4] sm:$0xf] %vm784, %v721
      %787 = vst.msk [vmem:[%s199 + $0x8] sm:$0xf] %vm784, %v722
      %788 = vst.msk [vmem:[%s199 + $0xc] sm:$0xf] %vm784, %v723
      %789 = vst.msk [vmem:[%s199 + $0x10] sm:$0xf] %vm784, %v724
      %790 = vst.msk [vmem:[%s199 + $0x14] sm:$0xf] %vm784, %v725
      %791 = vst.msk [vmem:[%s199 + $0x18] sm:$0xf] %vm784, %v726
      %792 = vst.msk [vmem:[%s199 + $0x1c] sm:$0xf] %vm784, %v727
      %793 = vst.msk [vmem:[%s199 + $0x20] sm:$0xf] %vm784, %v728
      %794 = vst.msk [vmem:[%s199 + $0x24] sm:$0xf] %vm784, %v729
      %795 = vst.msk [vmem:[%s199 + $0x28] sm:$0xf] %vm784, %v730
      %796 = vst.msk [vmem:[%s199 + $0x2c] sm:$0xf] %vm784, %v731
      %797 = vst.msk [vmem:[%s199 + $0x30] sm:$0xf] %vm784, %v732
      %798 = vst.msk [vmem:[%s199 + $0x34] sm:$0xf] %vm784, %v733
      %799 = vst.msk [vmem:[%s199 + $0x38] sm:$0xf] %vm784, %v734
      %800 = vst.msk [vmem:[%s199 + $0x3c] sm:$0xf] %vm784, %v735
      %801 = vst.msk [vmem:[%s199 + $0x40] sm:$0xf] %vm784, %v736
      %802 = vst.msk [vmem:[%s199 + $0x44] sm:$0xf] %vm784, %v737
      %803 = vst.msk [vmem:[%s199 + $0x48] sm:$0xf] %vm784, %v738
      %804 = vst.msk [vmem:[%s199 + $0x4c] sm:$0xf] %vm784, %v739
      %805 = vst.msk [vmem:[%s199 + $0x50] sm:$0xf] %vm784, %v740
      %806 = vst.msk [vmem:[%s199 + $0x54] sm:$0xf] %vm784, %v741
      %807 = vst.msk [vmem:[%s199 + $0x58] sm:$0xf] %vm784, %v742
      %808 = vst.msk [vmem:[%s199 + $0x5c] sm:$0xf] %vm784, %v743
      %809 = vst.msk [vmem:[%s199 + $0x60] sm:$0xf] %vm784, %v744
      %810 = vst.msk [vmem:[%s199 + $0x64] sm:$0xf] %vm784, %v745
      %811 = vst.msk [vmem:[%s199 + $0x68] sm:$0xf] %vm784, %v746
      %812 = vst.msk [vmem:[%s199 + $0x6c] sm:$0xf] %vm784, %v747
      %813 = vst.msk [vmem:[%s199 + $0x70] sm:$0xf] %vm784, %v748
      %814 = vst.msk [vmem:[%s199 + $0x74] sm:$0xf] %vm784, %v749
      %815 = vst.msk [vmem:[%s199 + $0x78] sm:$0xf] %vm784, %v750
      %816 = vst.msk [vmem:[%s199 + $0x7c] sm:$0xf] %vm784, %v751
      %s817 = smul.u32 32, %s15
      %p818 = scmp.lt.s32.totalorder %s817, 63
      %s819 = scalar_select %p818, %s817, 63
      %s820 = smul.addr %s819, 4
      %s821 = scalar_lea.vmem %s4, %s820
      // Predicated region
      $region37: #{forward_pruned.6} parent=35 // pred_check
        %p822 = pneg %p122
      $region38: #{forward_pruned.6} parent=35 // pred_check_branch
        %824 = sbr.rel (%p822) target = $region40
      $region39: #{forward_pruned.6} parent=35 // pred_region
        %s825 = smul.u32 32, %s15
      $region40: #{forward_pruned.6} parent=35 // pred_fallthru
        _
    $region36: #{forward_pruned.6} parent=5 // pred_fallthru
      _
    %p826 = scmp.le.s32.totalorder 2, %s10
    // Predicated region
    $region41: #{forward_pruned.6} parent=5 // pred_check
      %p827 = pneg %p826
    $region42: #{forward_pruned.6} parent=5 // pred_check_branch
      %829 = sbr.rel (%p827) target = $region44
    $region43: #{forward_pruned.6} parent=5 // pred_region
      %s830 = ssub.s32 %s10, 2
      // Predicated region
      $region45: #{forward_pruned.6} parent=43 // pred_check
        %p831 = pneg %p128
      $region46: #{forward_pruned.6} parent=43 // pred_check_branch
        %833 = sbr.rel (%p831) target = $region48
      $region47: #{forward_pruned.6} parent=43 // pred_region
        %s834 = smul.u32 32, %s16
        %p835 = scmp.lt.s32.totalorder %s834, 63
        %s836 = scalar_select %p835, %s834, 63
        %s837 = smul.addr %s836, 4
        %s838 = scalar_lea.vmem %s4, %s837
      $region48: #{forward_pruned.6} parent=43 // pred_fallthru
        _
    $region44: #{forward_pruned.6} parent=5 // pred_fallthru
      _
  $region6: #{forward_pruned.6} parent=0 // loop_footer
    %s14 = sadd.s32 1, %s10
  $region7: #{forward_pruned.6} parent=0 // loop_footer_branch
    %9 = sbr.rel target = $region3
  $region8: #{forward_pruned.6} parent=0 // loop_exit
    _

// kernel: forward_pruned.7
$region0: #{forward_pruned.7}
  #allocation0 [shape = 'u32[]', space=smem, size = 0x4, offset = 0x4, fixed_abs, tag = 'smem constant byte address 0x4 - core index']
  #allocation1 [shape = 'u32[144,128]{1,0:T(1,128)}', space=vmem, size = 0x12000, scoped, tag = 'internal scratch']
  %s0 = inlined_call_operand.vmem [shape: bf16[512,72], index: 0, kind: input, shape index: {}]
  %s1 = inlined_call_operand.vmem [shape: bf16[72,16], index: 1, kind: input, shape index: {}]
  %s2 = inlined_call_operand.vmem [shape: f32[1,16], index: 2, kind: input, shape index: {}]
  %s3 = inlined_call_operand.vmem [shape: f32[1,16], index: 3, kind: input, shape index: {}]
  %s4 = inlined_call_operand.vmem [shape: bf16[512,16], index: 4, kind: output, shape index: {}]
  %s5 = sld [smem:[#allocation0]]
  $region49: #{forward_pruned.7} parent=0
    _
  %s7 = ssub.s32 1, %s5
  %s8 = scalar_select 0, %s7, %s5
  loop: start=0, step=1, limit=4
  $region2: #{forward_pruned.7} parent=0 // loop_pre_header
    _
  $region3: #{forward_pruned.7} parent=0 // loop_header
    %s10 = sphi 0, %s14
    %p11 = scmp.ge.s32.totalorder %s10, 4
    %s20 = sphi 0, %s22
    %s23 = sphi 0, %s20
    %s24 = sphi 0, %s23
    %s40 = sphi 0, %s24
    %s44 = sphi 0, %s44
    %s46 = sphi 0, %s44
    %s47 = sphi 0, %s46
    %s61 = sphi 0, %s47
    %s65 = sphi 0, %s65
    %s67 = sphi 0, %s65
    %s68 = sphi 0, %s67
    %s82 = sphi 0, %s68
    %s86 = sphi 0, %s86
    %s88 = sphi 0, %s86
    %s89 = sphi 0, %s88
    %s103 = sphi 0, %s89
    %s109 = sphi 0, %s111
    %s112 = sphi 0, %s109
    %s113 = sphi 0, %s112
    %s129 = sphi 0, %s113
  $region4: #{forward_pruned.7} parent=0 // loop_header_branch
    %13 = sbr.rel (%p11) target = $region8
  $region5: #{forward_pruned.7} parent=0 // loop_body
    %s15 = ssub.s32 %s10, 1
    %s16 = ssub.s32 %s10, 2
    %s17 = sadd.s32 %s10, 1
    %s18 = ssub.s32 %s10, %s17
    %p19 = scmp.eq.s32.totalorder %s18, 0
    %s21 = sadd.s32 %s20, 1
    %s22 = scalar_select %p19, %s20, %s21
    %p25 = pneg %p19
    %p26 = scmp.eq.s32.totalorder %s10, 1
    %p27 = por %p25, %p26
    %p28 = scmp.ne.s32.totalorder %s20, %s23
    %p29 = scmp.eq.s32.totalorder %s10, 0
    %p30 = por %p28, %p29
    %p31 = scmp.ne.s32.totalorder %s20, %s23
    %p32 = scmp.eq.s32.totalorder %s15, 1
    %p33 = por %p31, %p32
    %p34 = scmp.ne.s32.totalorder %s23, %s24
    %p35 = scmp.eq.s32.totalorder %s15, 0
    %p36 = por %p34, %p35
    %p37 = scmp.ne.s32.totalorder %s23, %s24
    %p38 = scmp.eq.s32.totalorder %s16, 1
    %p39 = por %p37, %p38
    %p41 = scmp.ne.s32.totalorder %s24, %s40
    %p42 = scmp.eq.s32.totalorder %s16, 0
    %p43 = por %p41, %p42
    %s45 = sadd.s32 %s44, 1
    %p48 = scmp.eq.s32.totalorder %s10, 1
    %p49 = scmp.ne.s32.totalorder %s44, %s46
    %p50 = scmp.eq.s32.totalorder %s10, 0
    %p51 = por %p49, %p50
    %p52 = scmp.ne.s32.totalorder %s44, %s46
    %p53 = scmp.eq.s32.totalorder %s15, 1
    %p54 = por %p52, %p53
    %p55 = scmp.ne.s32.totalorder %s46, %s47
    %p56 = scmp.eq.s32.totalorder %s15, 0
    %p57 = por %p55, %p56
    %p58 = scmp.ne.s32.totalorder %s46, %s47
    %p59 = scmp.eq.s32.totalorder %s16, 1
    %p60 = por %p58, %p59
    %p62 = scmp.ne.s32.totalorder %s47, %s61
    %p63 = scmp.eq.s32.totalorder %s16, 0
    %p64 = por %p62, %p63
    %s66 = sadd.s32 %s65, 1
    %p69 = scmp.eq.s32.totalorder %s10, 1
    %p70 = scmp.ne.s32.totalorder %s65, %s67
    %p71 = scmp.eq.s32.totalorder %s10, 0
    %p72 = por %p70, %p71
    %p73 = scmp.ne.s32.totalorder %s65, %s67
    %p74 = scmp.eq.s32.totalorder %s15, 1
    %p75 = por %p73, %p74
    %p76 = scmp.ne.s32.totalorder %s67, %s68
    %p77 = scmp.eq.s32.totalorder %s15, 0
    %p78 = por %p76, %p77
    %p79 = scmp.ne.s32.totalorder %s67, %s68
    %p80 = scmp.eq.s32.totalorder %s16, 1
    %p81 = por %p79, %p80
    %p83 = scmp.ne.s32.totalorder %s68, %s82
    %p84 = scmp.eq.s32.totalorder %s16, 0
    %p85 = por %p83, %p84
    %s87 = sadd.s32 %s86, 1
    %p90 = scmp.eq.s32.totalorder %s10, 1
    %p91 = scmp.ne.s32.totalorder %s86, %s88
    %p92 = scmp.eq.s32.totalorder %s10, 0
    %p93 = por %p91, %p92
    %p94 = scmp.ne.s32.totalorder %s86, %s88
    %p95 = scmp.eq.s32.totalorder %s15, 1
    %p96 = por %p94, %p95
    %p97 = scmp.ne.s32.totalorder %s88, %s89
    %p98 = scmp.eq.s32.totalorder %s15, 0
    %p99 = por %p97, %p98
    %p100 = scmp.ne.s32.totalorder %s88, %s89
    %p101 = scmp.eq.s32.totalorder %s16, 1
    %p102 = por %p100, %p101
    %p104 = scmp.ne.s32.totalorder %s89, %s103
    %p105 = scmp.eq.s32.totalorder %s16, 0
    %p106 = por %p104, %p105
    %s107 = ssub.s32 %s10, %s17
    %p108 = scmp.eq.s32.totalorder %s107, 0
    %s110 = sadd.s32 %s109, 1
    %s111 = scalar_select %p108, %s109, %s110
    %p114 = pneg %p108
    %p115 = scmp.eq.s32.totalorder %s10, 1
    %p116 = por %p114, %p115
    %p117 = scmp.ne.s32.totalorder %s109, %s112
    %p118 = scmp.eq.s32.totalorder %s10, 0
    %p119 = por %p117, %p118
    %p120 = scmp.ne.s32.totalorder %s109, %s112
    %p121 = scmp.eq.s32.totalorder %s15, 1
    %p122 = por %p120, %p121
    %p123 = scmp.ne.s32.totalorder %s112, %s113
    %p124 = scmp.eq.s32.totalorder %s15, 0
    %p125 = por %p123, %p124
    %p126 = scmp.ne.s32.totalorder %s112, %s113
    %p127 = scmp.eq.s32.totalorder %s16, 1
    %p128 = por %p126, %p127
    %p130 = scmp.ne.s32.totalorder %s113, %s129
    %p131 = scmp.eq.s32.totalorder %s16, 0
    %p132 = por %p130, %p131
    %p133 = scmp.le.s32.totalorder 1, %s10
    %p134 = scmp.lt.s32.totalorder %s10, 3
    %p135 = pnand %p133, %p134
    %p136 = pneg %p135
    // Predicated region
    $region9: #{forward_pruned.7} parent=5 // pred_check
      _
    $region10: #{forward_pruned.7} parent=5 // pred_check_branch
      %138 = sbr.rel (%p135) target = $region12
    $region11: #{forward_pruned.7} parent=5 // pred_region
      %s139 = ssub.s32 %s10, 1
      // Predicated region
      $region13: #{forward_pruned.7} parent=11 // pred_check
        %p140 = pneg %p57
      $region14: #{forward_pruned.7} parent=11 // pred_check_branch
        %142 = sbr.rel (%p140) target = $region16
      $region15: #{forward_pruned.7} parent=11 // pred_region
        _
      $region16: #{forward_pruned.7} parent=11 // pred_fallthru
        _
      // Predicated region
      $region17: #{forward_pruned.7} parent=11 // pred_check
        %p143 = pneg %p78
      $region18: #{forward_pruned.7} parent=11 // pred_check_branch
        %145 = sbr.rel (%p143) target = $region20
      $region19: #{forward_pruned.7} parent=11 // pred_region
        _
      $region20: #{forward_pruned.7} parent=11 // pred_fallthru
        _
      // Predicated region
      $region21: #{forward_pruned.7} parent=11 // pred_check
        %p146 = pneg %p99
      $region22: #{forward_pruned.7} parent=11 // pred_check_branch
        %148 = sbr.rel (%p146) target = $region24
      $region23: #{forward_pruned.7} parent=11 // pred_region
        _
      $region24: #{forward_pruned.7} parent=11 // pred_fallthru
        _
    $region12: #{forward_pruned.7} parent=5 // pred_fallthru
      _
    %p149 = scmp.lt.s32.totalorder %s10, 2
    // Predicated region
    $region25: #{forward_pruned.7} parent=5 // pred_check
      %p150 = pneg %p149
    $region26: #{forward_pruned.7} parent=5 // pred_check_branch
      %152 = sbr.rel (%p150) target = $region28
    $region27: #{forward_pruned.7} parent=5 // pred_region
      // Predicated region
      $region29: #{forward_pruned.7} parent=27 // pred_check
        %p153 = pneg %p30
      $region30: #{forward_pruned.7} parent=27 // pred_check_branch
        %155 = sbr.rel (%p153) target = $region32
      $region31: #{forward_pruned.7} parent=27 // pred_region
        %s156 = smul.u32 32, %s10
        %p157 = scmp.lt.s32.totalorder %s156, 63
        %s158 = scalar_select %p157, %s156, 63
        %s159 = smul.addr %s158, 4
        %s160 = scalar_lea.vmem %s0, %s159
        %s161 = smul.u32 32, %s10
      $region32: #{forward_pruned.7} parent=27 // pred_fallthru
        _
    $region28: #{forward_pruned.7} parent=5 // pred_fallthru
      _
    %p162 = scmp.le.s32.totalorder 1, %s10
    %p163 = scmp.lt.s32.totalorder %s10, 3
    %p164 = pnand %p162, %p163
    %p165 = pneg %p164
    // Predicated region
    $region33: #{forward_pruned.7} parent=5 // pred_check
      _
    $region34: #{forward_pruned.7} parent=5 // pred_check_branch
      %167 = sbr.rel (%p164) target = $region36
    $region35: #{forward_pruned.7} parent=5 // pred_region
      %s168 = ssub.s32 %s10, 1
      %s169 = smul.u32 32, %s15
      %p170 = scmp.lt.s32.totalorder %s169, 63
      %s171 = scalar_select %p170, %s169, 63
      %s172 = smul.addr %s171, 4
      %s173 = scalar_lea.vmem %s0, %s172
      %p174 = pneg %p36
      %p175 = pneg %p33
      %p176 = pneg %p57
      %p177 = pneg %p54
      %p178 = pneg %p78
      %p179 = pneg %p75
      %p180 = pneg %p99
      %p181 = pneg %p96
      %p182 = pneg %p125
      %p183 = pneg %p122
      %s184 = smul.u32 32, %s15
      %p185 = scmp.lt.s32.totalorder %s184, 63
      %s186 = scalar_select %p185, %s184, 63
      %s187 = smul.addr %s186, 4
      %s188 = scalar_lea.vmem %s4, %s187
      %s189 = smul.u32 32, %s15
      %p190 = scmp.lt.s32.totalorder %s189, 63
      %s191 = scalar_select %p190, %s189, 63
      %s192 = smul.addr %s191, 4
      %s193 = scalar_lea.vmem %s0, %s192
      %s194 = smul.u32 32, %s15
      %s195 = smul.u32 32, %s15
      %p196 = scmp.lt.s32.totalorder %s195, 63
      %s197 = scalar_select %p196, %s195, 63
      %s198 = smul.addr %s197, 4
      %s199 = scalar_lea.vmem %s4, %s198
      %s200 = smul.u32 32, %s15
      %v202 = vld [vmem:[%s193] sm:$0xf]
      %v203 = vld [vmem:[%s193 + $0x4] sm:$0xf]
      %v204 = vld [vmem:[%s193 + $0x8] sm:$0xf]
      %v205 = vld [vmem:[%s193 + $0xc] sm:$0xf]
      %v206 = vld [vmem:[%s193 + $0x10] sm:$0xf]
      %v207 = vld [vmem:[%s193 + $0x14] sm:$0xf]
      %v208 = vld [vmem:[%s193 + $0x18] sm:$0xf]
      %v209 = vld [vmem:[%s193 + $0x1c] sm:$0xf]
      %v210 = vld [vmem:[%s193 + $0x20] sm:$0xf]
      %v211 = vld [vmem:[%s193 + $0x24] sm:$0xf]
      %v212 = vld [vmem:[%s193 + $0x28] sm:$0xf]
      %v213 = vld [vmem:[%s193 + $0x2c] sm:$0xf]
      %v214 = vld [vmem:[%s193 + $0x30] sm:$0xf]
      %v215 = vld [vmem:[%s193 + $0x34] sm:$0xf]
      %v216 = vld [vmem:[%s193 + $0x38] sm:$0xf]
      %v217 = vld [vmem:[%s193 + $0x3c] sm:$0xf]
      %v218 = vld [vmem:[%s193 + $0x40] sm:$0xf]
      %v219 = vld [vmem:[%s193 + $0x44] sm:$0xf]
      %v220 = vld [vmem:[%s193 + $0x48] sm:$0xf]
      %v221 = vld [vmem:[%s193 + $0x4c] sm:$0xf]
      %v222 = vld [vmem:[%s193 + $0x50] sm:$0xf]
      %v223 = vld [vmem:[%s193 + $0x54] sm:$0xf]
      %v224 = vld [vmem:[%s193 + $0x58] sm:$0xf]
      %v225 = vld [vmem:[%s193 + $0x5c] sm:$0xf]
      %v226 = vld [vmem:[%s193 + $0x60] sm:$0xf]
      %v227 = vld [vmem:[%s193 + $0x64] sm:$0xf]
      %v228 = vld [vmem:[%s193 + $0x68] sm:$0xf]
      %v229 = vld [vmem:[%s193 + $0x6c] sm:$0xf]
      %v230 = vld [vmem:[%s193 + $0x70] sm:$0xf]
      %v231 = vld [vmem:[%s193 + $0x74] sm:$0xf]
      %v232 = vld [vmem:[%s193 + $0x78] sm:$0xf]
      %v233 = vld [vmem:[%s193 + $0x7c] sm:$0xf]
      %v234 = vld [vmem:[%s1] sm:$0xf]
      %v235 = vld [vmem:[%s1 + $0x4] sm:$0xf]
      %v236 = vld [vmem:[%s1 + $0x8] sm:$0xf]
      %v237 = vld [vmem:[%s1 + $0xc] sm:$0xf]
      %v238 = vld [vmem:[%s1 + $0x10] sm:$0xf]
      %v239 = vld [vmem:[%s1 + $0x14] sm:$0xf]
      %v240 = vld [vmem:[%s1 + $0x18] sm:$0xf]
      %v241 = vld [vmem:[%s1 + $0x1c] sm:$0xf]
      %v242 = vld [vmem:[%s1 + $0x20] sm:$0xf]
      %v275 = vunpack.c.l.b16 %v202
      %v276 = vunpack.c.l.b16 %v203
      %v277 = vunpack.c.l.b16 %v204
      %v278 = vunpack.c.l.b16 %v205
      %v279 = vunpack.c.l.b16 %v206
      %v280 = vunpack.c.l.b16 %v207
      %v281 = vunpack.c.l.b16 %v208
      %v282 = vunpack.c.l.b16 %v209
      %v283 = vunpack.c.l.b16 %v210
      %v284 = vunpack.c.l.b16 %v211
      %v285 = vunpack.c.l.b16 %v212
      %v286 = vunpack.c.l.b16 %v213
      %v287 = vunpack.c.l.b16 %v214
      %v288 = vunpack.c.l.b16 %v215
      %v289 = vunpack.c.l.b16 %v216
      %v290 = vunpack.c.l.b16 %v217
      %v291 = vunpack.c.l.b16 %v218
      %v292 = vunpack.c.l.b16 %v219
      %v293 = vunpack.c.l.b16 %v220
      %v294 = vunpack.c.l.b16 %v221
      %v295 = vunpack.c.l.b16 %v222
      %v296 = vunpack.c.l.b16 %v223
      %v297 = vunpack.c.l.b16 %v224
      %v298 = vunpack.c.l.b16 %v225
      %v299 = vunpack.c.l.b16 %v226
      %v300 = vunpack.c.l.b16 %v227
      %v301 = vunpack.c.l.b16 %v228
      %v302 = vunpack.c.l.b16 %v229
      %v303 = vunpack.c.l.b16 %v230
      %v304 = vunpack.c.l.b16 %v231
      %v305 = vunpack.c.l.b16 %v232
      %v306 = vunpack.c.l.b16 %v233
      %v307 = vpack.c.b16 %v276, %v275
      %v308 = vpack.c.b16 %v278, %v277
      %v309 = vpack.c.b16 %v280, %v279
      %v310 = vpack.c.b16 %v282, %v281
      %v311 = vpack.c.b16 %v284, %v283
      %v312 = vpack.c.b16 %v286, %v285
      %v313 = vpack.c.b16 %v288, %v287
      %v314 = vpack.c.b16 %v290, %v289
      %v315 = vpack.c.b16 %v292, %v291
      %v316 = vpack.c.b16 %v294, %v293
      %v317 = vpack.c.b16 %v296, %v295
      %v318 = vpack.c.b16 %v298, %v297
      %v319 = vpack.c.b16 %v300, %v299
      %v320 = vpack.c.b16 %v302, %v301
      %v321 = vpack.c.b16 %v304, %v303
      %v322 = vpack.c.b16 %v306, %v305
      %v332 = vunpack.c.l.b16 %v234
      %v333 = vunpack.c.l.b16 %v235
      %v334 = vunpack.c.l.b16 %v236
      %v335 = vunpack.c.l.b16 %v237
      %v336 = vunpack.c.l.b16 %v238
      %v337 = vunpack.c.l.b16 %v239
      %v338 = vunpack.c.l.b16 %v240
      %v339 = vunpack.c.l.b16 %v241
      %v340 = vunpack.c.l.b16 %v242
      %v341 = vpack.c.b16 %v333, %v332
      %v342 = vpack.c.b16 %v335, %v334
      %v343 = vpack.c.b16 %v337, %v336
      %v344 = vpack.c.b16 %v339, %v338
      %v345 = vpack.c.b16 %v340, %v340
      %vm350 = vcmask 588800
      %v352 = vsel %vm350, %v307, 0
      %v355 = vsel %vm350, %v308, 0
      %v358 = vsel %vm350, %v309, 0
      %v361 = vsel %vm350, %v310, 0
      %v364 = vsel %vm350, %v311, 0
      %v367 = vsel %vm350, %v312, 0
      %v370 = vsel %vm350, %v313, 0
      %v373 = vsel %vm350, %v314, 0
      %v376 = vsel %vm350, %v315, 0
      %v379 = vsel %vm350, %v316, 0
      %v382 = vsel %vm350, %v317, 0
      %v385 = vsel %vm350, %v318, 0
      %v388 = vsel %vm350, %v319, 0
      %v391 = vsel %vm350, %v320, 0
      %v394 = vsel %vm350, %v321, 0
      %v397 = vsel %vm350, %v322, 0
      %vm399 = vcmask 1043456
      %v401 = vsel %vm399, %v345, 0
      %403 = vmatprep.subr.bf16.mxu0 0
      %404 = vmatpush1.bf16.msra.mxu0 %v341
      %405 = vmatprep.subr.bf16.mxu0 0
      %406 = vmatpush1.bf16.msra.mxu0 %v342
      %407 = vmatprep.subr.bf16.mxu0 0
      %408 = vmatpush1.bf16.msra.mxu0 %v343
      %409 = vmatprep.subr.bf16.mxu0 0
      %410 = vmatpush1.bf16.msra.mxu0 %v344
      %411 = vmatprep.subr.bf16.mxu0 0
      %412 = vmatpush1.bf16.msra.mxu0 %v401
      %413 = vmatprep.subr.bf16.mxu0 0
      %414 = vmatpush1.bf16.msra.mxu0 0
      %415 = vmatprep.subr.bf16.mxu0 0
      %416 = vmatpush1.bf16.msra.mxu0 0
      %417 = vmatprep.subr.bf16.mxu0 0
      %418 = vmatpush1.bf16.msra.mxu0 0
      %419 = vmatprep.subr.bf16.mxu0 0
      %420 = vmatpush1.bf16.msra.mxu0 0
      %421 = vmatprep.subr.bf16.mxu0 0
      %422 = vmatpush1.bf16.msra.mxu0 0
      %423 = vmatprep.subr.bf16.mxu0 0
      %424 = vmatpush1.bf16.msra.mxu0 0
      %425 = vmatprep.subr.bf16.mxu0 0
      %426 = vmatpush1.bf16.msra.mxu0 0
      %427 = vmatprep.subr.bf16.mxu0 0
      %428 = vmatpush1.bf16.msra.mxu0 0
      %429 = vmatprep.subr.bf16.mxu0 0
      %430 = vmatpush1.bf16.msra.mxu0 0
      %431 = vmatprep.subr.bf16.mxu0 0
      %432 = vmatpush1.bf16.msra.mxu0 0
      %433 = vmatprep.subr.bf16.mxu0 0
      %434 = vmatpush1.bf16.msra.mxu0 0
      %435 = vmatprep.mubr.bf16.mxu0 0
      %436 = vmatmul.mubr.bf16.gmra.mrb[0].mxu0 %v352
      %v437 = vpop.f32.mrb[0].mxu0
      %v438 = vadd.f32 0.0, %v437
      %v439 = vpop.f32.mrb[0].mxu0
      %v440 = vpop.f32.mrb[0].mxu0
      %v441 = vadd.f32 0.0, %v440
      %v442 = vpop.f32.mrb[0].mxu0
      %443 = vmatprep.mubr.bf16.mxu0 0
      %444 = vmatmul.mubr.bf16.gmra.mrb[0].mxu0 %v355
      %v445 = vpop.f32.mrb[0].mxu0
      %v446 = vadd.f32 0.0, %v445
      %v447 = vpop.f32.mrb[0].mxu0
      %v448 = vpop.f32.mrb[0].mxu0
      %v449 = vadd.f32 0.0, %v448
      %v450 = vpop.f32.mrb[0].mxu0
      %451 = vmatprep.mubr.bf16.mxu0 0
      %452 = vmatmul.mubr.bf16.gmra.mrb[0].mxu0 %v358
      %v453 = vpop.f32.mrb[0].mxu0
      %v454 = vadd.f32 0.0, %v453
      %v455 = vpop.f32.mrb[0].mxu0
      %v456 = vpop.f32.mrb[0].mxu0
      %v457 = vadd.f32 0.0, %v456
      %v458 = vpop.f32.mrb[0].mxu0
      %459 = vmatprep.mubr.bf16.mxu0 0
      %460 = vmatmul.mubr.bf16.gmra.mrb[0].mxu0 %v361
      %v461 = vpop.f32.mrb[0].mxu0
      %v462 = vadd.f32 0.0, %v461
      %v463 = vpop.f32.mrb[0].mxu0
      %v464 = vpop.f32.mrb[0].mxu0
      %v465 = vadd.f32 0.0, %v464
      %v466 = vpop.f32.mrb[0].mxu0
      %467 = vmatprep.mubr.bf16.mxu0 0
      %468 = vmatmul.mubr.bf16.gmra.mrb[0].mxu0 %v364
      %v469 = vpop.f32.mrb[0].mxu0
      %v470 = vadd.f32 0.0, %v469
      %v471 = vpop.f32.mrb[0].mxu0
      %v472 = vpop.f32.mrb[0].mxu0
      %v473 = vadd.f32 0.0, %v472
      %v474 = vpop.f32.mrb[0].mxu0
      %475 = vmatprep.mubr.bf16.mxu0 0
      %476 = vmatmul.mubr.bf16.gmra.mrb[0].mxu0 %v367
      %v477 = vpop.f32.mrb[0].mxu0
      %v478 = vadd.f32 0.0, %v477
      %v479 = vpop.f32.mrb[0].mxu0
      %v480 = vpop.f32.mrb[0].mxu0
      %v481 = vadd.f32 0.0, %v480
      %v482 = vpop.f32.mrb[0].mxu0
      %483 = vmatprep.mubr.bf16.mxu0 0
      %484 = vmatmul.mubr.bf16.gmra.mrb[0].mxu0 %v370
      %v485 = vpop.f32.mrb[0].mxu0
      %v486 = vadd.f32 0.0, %v485
      %v487 = vpop.f32.mrb[0].mxu0
      %v488 = vpop.f32.mrb[0].mxu0
      %v489 = vadd.f32 0.0, %v488
      %v490 = vpop.f32.mrb[0].mxu0
      %491 = vmatprep.mubr.bf16.mxu0 0
      %492 = vmatmul.mubr.bf16.gmra.mrb[0].mxu0 %v373
      %v493 = vpop.f32.mrb[0].mxu0
      %v494 = vadd.f32 0.0, %v493
      %v495 = vpop.f32.mrb[0].mxu0
      %v496 = vpop.f32.mrb[0].mxu0
      %v497 = vadd.f32 0.0, %v496
      %v498 = vpop.f32.mrb[0].mxu0
      %499 = vmatprep.mubr.bf16.mxu0 0
      %500 = vmatmul.mubr.bf16.gmra.mrb[0].mxu0 %v376
      %v501 = vpop.f32.mrb[0].mxu0
      %v502 = vadd.f32 0.0, %v501
      %v503 = vpop.f32.mrb[0].mxu0
      %v504 = vpop.f32.mrb[0].mxu0
      %v505 = vadd.f32 0.0, %v504
      %v506 = vpop.f32.mrb[0].mxu0
      %507 = vmatprep.mubr.bf16.mxu0 0
      %508 = vmatmul.mubr.bf16.gmra.mrb[0].mxu0 %v379
      %v509 = vpop.f32.mrb[0].mxu0
      %v510 = vadd.f32 0.0, %v509
      %v511 = vpop.f32.mrb[0].mxu0
      %v512 = vpop.f32.mrb[0].mxu0
      %v513 = vadd.f32 0.0, %v512
      %v514 = vpop.f32.mrb[0].mxu0
      %515 = vmatprep.mubr.bf16.mxu0 0
      %516 = vmatmul.mubr.bf16.gmra.mrb[0].mxu0 %v382
      %v517 = vpop.f32.mrb[0].mxu0
      %v518 = vadd.f32 0.0, %v517
      %v519 = vpop.f32.mrb[0].mxu0
      %v520 = vpop.f32.mrb[0].mxu0
      %v521 = vadd.f32 0.0, %v520
      %v522 = vpop.f32.mrb[0].mxu0
      %523 = vmatprep.mubr.bf16.mxu0 0
      %524 = vmatmul.mubr.bf16.gmra.mrb[0].mxu0 %v385
      %v525 = vpop.f32.mrb[0].mxu0
      %v526 = vadd.f32 0.0, %v525
      %v527 = vpop.f32.mrb[0].mxu0
      %v528 = vpop.f32.mrb[0].mxu0
      %v529 = vadd.f32 0.0, %v528
      %v530 = vpop.f32.mrb[0].mxu0
      %531 = vmatprep.mubr.bf16.mxu0 0
      %532 = vmatmul.mubr.bf16.gmra.mrb[0].mxu0 %v388
      %v533 = vpop.f32.mrb[0].mxu0
      %v534 = vadd.f32 0.0, %v533
      %v535 = vpop.f32.mrb[0].mxu0
      %v536 = vpop.f32.mrb[0].mxu0
      %v537 = vadd.f32 0.0, %v536
      %v538 = vpop.f32.mrb[0].mxu0
      %539 = vmatprep.mubr.bf16.mxu0 0
      %540 = vmatmul.mubr.bf16.gmra.mrb[0].mxu0 %v391
      %v541 = vpop.f32.mrb[0].mxu0
      %v542 = vadd.f32 0.0, %v541
      %v543 = vpop.f32.mrb[0].mxu0
      %v544 = vpop.f32.mrb[0].mxu0
      %v545 = vadd.f32 0.0, %v544
      %v546 = vpop.f32.mrb[0].mxu0
      %547 = vmatprep.mubr.bf16.mxu0 0
      %548 = vmatmul.mubr.bf16.gmra.mrb[0].mxu0 %v394
      %v549 = vpop.f32.mrb[0].mxu0
      %v550 = vadd.f32 0.0, %v549
      %v551 = vpop.f32.mrb[0].mxu0
      %v552 = vpop.f32.mrb[0].mxu0
      %v553 = vadd.f32 0.0, %v552
      %v554 = vpop.f32.mrb[0].mxu0
      %555 = vmatprep.mubr.bf16.mxu0 0
      %556 = vmatmul.mubr.bf16.gmra.mrb[0].mxu0 %v397
      %v557 = vpop.f32.mrb[0].mxu0
      %v558 = vadd.f32 0.0, %v557
      %v559 = vpop.f32.mrb[0].mxu0
      %v560 = vpop.f32.mrb[0].mxu0
      %v561 = vadd.f32 0.0, %v560
      %v562 = vpop.f32.mrb[0].mxu0
      %563 = vdwg.mxu0
      %v564 = vld [vmem:[%s2] sm:$0x1]
      %v566 = vlaneseq
      %v567 = vshrl.u32 %v566, 7
      %v568 = vsub.s32 0, %v567
      %v569 = vrot.slane %v564, %v568
      %v571 = vmul.f32 %v438, %v569
      %v572 = vmul.f32 %v441, %v569
      %v573 = vmul.f32 %v446, %v569
      %v574 = vmul.f32 %v449, %v569
      %v575 = vmul.f32 %v454, %v569
      %v576 = vmul.f32 %v457, %v569
      %v577 = vmul.f32 %v462, %v569
      %v578 = vmul.f32 %v465, %v569
      %v579 = vmul.f32 %v470, %v569
      %v580 = vmul.f32 %v473, %v569
      %v581 = vmul.f32 %v478, %v569
      %v582 = vmul.f32 %v481, %v569
      %v583 = vmul.f32 %v486, %v569
      %v584 = vmul.f32 %v489, %v569
      %v585 = vmul.f32 %v494, %v569
      %v586 = vmul.f32 %v497, %v569
      %v587 = vmul.f32 %v502, %v569
      %v588 = vmul.f32 %v505, %v569
      %v589 = vmul.f32 %v510, %v569
      %v590 = vmul.f32 %v513, %v569
      %v591 = vmul.f32 %v518, %v569
      %v592 = vmul.f32 %v521, %v569
      %v593 = vmul.f32 %v526, %v569
      %v594 = vmul.f32 %v529, %v569
      %v595 = vmul.f32 %v534, %v569
      %v596 = vmul.f32 %v537, %v569
      %v597 = vmul.f32 %v542, %v569
      %v598 = vmul.f32 %v545, %v569
      %v599 = vmul.f32 %v550, %v569
      %v600 = vmul.f32 %v553, %v569
      %v601 = vmul.f32 %v558, %v569
      %v602 = vmul.f32 %v561, %v569
      %v603 = vld [vmem:[%s3] sm:$0x1]
      %v605 = vlaneseq
      %v606 = vshrl.u32 %v605, 7
      %v607 = vsub.s32 0, %v606
      %v608 = vrot.slane %v603, %v607
      %v610 = vadd.f32 %v571, %v608
      %v611 = vadd.f32 %v572, %v608
      %v612 = vadd.f32 %v573, %v608
      %v613 = vadd.f32 %v574, %v608
      %v614 = vadd.f32 %v575, %v608
      %v615 = vadd.f32 %v576, %v608
      %v616 = vadd.f32 %v577, %v608
      %v617 = vadd.f32 %v578, %v608
      %v618 = vadd.f32 %v579, %v608
      %v619 = vadd.f32 %v580, %v608
      %v620 = vadd.f32 %v581, %v608
      %v621 = vadd.f32 %v582, %v608
      %v622 = vadd.f32 %v583, %v608
      %v623 = vadd.f32 %v584, %v608
      %v624 = vadd.f32 %v585, %v608
      %v625 = vadd.f32 %v586, %v608
      %v626 = vadd.f32 %v587, %v608
      %v627 = vadd.f32 %v588, %v608
      %v628 = vadd.f32 %v589, %v608
      %v629 = vadd.f32 %v590, %v608
      %v630 = vadd.f32 %v591, %v608
      %v631 = vadd.f32 %v592, %v608
      %v632 = vadd.f32 %v593, %v608
      %v633 = vadd.f32 %v594, %v608
      %v634 = vadd.f32 %v595, %v608
      %v635 = vadd.f32 %v596, %v608
      %v636 = vadd.f32 %v597, %v608
      %v637 = vadd.f32 %v598, %v608
      %v638 = vadd.f32 %v599, %v608
      %v639 = vadd.f32 %v600, %v608
      %v640 = vadd.f32 %v601, %v608
      %v641 = vadd.f32 %v602, %v608
      %v642 = vmax.f32 %v610, 0.0
      %v643 = vmax.f32 %v611, 0.0
      %v644 = vmax.f32 %v612, 0.0
      %v645 = vmax.f32 %v613, 0.0
      %v646 = vmax.f32 %v614, 0.0
      %v647 = vmax.f32 %v615, 0.0
      %v648 = vmax.f32 %v616, 0.0
      %v649 = vmax.f32 %v617, 0.0
      %v650 = vmax.f32 %v618, 0.0
      %v651 = vmax.f32 %v619, 0.0
      %v652 = vmax.f32 %v620, 0.0
      %v653 = vmax.f32 %v621, 0.0
      %v654 = vmax.f32 %v622, 0.0
      %v655 = vmax.f32 %v623, 0.0
      %v656 = vmax.f32 %v624, 0.0
      %v657 = vmax.f32 %v625, 0.0
      %v658 = vmax.f32 %v626, 0.0
      %v659 = vmax.f32 %v627, 0.0
      %v660 = vmax.f32 %v628, 0.0
      %v661 = vmax.f32 %v629, 0.0
      %v662 = vmax.f32 %v630, 0.0
      %v663 = vmax.f32 %v631, 0.0
      %v664 = vmax.f32 %v632, 0.0
      %v665 = vmax.f32 %v633, 0.0
      %v666 = vmax.f32 %v634, 0.0
      %v667 = vmax.f32 %v635, 0.0
      %v668 = vmax.f32 %v636, 0.0
      %v669 = vmax.f32 %v637, 0.0
      %v670 = vmax.f32 %v638, 0.0
      %v671 = vmax.f32 %v639, 0.0
      %v672 = vmax.f32 %v640, 0.0
      %v673 = vmax.f32 %v641, 0.0
      %v674 = vpack.c.bf16 %v643, %v642
      %v675 = vpack.c.bf16 %v645, %v644
      %v676 = vpack.c.bf16 %v647, %v646
      %v677 = vpack.c.bf16 %v649, %v648
      %v678 = vpack.c.bf16 %v651, %v650
      %v679 = vpack.c.bf16 %v653, %v652
      %v680 = vpack.c.bf16 %v655, %v654
      %v681 = vpack.c.bf16 %v657, %v656
      %v682 = vpack.c.bf16 %v659, %v658
      %v683 = vpack.c.bf16 %v661, %v660
      %v684 = vpack.c.bf16 %v663, %v662
      %v685 = vpack.c.bf16 %v665, %v664
      %v686 = vpack.c.bf16 %v667, %v666
      %v687 = vpack.c.bf16 %v669, %v668
      %v688 = vpack.c.bf16 %v671, %v670
      %v689 = vpack.c.bf16 %v673, %v672
      %v706 = vunpack.c.l.b16 %v674
      %v707 = vunpack.c.h.b16 %v674
      %v708 = vunpack.c.l.b16 %v675
      %v709 = vunpack.c.h.b16 %v675
      %v710 = vunpack.c.l.b16 %v676
      %v711 = vunpack.c.h.b16 %v676
      %v712 = vunpack.c.l.b16 %v677
      %v713 = vunpack.c.h.b16 %v677
      %v714 = vunpack.c.l.b16 %v678
      %v715 = vunpack.c.h.b16 %v678
      %v716 = vunpack.c.l.b16 %v679
      %v717 = vunpack.c.h.b16 %v679
      %v718 = vunpack.c.l.b16 %v680
      %v719 = vunpack.c.h.b16 %v680
      %v720 = vunpack.c.l.b16 %v681
      %v721 = vunpack.c.h.b16 %v681
      %v722 = vunpack.c.l.b16 %v682
      %v723 = vunpack.c.h.b16 %v682
      %v724 = vunpack.c.l.b16 %v683
      %v725 = vunpack.c.h.b16 %v683
      %v726 = vunpack.c.l.b16 %v684
      %v727 = vunpack.c.h.b16 %v684
      %v728 = vunpack.c.l.b16 %v685
      %v729 = vunpack.c.h.b16 %v685
      %v730 = vunpack.c.l.b16 %v686
      %v731 = vunpack.c.h.b16 %v686
      %v732 = vunpack.c.l.b16 %v687
      %v733 = vunpack.c.h.b16 %v687
      %v734 = vunpack.c.l.b16 %v688
      %v735 = vunpack.c.h.b16 %v688
      %v736 = vunpack.c.l.b16 %v689
      %v737 = vunpack.c.h.b16 %v689
      %v738 = vpack.c.b16 %v706, %v706
      %v739 = vpack.c.b16 %v707, %v707
      %v740 = vpack.c.b16 %v708, %v708
      %v741 = vpack.c.b16 %v709, %v709
      %v742 = vpack.c.b16 %v710, %v710
      %v743 = vpack.c.b16 %v711, %v711
      %v744 = vpack.c.b16 %v712, %v712
      %v745 = vpack.c.b16 %v713, %v713
      %v746 = vpack.c.b16 %v714, %v714
      %v747 = vpack.c.b16 %v715, %v715
      %v748 = vpack.c.b16 %v716, %v716
      %v749 = vpack.c.b16 %v717, %v717
      %v750 = vpack.c.b16 %v718, %v718
      %v751 = vpack.c.b16 %v719, %v719
      %v752 = vpack.c.b16 %v720, %v720
      %v753 = vpack.c.b16 %v721, %v721
      %v754 = vpack.c.b16 %v722, %v722
      %v755 = vpack.c.b16 %v723, %v723
      %v756 = vpack.c.b16 %v724, %v724
      %v757 = vpack.c.b16 %v725, %v725
      %v758 = vpack.c.b16 %v726, %v726
      %v759 = vpack.c.b16 %v727, %v727
      %v760 = vpack.c.b16 %v728, %v728
      %v761 = vpack.c.b16 %v729, %v729
      %v762 = vpack.c.b16 %v730, %v730
      %v763 = vpack.c.b16 %v731, %v731
      %v764 = vpack.c.b16 %v732, %v732
      %v765 = vpack.c.b16 %v733, %v733
      %v766 = vpack.c.b16 %v734, %v734
      %v767 = vpack.c.b16 %v735, %v735
      %v768 = vpack.c.b16 %v736, %v736
      %v769 = vpack.c.b16 %v737, %v737
      %vm802 = vcmask 125952
      %803 = vst.msk [vmem:[%s199] sm:$0xf] %vm802, %v738
      %804 = vst.msk [vmem:[%s199 + $0x4] sm:$0xf] %vm802, %v739
      %805 = vst.msk [vmem:[%s199 + $0x8] sm:$0xf] %vm802, %v740
      %806 = vst.msk [vmem:[%s199 + $0xc] sm:$0xf] %vm802, %v741
      %807 = vst.msk [vmem:[%s199 + $0x10] sm:$0xf] %vm802, %v742
      %808 = vst.msk [vmem:[%s199 + $0x14] sm:$0xf] %vm802, %v743
      %809 = vst.msk [vmem:[%s199 + $0x18] sm:$0xf] %vm802, %v744
      %810 = vst.msk [vmem:[%s199 + $0x1c] sm:$0xf] %vm802, %v745
      %811 = vst.msk [vmem:[%s199 + $0x20] sm:$0xf] %vm802, %v746
      %812 = vst.msk [vmem:[%s199 + $0x24] sm:$0xf] %vm802, %v747
      %813 = vst.msk [vmem:[%s199 + $0x28] sm:$0xf] %vm802, %v748
      %814 = vst.msk [vmem:[%s199 + $0x2c] sm:$0xf] %vm802, %v749
      %815 = vst.msk [vmem:[%s199 + $0x30] sm:$0xf] %vm802, %v750
      %816 = vst.msk [vmem:[%s199 + $0x34] sm:$0xf] %vm802, %v751
      %817 = vst.msk [vmem:[%s199 + $0x38] sm:$0xf] %vm802, %v752
      %818 = vst.msk [vmem:[%s199 + $0x3c] sm:$0xf] %vm802, %v753
      %819 = vst.msk [vmem:[%s199 + $0x40] sm:$0xf] %vm802, %v754
      %820 = vst.msk [vmem:[%s199 + $0x44] sm:$0xf] %vm802, %v755
      %821 = vst.msk [vmem:[%s199 + $0x48] sm:$0xf] %vm802, %v756
      %822 = vst.msk [vmem:[%s199 + $0x4c] sm:$0xf] %vm802, %v757
      %823 = vst.msk [vmem:[%s199 + $0x50] sm:$0xf] %vm802, %v758
      %824 = vst.msk [vmem:[%s199 + $0x54] sm:$0xf] %vm802, %v759
      %825 = vst.msk [vmem:[%s199 + $0x58] sm:$0xf] %vm802, %v760
      %826 = vst.msk [vmem:[%s199 + $0x5c] sm:$0xf] %vm802, %v761
      %827 = vst.msk [vmem:[%s199 + $0x60] sm:$0xf] %vm802, %v762
      %828 = vst.msk [vmem:[%s199 + $0x64] sm:$0xf] %vm802, %v763
      %829 = vst.msk [vmem:[%s199 + $0x68] sm:$0xf] %vm802, %v764
      %830 = vst.msk [vmem:[%s199 + $0x6c] sm:$0xf] %vm802, %v765
      %831 = vst.msk [vmem:[%s199 + $0x70] sm:$0xf] %vm802, %v766
      %832 = vst.msk [vmem:[%s199 + $0x74] sm:$0xf] %vm802, %v767
      %833 = vst.msk [vmem:[%s199 + $0x78] sm:$0xf] %vm802, %v768
      %834 = vst.msk [vmem:[%s199 + $0x7c] sm:$0xf] %vm802, %v769
      %s835 = smul.u32 32, %s15
      %p836 = scmp.lt.s32.totalorder %s835, 63
      %s837 = scalar_select %p836, %s835, 63
      %s838 = smul.addr %s837, 4
      %s839 = scalar_lea.vmem %s4, %s838
      // Predicated region
      $region37: #{forward_pruned.7} parent=35 // pred_check
        %p840 = pneg %p122
      $region38: #{forward_pruned.7} parent=35 // pred_check_branch
        %842 = sbr.rel (%p840) target = $region40
      $region39: #{forward_pruned.7} parent=35 // pred_region
        %s843 = smul.u32 32, %s15
      $region40: #{forward_pruned.7} parent=35 // pred_fallthru
        _
    $region36: #{forward_pruned.7} parent=5 // pred_fallthru
      _
    %p844 = scmp.le.s32.totalorder 2, %s10
    // Predicated region
    $region41: #{forward_pruned.7} parent=5 // pred_check
      %p845 = pneg %p844
    $region42: #{forward_pruned.7} parent=5 // pred_check_branch
      %847 = sbr.rel (%p845) target = $region44
    $region43: #{forward_pruned.7} parent=5 // pred_region
      %s848 = ssub.s32 %s10, 2
      // Predicated region
      $region45: #{forward_pruned.7} parent=43 // pred_check
        %p849 = pneg %p128
      $region46: #{forward_pruned.7} parent=43 // pred_check_branch
        %851 = sbr.rel (%p849) target = $region48
      $region47: #{forward_pruned.7} parent=43 // pred_region
        %s852 = smul.u32 32, %s16
        %p853 = scmp.lt.s32.totalorder %s852, 63
        %s854 = scalar_select %p853, %s852, 63
        %s855 = smul.addr %s854, 4
        %s856 = scalar_lea.vmem %s4, %s855
      $region48: #{forward_pruned.7} parent=43 // pred_fallthru
        _
    $region44: #{forward_pruned.7} parent=5 // pred_fallthru
      _
  $region6: #{forward_pruned.7} parent=0 // loop_footer
    %s14 = sadd.s32 1, %s10
  $region7: #{forward_pruned.7} parent=0 // loop_footer_branch
    %9 = sbr.rel target = $region3
  $region8: #{forward_pruned.7} parent=0 // loop_exit
    _

// kernel: forward_pruned.8
$region0: #{forward_pruned.8}
  #allocation0 [shape = 'u32[]', space=smem, size = 0x4, offset = 0x4, fixed_abs, tag = 'smem constant byte address 0x4 - core index']
  #allocation1 [shape = 'u32[144,128]{1,0:T(1,128)}', space=vmem, size = 0x12000, scoped, tag = 'internal scratch']
  %s0 = inlined_call_operand.vmem [shape: bf16[512,144], index: 0, kind: input, shape index: {}]
  %s1 = inlined_call_operand.vmem [shape: bf16[144,16], index: 1, kind: input, shape index: {}]
  %s2 = inlined_call_operand.vmem [shape: bf16[512,8], index: 2, kind: input, shape index: {}]
  %s3 = inlined_call_operand.vmem [shape: bf16[8,16], index: 3, kind: input, shape index: {}]
  %s4 = inlined_call_operand.vmem [shape: f32[1,16], index: 4, kind: input, shape index: {}]
  %s5 = inlined_call_operand.vmem [shape: f32[1,16], index: 5, kind: input, shape index: {}]
  %s6 = inlined_call_operand.vmem [shape: bf16[512,16], index: 6, kind: output, shape index: {}]
  %s7 = sld [smem:[#allocation0]]
  $region57: #{forward_pruned.8} parent=0
    _
  %s9 = ssub.s32 1, %s7
  %s10 = scalar_select 0, %s9, %s7
  loop: start=0, step=1, limit=4
  $region2: #{forward_pruned.8} parent=0 // loop_pre_header
    _
  $region3: #{forward_pruned.8} parent=0 // loop_header
    %s12 = sphi 0, %s16
    %p13 = scmp.ge.s32.totalorder %s12, 4
    %s22 = sphi 0, %s24
    %s25 = sphi 0, %s22
    %s26 = sphi 0, %s25
    %s42 = sphi 0, %s26
    %s46 = sphi 0, %s46
    %s48 = sphi 0, %s46
    %s49 = sphi 0, %s48
    %s63 = sphi 0, %s49
    %s69 = sphi 0, %s71
    %s72 = sphi 0, %s69
    %s73 = sphi 0, %s72
    %s89 = sphi 0, %s73
    %s93 = sphi 0, %s93
    %s95 = sphi 0, %s93
    %s96 = sphi 0, %s95
    %s110 = sphi 0, %s96
    %s114 = sphi 0, %s114
    %s116 = sphi 0, %s114
    %s117 = sphi 0, %s116
    %s131 = sphi 0, %s117
    %s135 = sphi 0, %s135
    %s137 = sphi 0, %s135
    %s138 = sphi 0, %s137
    %s152 = sphi 0, %s138
    %s158 = sphi 0, %s160
    %s161 = sphi 0, %s158
    %s162 = sphi 0, %s161
    %s178 = sphi 0, %s162
  $region4: #{forward_pruned.8} parent=0 // loop_header_branch
    %15 = sbr.rel (%p13) target = $region8
  $region5: #{forward_pruned.8} parent=0 // loop_body
    %s17 = ssub.s32 %s12, 1
    %s18 = ssub.s32 %s12, 2
    %s19 = sadd.s32 %s12, 1
    %s20 = ssub.s32 %s12, %s19
    %p21 = scmp.eq.s32.totalorder %s20, 0
    %s23 = sadd.s32 %s22, 1
    %s24 = scalar_select %p21, %s22, %s23
    %p27 = pneg %p21
    %p28 = scmp.eq.s32.totalorder %s12, 1
    %p29 = por %p27, %p28
    %p30 = scmp.ne.s32.totalorder %s22, %s25
    %p31 = scmp.eq.s32.totalorder %s12, 0
    %p32 = por %p30, %p31
    %p33 = scmp.ne.s32.totalorder %s22, %s25
    %p34 = scmp.eq.s32.totalorder %s17, 1
    %p35 = por %p33, %p34
    %p36 = scmp.ne.s32.totalorder %s25, %s26
    %p37 = scmp.eq.s32.totalorder %s17, 0
    %p38 = por %p36, %p37
    %p39 = scmp.ne.s32.totalorder %s25, %s26
    %p40 = scmp.eq.s32.totalorder %s18, 1
    %p41 = por %p39, %p40
    %p43 = scmp.ne.s32.totalorder %s26, %s42
    %p44 = scmp.eq.s32.totalorder %s18, 0
    %p45 = por %p43, %p44
    %s47 = sadd.s32 %s46, 1
    %p50 = scmp.eq.s32.totalorder %s12, 1
    %p51 = scmp.ne.s32.totalorder %s46, %s48
    %p52 = scmp.eq.s32.totalorder %s12, 0
    %p53 = por %p51, %p52
    %p54 = scmp.ne.s32.totalorder %s46, %s48
    %p55 = scmp.eq.s32.totalorder %s17, 1
    %p56 = por %p54, %p55
    %p57 = scmp.ne.s32.totalorder %s48, %s49
    %p58 = scmp.eq.s32.totalorder %s17, 0
    %p59 = por %p57, %p58
    %p60 = scmp.ne.s32.totalorder %s48, %s49
    %p61 = scmp.eq.s32.totalorder %s18, 1
    %p62 = por %p60, %p61
    %p64 = scmp.ne.s32.totalorder %s49, %s63
    %p65 = scmp.eq.s32.totalorder %s18, 0
    %p66 = por %p64, %p65
    %s67 = ssub.s32 %s12, %s19
    %p68 = scmp.eq.s32.totalorder %s67, 0
    %s70 = sadd.s32 %s69, 1
    %s71 = scalar_select %p68, %s69, %s70
    %p74 = pneg %p68
    %p75 = scmp.eq.s32.totalorder %s12, 1
    %p76 = por %p74, %p75
    %p77 = scmp.ne.s32.totalorder %s69, %s72
    %p78 = scmp.eq.s32.totalorder %s12, 0
    %p79 = por %p77, %p78
    %p80 = scmp.ne.s32.totalorder %s69, %s72
    %p81 = scmp.eq.s32.totalorder %s17, 1
    %p82 = por %p80, %p81
    %p83 = scmp.ne.s32.totalorder %s72, %s73
    %p84 = scmp.eq.s32.totalorder %s17, 0
    %p85 = por %p83, %p84
    %p86 = scmp.ne.s32.totalorder %s72, %s73
    %p87 = scmp.eq.s32.totalorder %s18, 1
    %p88 = por %p86, %p87
    %p90 = scmp.ne.s32.totalorder %s73, %s89
    %p91 = scmp.eq.s32.totalorder %s18, 0
    %p92 = por %p90, %p91
    %s94 = sadd.s32 %s93, 1
    %p97 = scmp.eq.s32.totalorder %s12, 1
    %p98 = scmp.ne.s32.totalorder %s93, %s95
    %p99 = scmp.eq.s32.totalorder %s12, 0
    %p100 = por %p98, %p99
    %p101 = scmp.ne.s32.totalorder %s93, %s95
    %p102 = scmp.eq.s32.totalorder %s17, 1
    %p103 = por %p101, %p102
    %p104 = scmp.ne.s32.totalorder %s95, %s96
    %p105 = scmp.eq.s32.totalorder %s17, 0
    %p106 = por %p104, %p105
    %p107 = scmp.ne.s32.totalorder %s95, %s96
    %p108 = scmp.eq.s32.totalorder %s18, 1
    %p109 = por %p107, %p108
    %p111 = scmp.ne.s32.totalorder %s96, %s110
    %p112 = scmp.eq.s32.totalorder %s18, 0
    %p113 = por %p111, %p112
    %s115 = sadd.s32 %s114, 1
    %p118 = scmp.eq.s32.totalorder %s12, 1
    %p119 = scmp.ne.s32.totalorder %s114, %s116
    %p120 = scmp.eq.s32.totalorder %s12, 0
    %p121 = por %p119, %p120
    %p122 = scmp.ne.s32.totalorder %s114, %s116
    %p123 = scmp.eq.s32.totalorder %s17, 1
    %p124 = por %p122, %p123
    %p125 = scmp.ne.s32.totalorder %s116, %s117
    %p126 = scmp.eq.s32.totalorder %s17, 0
    %p127 = por %p125, %p126
    %p128 = scmp.ne.s32.totalorder %s116, %s117
    %p129 = scmp.eq.s32.totalorder %s18, 1
    %p130 = por %p128, %p129
    %p132 = scmp.ne.s32.totalorder %s117, %s131
    %p133 = scmp.eq.s32.totalorder %s18, 0
    %p134 = por %p132, %p133
    %s136 = sadd.s32 %s135, 1
    %p139 = scmp.eq.s32.totalorder %s12, 1
    %p140 = scmp.ne.s32.totalorder %s135, %s137
    %p141 = scmp.eq.s32.totalorder %s12, 0
    %p142 = por %p140, %p141
    %p143 = scmp.ne.s32.totalorder %s135, %s137
    %p144 = scmp.eq.s32.totalorder %s17, 1
    %p145 = por %p143, %p144
    %p146 = scmp.ne.s32.totalorder %s137, %s138
    %p147 = scmp.eq.s32.totalorder %s17, 0
    %p148 = por %p146, %p147
    %p149 = scmp.ne.s32.totalorder %s137, %s138
    %p150 = scmp.eq.s32.totalorder %s18, 1
    %p151 = por %p149, %p150
    %p153 = scmp.ne.s32.totalorder %s138, %s152
    %p154 = scmp.eq.s32.totalorder %s18, 0
    %p155 = por %p153, %p154
    %s156 = ssub.s32 %s12, %s19
    %p157 = scmp.eq.s32.totalorder %s156, 0
    %s159 = sadd.s32 %s158, 1
    %s160 = scalar_select %p157, %s158, %s159
    %p163 = pneg %p157
    %p164 = scmp.eq.s32.totalorder %s12, 1
    %p165 = por %p163, %p164
    %p166 = scmp.ne.s32.totalorder %s158, %s161
    %p167 = scmp.eq.s32.totalorder %s12, 0
    %p168 = por %p166, %p167
    %p169 = scmp.ne.s32.totalorder %s158, %s161
    %p170 = scmp.eq.s32.totalorder %s17, 1
    %p171 = por %p169, %p170
    %p172 = scmp.ne.s32.totalorder %s161, %s162
    %p173 = scmp.eq.s32.totalorder %s17, 0
    %p174 = por %p172, %p173
    %p175 = scmp.ne.s32.totalorder %s161, %s162
    %p176 = scmp.eq.s32.totalorder %s18, 1
    %p177 = por %p175, %p176
    %p179 = scmp.ne.s32.totalorder %s162, %s178
    %p180 = scmp.eq.s32.totalorder %s18, 0
    %p181 = por %p179, %p180
    %p182 = scmp.le.s32.totalorder 1, %s12
    %p183 = scmp.lt.s32.totalorder %s12, 3
    %p184 = pnand %p182, %p183
    %p185 = pneg %p184
    // Predicated region
    $region9: #{forward_pruned.8} parent=5 // pred_check
      _
    $region10: #{forward_pruned.8} parent=5 // pred_check_branch
      %187 = sbr.rel (%p184) target = $region12
    $region11: #{forward_pruned.8} parent=5 // pred_region
      %s188 = ssub.s32 %s12, 1
      // Predicated region
      $region13: #{forward_pruned.8} parent=11 // pred_check
        %p189 = pneg %p59
      $region14: #{forward_pruned.8} parent=11 // pred_check_branch
        %191 = sbr.rel (%p189) target = $region16
      $region15: #{forward_pruned.8} parent=11 // pred_region
        _
      $region16: #{forward_pruned.8} parent=11 // pred_fallthru
        _
      // Predicated region
      $region17: #{forward_pruned.8} parent=11 // pred_check
        %p192 = pneg %p106
      $region18: #{forward_pruned.8} parent=11 // pred_check_branch
        %194 = sbr.rel (%p192) target = $region20
      $region19: #{forward_pruned.8} parent=11 // pred_region
        _
      $region20: #{forward_pruned.8} parent=11 // pred_fallthru
        _
      // Predicated region
      $region21: #{forward_pruned.8} parent=11 // pred_check
        %p195 = pneg %p127
      $region22: #{forward_pruned.8} parent=11 // pred_check_branch
        %197 = sbr.rel (%p195) target = $region24
      $region23: #{forward_pruned.8} parent=11 // pred_region
        _
      $region24: #{forward_pruned.8} parent=11 // pred_fallthru
        _
      // Predicated region
      $region25: #{forward_pruned.8} parent=11 // pred_check
        %p198 = pneg %p148
      $region26: #{forward_pruned.8} parent=11 // pred_check_branch
        %200 = sbr.rel (%p198) target = $region28
      $region27: #{forward_pruned.8} parent=11 // pred_region
        _
      $region28: #{forward_pruned.8} parent=11 // pred_fallthru
        _
    $region12: #{forward_pruned.8} parent=5 // pred_fallthru
      _
    %p201 = scmp.lt.s32.totalorder %s12, 2
    // Predicated region
    $region29: #{forward_pruned.8} parent=5 // pred_check
      %p202 = pneg %p201
    $region30: #{forward_pruned.8} parent=5 // pred_check_branch
      %204 = sbr.rel (%p202) target = $region32
    $region31: #{forward_pruned.8} parent=5 // pred_region
      // Predicated region
      $region33: #{forward_pruned.8} parent=31 // pred_check
        %p205 = pneg %p32
      $region34: #{forward_pruned.8} parent=31 // pred_check_branch
        %207 = sbr.rel (%p205) target = $region36
      $region35: #{forward_pruned.8} parent=31 // pred_region
        %s208 = smul.u32 32, %s12
        %p209 = scmp.lt.s32.totalorder %s208, 63
        %s210 = scalar_select %p209, %s208, 63
        %s211 = smul.addr %s210, 2
        %s212 = smul.addr %s211, 4
        %s213 = scalar_lea.vmem %s0, %s212
        %s214 = smul.u32 32, %s12
      $region36: #{forward_pruned.8} parent=31 // pred_fallthru
        _
      // Predicated region
      $region37: #{forward_pruned.8} parent=31 // pred_check
        %p215 = pneg %p79
      $region38: #{forward_pruned.8} parent=31 // pred_check_branch
        %217 = sbr.rel (%p215) target = $region40
      $region39: #{forward_pruned.8} parent=31 // pred_region
        %s218 = smul.u32 32, %s12
        %p219 = scmp.lt.s32.totalorder %s218, 63
        %s220 = scalar_select %p219, %s218, 63
        %s221 = smul.addr %s220, 4
        %s222 = scalar_lea.vmem %s2, %s221
        %s223 = smul.u32 32, %s12
      $region40: #{forward_pruned.8} parent=31 // pred_fallthru
        _
    $region32: #{forward_pruned.8} parent=5 // pred_fallthru
      _
    %p224 = scmp.le.s32.totalorder 1, %s12
    %p225 = scmp.lt.s32.totalorder %s12, 3
    %p226 = pnand %p224, %p225
    %p227 = pneg %p226
    // Predicated region
    $region41: #{forward_pruned.8} parent=5 // pred_check
      _
    $region42: #{forward_pruned.8} parent=5 // pred_check_branch
      %229 = sbr.rel (%p226) target = $region44
    $region43: #{forward_pruned.8} parent=5 // pred_region
      %s230 = ssub.s32 %s12, 1
      %s231 = smul.u32 32, %s17
      %p232 = scmp.lt.s32.totalorder %s231, 63
      %s233 = scalar_select %p232, %s231, 63
      %s234 = smul.addr %s233, 2
      %s235 = smul.addr %s234, 4
      %s236 = scalar_lea.vmem %s0, %s235
      %p237 = pneg %p38
      %p238 = pneg %p35
      %p239 = pneg %p59
      %p240 = pneg %p56
      %s241 = smul.u32 32, %s17
      %p242 = scmp.lt.s32.totalorder %s241, 63
      %s243 = scalar_select %p242, %s241, 63
      %s244 = smul.addr %s243, 4
      %s245 = scalar_lea.vmem %s2, %s244
      %p246 = pneg %p85
      %p247 = pneg %p82
      %p248 = pneg %p106
      %p249 = pneg %p103
      %p250 = pneg %p127
      %p251 = pneg %p124
      %p252 = pneg %p148
      %p253 = pneg %p145
      %p254 = pneg %p174
      %p255 = pneg %p171
      %s256 = smul.u32 32, %s17
      %p257 = scmp.lt.s32.totalorder %s256, 63
      %s258 = scalar_select %p257, %s256, 63
      %s259 = smul.addr %s258, 4
      %s260 = scalar_lea.vmem %s6, %s259
      %s261 = smul.u32 32, %s17
      %p262 = scmp.lt.s32.totalorder %s261, 63
      %s263 = scalar_select %p262, %s261, 63
      %s264 = smul.addr %s263, 2
      %s265 = smul.addr %s264, 4
      %s266 = scalar_lea.vmem %s0, %s265
      %s267 = smul.u32 32, %s17
      %s268 = smul.u32 32, %s17
      %p269 = scmp.lt.s32.totalorder %s268, 63
      %s270 = scalar_select %p269, %s268, 63
      %s271 = smul.addr %s270, 4
      %s272 = scalar_lea.vmem %s2, %s271
      %s273 = smul.u32 32, %s17
      %s274 = smul.u32 32, %s17
      %p275 = scmp.lt.s32.totalorder %s274, 63
      %s276 = scalar_select %p275, %s274, 63
      %s277 = smul.addr %s276, 4
      %s278 = scalar_lea.vmem %s6, %s277
      %s279 = smul.u32 32, %s17
      %v281 = vld [vmem:[%s266] sm:$0xff]
      %v282 = vld [vmem:[%s266 + $0x8] sm:$0xff]
      %v283 = vld [vmem:[%s266 + $0x10] sm:$0xff]
      %v284 = vld [vmem:[%s266 + $0x18] sm:$0xff]
      %v285 = vld [vmem:[%s266 + $0x20] sm:$0xff]
      %v286 = vld [vmem:[%s266 + $0x28] sm:$0xff]
      %v287 = vld [vmem:[%s266 + $0x30] sm:$0xff]
      %v288 = vld [vmem:[%s266 + $0x38] sm:$0xff]
      %v289 = vld [vmem:[%s266 + $0x40] sm:$0xff]
      %v290 = vld [vmem:[%s266 + $0x48] sm:$0xff]
      %v291 = vld [vmem:[%s266 + $0x50] sm:$0xff]
      %v292 = vld [vmem:[%s266 + $0x58] sm:$0xff]
      %v293 = vld [vmem:[%s266 + $0x60] sm:$0xff]
      %v294 = vld [vmem:[%s266 + $0x68] sm:$0xff]
      %v295 = vld [vmem:[%s266 + $0x70] sm:$0xff]
      %v296 = vld [vmem:[%s266 + $0x78] sm:$0xff]
      %v297 = vld [vmem:[%s266 + $0x80] sm:$0xff]
      %v298 = vld [vmem:[%s266 + $0x88] sm:$0xff]
      %v299 = vld [vmem:[%s266 + $0x90] sm:$0xff]
      %v300 = vld [vmem:[%s266 + $0x98] sm:$0xff]
      %v301 = vld [vmem:[%s266 + $0xa0] sm:$0xff]
      %v302 = vld [vmem:[%s266 + $0xa8] sm:$0xff]
      %v303 = vld [vmem:[%s266 + $0xb0] sm:$0xff]
      %v304 = vld [vmem:[%s266 + $0xb8] sm:$0xff]
      %v305 = vld [vmem:[%s266 + $0xc0] sm:$0xff]
      %v306 = vld [vmem:[%s266 + $0xc8] sm:$0xff]
      %v307 = vld [vmem:[%s266 + $0xd0] sm:$0xff]
      %v308 = vld [vmem:[%s266 + $0xd8] sm:$0xff]
      %v309 = vld [vmem:[%s266 + $0xe0] sm:$0xff]
      %v310 = vld [vmem:[%s266 + $0xe8] sm:$0xff]
      %v311 = vld [vmem:[%s266 + $0xf0] sm:$0xff]
      %v312 = vld [vmem:[%s266 + $0xf8] sm:$0xff]
      %v313 = vld [vmem:[%s1] sm:$0xf]
      %v314 = vld [vmem:[%s1 + $0x4] sm:$0xf]
      %v315 = vld [vmem:[%s1 + $0x8] sm:$0xf]
      %v316 = vld [vmem:[%s1 + $0xc] sm:$0xf]
      %v317 = vld [vmem:[%s1 + $0x10] sm:$0xf]
      %v318 = vld [vmem:[%s1 + $0x14] sm:$0xf]
      %v319 = vld [vmem:[%s1 + $0x18] sm:$0xf]
      %v320 = vld [vmem:[%s1 + $0x1c] sm:$0xf]
      %v321 = vld [vmem:[%s1 + $0x20] sm:$0xf]
      %v322 = vld [vmem:[%s1 + $0x24] sm:$0xf]
      %v323 = vld [vmem:[%s1 + $0x28] sm:$0xf]
      %v324 = vld [vmem:[%s1 + $0x2c] sm:$0xf]
      %v325 = vld [vmem:[%s1 + $0x30] sm:$0xf]
      %v326 = vld [vmem:[%s1 + $0x34] sm:$0xf]
      %v327 = vld [vmem:[%s1 + $0x38] sm:$0xf]
      %v328 = vld [vmem:[%s1 + $0x3c] sm:$0xf]
      %v329 = vld [vmem:[%s1 + $0x40] sm:$0xf]
      %v330 = vld [vmem:[%s1 + $0x44] sm:$0xf]
      %v331 = vld [vmem:[%s272] sm:$0xf]
      %v332 = vld [vmem:[%s272 + $0x4] sm:$0xf]
      %v333 = vld [vmem:[%s272 + $0x8] sm:$0xf]
      %v334 = vld [vmem:[%s272 + $0xc] sm:$0xf]
      %v335 = vld [vmem:[%s272 + $0x10] sm:$0xf]
      %v336 = vld [vmem:[%s272 + $0x14] sm:$0xf]
      %v337 = vld [vmem:[%s272 + $0x18] sm:$0xf]
      %v338 = vld [vmem:[%s272 + $0x1c] sm:$0xf]
      %v339 = vld [vmem:[%s272 + $0x20] sm:$0xf]
      %v340 = vld [vmem:[%s272 + $0x24] sm:$0xf]
      %v341 = vld [vmem:[%s272 + $0x28] sm:$0xf]
      %v342 = vld [vmem:[%s272 + $0x2c] sm:$0xf]
      %v343 = vld [vmem:[%s272 + $0x30] sm:$0xf]
      %v344 = vld [vmem:[%s272 + $0x34] sm:$0xf]
      %v345 = vld [vmem:[%s272 + $0x38] sm:$0xf]
      %v346 = vld [vmem:[%s272 + $0x3c] sm:$0xf]
      %v347 = vld [vmem:[%s272 + $0x40] sm:$0xf]
      %v348 = vld [vmem:[%s272 + $0x44] sm:$0xf]
      %v349 = vld [vmem:[%s272 + $0x48] sm:$0xf]
      %v350 = vld [vmem:[%s272 + $0x4c] sm:$0xf]
      %v351 = vld [vmem:[%s272 + $0x50] sm:$0xf]
      %v352 = vld [vmem:[%s272 + $0x54] sm:$0xf]
      %v353 = vld [vmem:[%s272 + $0x58] sm:$0xf]
      %v354 = vld [vmem:[%s272 + $0x5c] sm:$0xf]
      %v355 = vld [vmem:[%s272 + $0x60] sm:$0xf]
      %v356 = vld [vmem:[%s272 + $0x64] sm:$0xf]
      %v357 = vld [vmem:[%s272 + $0x68] sm:$0xf]
      %v358 = vld [vmem:[%s272 + $0x6c] sm:$0xf]
      %v359 = vld [vmem:[%s272 + $0x70] sm:$0xf]
      %v360 = vld [vmem:[%s272 + $0x74] sm:$0xf]
      %v361 = vld [vmem:[%s272 + $0x78] sm:$0xf]
      %v362 = vld [vmem:[%s272 + $0x7c] sm:$0xf]
      %v363 = vld [vmem:[%s3] sm:$0xf]
      %v396 = vunpack.c.l.b16 %v331
      %v397 = vunpack.c.l.b16 %v332
      %v398 = vunpack.c.l.b16 %v333
      %v399 = vunpack.c.l.b16 %v334
      %v400 = vunpack.c.l.b16 %v335
      %v401 = vunpack.c.l.b16 %v336
      %v402 = vunpack.c.l.b16 %v337
      %v403 = vunpack.c.l.b16 %v338
      %v404 = vunpack.c.l.b16 %v339
      %v405 = vunpack.c.l.b16 %v340
      %v406 = vunpack.c.l.b16 %v341
      %v407 = vunpack.c.l.b16 %v342
      %v408 = vunpack.c.l.b16 %v343
      %v409 = vunpack.c.l.b16 %v344
      %v410 = vunpack.c.l.b16 %v345
      %v411 = vunpack.c.l.b16 %v346
      %v412 = vunpack.c.l.b16 %v347
      %v413 = vunpack.c.l.b16 %v348
      %v414 = vunpack.c.l.b16 %v349
      %v415 = vunpack.c.l.b16 %v350
      %v416 = vunpack.c.l.b16 %v351
      %v417 = vunpack.c.l.b16 %v352
      %v418 = vunpack.c.l.b16 %v353
      %v419 = vunpack.c.l.b16 %v354
      %v420 = vunpack.c.l.b16 %v355
      %v421 = vunpack.c.l.b16 %v356
      %v422 = vunpack.c.l.b16 %v357
      %v423 = vunpack.c.l.b16 %v358
      %v424 = vunpack.c.l.b16 %v359
      %v425 = vunpack.c.l.b16 %v360
      %v426 = vunpack.c.l.b16 %v361
      %v427 = vunpack.c.l.b16 %v362
      %v428 = vpack.c.b16 %v397, %v396
      %v429 = vpack.c.b16 %v399, %v398
      %v430 = vpack.c.b16 %v401, %v400
      %v431 = vpack.c.b16 %v403, %v402
      %v432 = vpack.c.b16 %v405, %v404
      %v433 = vpack.c.b16 %v407, %v406
      %v434 = vpack.c.b16 %v409, %v408
      %v435 = vpack.c.b16 %v411, %v410
      %v436 = vpack.c.b16 %v413, %v412
      %v437 = vpack.c.b16 %v415, %v414
      %v438 = vpack.c.b16 %v417, %v416
      %v439 = vpack.c.b16 %v419, %v418
      %v440 = vpack.c.b16 %v421, %v420
      %v441 = vpack.c.b16 %v423, %v422
      %v442 = vpack.c.b16 %v425, %v424
      %v443 = vpack.c.b16 %v427, %v426
      %vm444 = vcmask 64512
      %v446 = vsel %vm444, %v428, 0
      %v449 = vsel %vm444, %v429, 0
      %v452 = vsel %vm444, %v430, 0
      %v455 = vsel %vm444, %v431, 0
      %v458 = vsel %vm444, %v432, 0
      %v461 = vsel %vm444, %v433, 0
      %v464 = vsel %vm444, %v434, 0
      %v467 = vsel %vm444, %v435, 0
      %v470 = vsel %vm444, %v436, 0
      %v473 = vsel %vm444, %v437, 0
      %v476 = vsel %vm444, %v438, 0
      %v479 = vsel %vm444, %v439, 0
      %v482 = vsel %vm444, %v440, 0
      %v485 = vsel %vm444, %v441, 0
      %v488 = vsel %vm444, %v442, 0
      %v491 = vsel %vm444, %v443, 0
      %vm493 = vcmask 1043456
      %v495 = vsel %vm493, %v363, 0
      %497 = vmatprep.subr.bf16.mxu0 0
      %498 = vmatpush1.bf16.msra.mxu0 %v495
      %499 = vmatprep.subr.bf16.mxu0 0
      %500 = vmatpush1.bf16.msra.mxu0 0
      %501 = vmatprep.subr.bf16.mxu0 0
      %502 = vmatpush1.bf16.msra.mxu0 0
      %503 = vmatprep.subr.bf16.mxu0 0
      %504 = vmatpush1.bf16.msra.mxu0 0
      %505 = vmatprep.subr.bf16.mxu0 0
      %506 = vmatpush1.bf16.msra.mxu0 0
      %507 = vmatprep.subr.bf16.mxu0 0
      %508 = vmatpush1.bf16.msra.mxu0 0
      %509 = vmatprep.subr.bf16.mxu0 0
      %510 = vmatpush1.bf16.msra.mxu0 0
      %511 = vmatprep.subr.bf16.mxu0 0
      %512 = vmatpush1.bf16.msra.mxu0 0
      %513 = vmatprep.subr.bf16.mxu0 0
      %514 = vmatpush1.bf16.msra.mxu0 0
      %515 = vmatprep.subr.bf16.mxu0 0
      %516 = vmatpush1.bf16.msra.mxu0 0
      %517 = vmatprep.subr.bf16.mxu0 0
      %518 = vmatpush1.bf16.msra.mxu0 0
      %519 = vmatprep.subr.bf16.mxu0 0
      %520 = vmatpush1.bf16.msra.mxu0 0
      %521 = vmatprep.subr.bf16.mxu0 0
      %522 = vmatpush1.bf16.msra.mxu0 0
      %523 = vmatprep.subr.bf16.mxu0 0
      %524 = vmatpush1.bf16.msra.mxu0 0
      %525 = vmatprep.subr.bf16.mxu0 0
      %526 = vmatpush1.bf16.msra.mxu0 0
      %527 = vmatprep.subr.bf16.mxu0 0
      %528 = vmatpush1.bf16.msra.mxu0 0
      %529 = vmatprep.mubr.bf16.mxu0 0
      %530 = vmatmul.mubr.bf16.gmra.mrb[0].mxu0 %v446
      %v531 = vpop.f32.mrb[0].mxu0
      %v532 = vadd.f32 0.0, %v531
      %v533 = vpop.f32.mrb[0].mxu0
      %v534 = vpop.f32.mrb[0].mxu0
      %v535 = vadd.f32 0.0, %v534
      %v536 = vpop.f32.mrb[0].mxu0
      %537 = vmatprep.mubr.bf16.mxu0 0
      %538 = vmatmul.mubr.bf16.gmra.mrb[0].mxu0 %v449
      %v539 = vpop.f32.mrb[0].mxu0
      %v540 = vadd.f32 0.0, %v539
      %v541 = vpop.f32.mrb[0].mxu0
      %v542 = vpop.f32.mrb[0].mxu0
      %v543 = vadd.f32 0.0, %v542
      %v544 = vpop.f32.mrb[0].mxu0
      %545 = vmatprep.mubr.bf16.mxu0 0
      %546 = vmatmul.mubr.bf16.gmra.mrb[0].mxu0 %v452
      %v547 = vpop.f32.mrb[0].mxu0
      %v548 = vadd.f32 0.0, %v547
      %v549 = vpop.f32.mrb[0].mxu0
      %v550 = vpop.f32.mrb[0].mxu0
      %v551 = vadd.f32 0.0, %v550
      %v552 = vpop.f32.mrb[0].mxu0
      %553 = vmatprep.mubr.bf16.mxu0 0
      %554 = vmatmul.mubr.bf16.gmra.mrb[0].mxu0 %v455
      %v555 = vpop.f32.mrb[0].mxu0
      %v556 = vadd.f32 0.0, %v555
      %v557 = vpop.f32.mrb[0].mxu0
      %v558 = vpop.f32.mrb[0].mxu0
      %v559 = vadd.f32 0.0, %v558
      %v560 = vpop.f32.mrb[0].mxu0
      %561 = vmatprep.mubr.bf16.mxu0 0
      %562 = vmatmul.mubr.bf16.gmra.mrb[0].mxu0 %v458
      %v563 = vpop.f32.mrb[0].mxu0
      %v564 = vadd.f32 0.0, %v563
      %v565 = vpop.f32.mrb[0].mxu0
      %v566 = vpop.f32.mrb[0].mxu0
      %v567 = vadd.f32 0.0, %v566
      %v568 = vpop.f32.mrb[0].mxu0
      %569 = vmatprep.mubr.bf16.mxu0 0
      %570 = vmatmul.mubr.bf16.gmra.mrb[0].mxu0 %v461
      %v571 = vpop.f32.mrb[0].mxu0
      %v572 = vadd.f32 0.0, %v571
      %v573 = vpop.f32.mrb[0].mxu0
      %v574 = vpop.f32.mrb[0].mxu0
      %v575 = vadd.f32 0.0, %v574
      %v576 = vpop.f32.mrb[0].mxu0
      %577 = vmatprep.mubr.bf16.mxu0 0
      %578 = vmatmul.mubr.bf16.gmra.mrb[0].mxu0 %v464
      %v579 = vpop.f32.mrb[0].mxu0
      %v580 = vadd.f32 0.0, %v579
      %v581 = vpop.f32.mrb[0].mxu0
      %v582 = vpop.f32.mrb[0].mxu0
      %v583 = vadd.f32 0.0, %v582
      %v584 = vpop.f32.mrb[0].mxu0
      %585 = vmatprep.mubr.bf16.mxu0 0
      %586 = vmatmul.mubr.bf16.gmra.mrb[0].mxu0 %v467
      %v587 = vpop.f32.mrb[0].mxu0
      %v588 = vadd.f32 0.0, %v587
      %v589 = vpop.f32.mrb[0].mxu0
      %v590 = vpop.f32.mrb[0].mxu0
      %v591 = vadd.f32 0.0, %v590
      %v592 = vpop.f32.mrb[0].mxu0
      %593 = vmatprep.mubr.bf16.mxu0 0
      %594 = vmatmul.mubr.bf16.gmra.mrb[0].mxu0 %v470
      %v595 = vpop.f32.mrb[0].mxu0
      %v596 = vadd.f32 0.0, %v595
      %v597 = vpop.f32.mrb[0].mxu0
      %v598 = vpop.f32.mrb[0].mxu0
      %v599 = vadd.f32 0.0, %v598
      %v600 = vpop.f32.mrb[0].mxu0
      %601 = vmatprep.mubr.bf16.mxu0 0
      %602 = vmatmul.mubr.bf16.gmra.mrb[0].mxu0 %v473
      %v603 = vpop.f32.mrb[0].mxu0
      %v604 = vadd.f32 0.0, %v603
      %v605 = vpop.f32.mrb[0].mxu0
      %v606 = vpop.f32.mrb[0].mxu0
      %v607 = vadd.f32 0.0, %v606
      %v608 = vpop.f32.mrb[0].mxu0
      %609 = vmatprep.mubr.bf16.mxu0 0
      %610 = vmatmul.mubr.bf16.gmra.mrb[0].mxu0 %v476
      %v611 = vpop.f32.mrb[0].mxu0
      %v612 = vadd.f32 0.0, %v611
      %v613 = vpop.f32.mrb[0].mxu0
      %v614 = vpop.f32.mrb[0].mxu0
      %v615 = vadd.f32 0.0, %v614
      %v616 = vpop.f32.mrb[0].mxu0
      %617 = vmatprep.mubr.bf16.mxu0 0
      %618 = vmatmul.mubr.bf16.gmra.mrb[0].mxu0 %v479
      %v619 = vpop.f32.mrb[0].mxu0
      %v620 = vadd.f32 0.0, %v619
      %v621 = vpop.f32.mrb[0].mxu0
      %v622 = vpop.f32.mrb[0].mxu0
      %v623 = vadd.f32 0.0, %v622
      %v624 = vpop.f32.mrb[0].mxu0
      %625 = vmatprep.mubr.bf16.mxu0 0
      %626 = vmatmul.mubr.bf16.gmra.mrb[0].mxu0 %v482
      %v627 = vpop.f32.mrb[0].mxu0
      %v628 = vadd.f32 0.0, %v627
      %v629 = vpop.f32.mrb[0].mxu0
      %v630 = vpop.f32.mrb[0].mxu0
      %v631 = vadd.f32 0.0, %v630
      %v632 = vpop.f32.mrb[0].mxu0
      %633 = vmatprep.mubr.bf16.mxu0 0
      %634 = vmatmul.mubr.bf16.gmra.mrb[0].mxu0 %v485
      %v635 = vpop.f32.mrb[0].mxu0
      %v636 = vadd.f32 0.0, %v635
      %v637 = vpop.f32.mrb[0].mxu0
      %v638 = vpop.f32.mrb[0].mxu0
      %v639 = vadd.f32 0.0, %v638
      %v640 = vpop.f32.mrb[0].mxu0
      %641 = vmatprep.mubr.bf16.mxu0 0
      %642 = vmatmul.mubr.bf16.gmra.mrb[0].mxu0 %v488
      %v643 = vpop.f32.mrb[0].mxu0
      %v644 = vadd.f32 0.0, %v643
      %v645 = vpop.f32.mrb[0].mxu0
      %v646 = vpop.f32.mrb[0].mxu0
      %v647 = vadd.f32 0.0, %v646
      %v648 = vpop.f32.mrb[0].mxu0
      %649 = vmatprep.mubr.bf16.mxu0 0
      %650 = vmatmul.mubr.bf16.gmra.mrb[0].mxu0 %v491
      %v651 = vpop.f32.mrb[0].mxu0
      %v652 = vadd.f32 0.0, %v651
      %v653 = vpop.f32.mrb[0].mxu0
      %v654 = vpop.f32.mrb[0].mxu0
      %v655 = vadd.f32 0.0, %v654
      %v656 = vpop.f32.mrb[0].mxu0
      %657 = vdwg.mxu0
      %v690 = vunpack.c.l.b16 %v281
      %v691 = vunpack.c.h.b16 %v281
      %v692 = vunpack.c.l.b16 %v282
      %v693 = vunpack.c.h.b16 %v282
      %v694 = vunpack.c.l.b16 %v283
      %v695 = vunpack.c.h.b16 %v283
      %v696 = vunpack.c.l.b16 %v284
      %v697 = vunpack.c.h.b16 %v284
      %v698 = vunpack.c.l.b16 %v285
      %v699 = vunpack.c.h.b16 %v285
      %v700 = vunpack.c.l.b16 %v286
      %v701 = vunpack.c.h.b16 %v286
      %v702 = vunpack.c.l.b16 %v287
      %v703 = vunpack.c.h.b16 %v287
      %v704 = vunpack.c.l.b16 %v288
      %v705 = vunpack.c.h.b16 %v288
      %v706 = vunpack.c.l.b16 %v289
      %v707 = vunpack.c.h.b16 %v289
      %v708 = vunpack.c.l.b16 %v290
      %v709 = vunpack.c.h.b16 %v290
      %v710 = vunpack.c.l.b16 %v291
      %v711 = vunpack.c.h.b16 %v291
      %v712 = vunpack.c.l.b16 %v292
      %v713 = vunpack.c.h.b16 %v292
      %v714 = vunpack.c.l.b16 %v293
      %v715 = vunpack.c.h.b16 %v293
      %v716 = vunpack.c.l.b16 %v294
      %v717 = vunpack.c.h.b16 %v294
      %v718 = vunpack.c.l.b16 %v295
      %v719 = vunpack.c.h.b16 %v295
      %v720 = vunpack.c.l.b16 %v296
      %v721 = vunpack.c.h.b16 %v296
      %v722 = vunpack.c.l.b16 %v297
      %v723 = vunpack.c.h.b16 %v297
      %v724 = vunpack.c.l.b16 %v298
      %v725 = vunpack.c.h.b16 %v298
      %v726 = vunpack.c.l.b16 %v299
      %v727 = vunpack.c.h.b16 %v299
      %v728 = vunpack.c.l.b16 %v300
      %v729 = vunpack.c.h.b16 %v300
      %v730 = vunpack.c.l.b16 %v301
      %v731 = vunpack.c.h.b16 %v301
      %v732 = vunpack.c.l.b16 %v302
      %v733 = vunpack.c.h.b16 %v302
      %v734 = vunpack.c.l.b16 %v303
      %v735 = vunpack.c.h.b16 %v303
      %v736 = vunpack.c.l.b16 %v304
      %v737 = vunpack.c.h.b16 %v304
      %v738 = vunpack.c.l.b16 %v305
      %v739 = vunpack.c.h.b16 %v305
      %v740 = vunpack.c.l.b16 %v306
      %v741 = vunpack.c.h.b16 %v306
      %v742 = vunpack.c.l.b16 %v307
      %v743 = vunpack.c.h.b16 %v307
      %v744 = vunpack.c.l.b16 %v308
      %v745 = vunpack.c.h.b16 %v308
      %v746 = vunpack.c.l.b16 %v309
      %v747 = vunpack.c.h.b16 %v309
      %v748 = vunpack.c.l.b16 %v310
      %v749 = vunpack.c.h.b16 %v310
      %v750 = vunpack.c.l.b16 %v311
      %v751 = vunpack.c.h.b16 %v311
      %v752 = vunpack.c.l.b16 %v312
      %v753 = vunpack.c.h.b16 %v312
      %v754 = vpack.c.b16 %v692, %v690
      %v755 = vpack.c.b16 %v693, %v691
      %v756 = vpack.c.b16 %v696, %v694
      %v757 = vpack.c.b16 %v697, %v695
      %v758 = vpack.c.b16 %v700, %v698
      %v759 = vpack.c.b16 %v701, %v699
      %v760 = vpack.c.b16 %v704, %v702
      %v761 = vpack.c.b16 %v705, %v703
      %v762 = vpack.c.b16 %v708, %v706
      %v763 = vpack.c.b16 %v709, %v707
      %v764 = vpack.c.b16 %v712, %v710
      %v765 = vpack.c.b16 %v713, %v711
      %v766 = vpack.c.b16 %v716, %v714
      %v767 = vpack.c.b16 %v717, %v715
      %v768 = vpack.c.b16 %v720, %v718
      %v769 = vpack.c.b16 %v721, %v719
      %v770 = vpack.c.b16 %v724, %v722
      %v771 = vpack.c.b16 %v725, %v723
      %v772 = vpack.c.b16 %v728, %v726
      %v773 = vpack.c.b16 %v729, %v727
      %v774 = vpack.c.b16 %v732, %v730
      %v775 = vpack.c.b16 %v733, %v731
      %v776 = vpack.c.b16 %v736, %v734
      %v777 = vpack.c.b16 %v737, %v735
      %v778 = vpack.c.b16 %v740, %v738
      %v779 = vpack.c.b16 %v741, %v739
      %v780 = vpack.c.b16 %v744, %v742
      %v781 = vpack.c.b16 %v745, %v743
      %v782 = vpack.c.b16 %v748, %v746
      %v783 = vpack.c.b16 %v749, %v747
      %v784 = vpack.c.b16 %v752, %v750
      %v785 = vpack.c.b16 %v753, %v751
      %v820 = vunpack.c.l.b16 %v313
      %v821 = vunpack.c.l.b16 %v314
      %v822 = vunpack.c.l.b16 %v315
      %v823 = vunpack.c.l.b16 %v316
      %v824 = vunpack.c.l.b16 %v317
      %v825 = vunpack.c.l.b16 %v318
      %v826 = vunpack.c.l.b16 %v319
      %v827 = vunpack.c.l.b16 %v320
      %v828 = vunpack.c.l.b16 %v321
      %v829 = vunpack.c.l.b16 %v322
      %v830 = vunpack.c.l.b16 %v323
      %v831 = vunpack.c.l.b16 %v324
      %v832 = vunpack.c.l.b16 %v325
      %v833 = vunpack.c.l.b16 %v326
      %v834 = vunpack.c.l.b16 %v327
      %v835 = vunpack.c.l.b16 %v328
      %v836 = vunpack.c.l.b16 %v329
      %v837 = vunpack.c.l.b16 %v330
      %v838 = vpack.c.b16 %v821, %v820
      %v839 = vpack.c.b16 %v823, %v822
      %v840 = vpack.c.b16 %v825, %v824
      %v841 = vpack.c.b16 %v827, %v826
      %v842 = vpack.c.b16 %v829, %v828
      %v843 = vpack.c.b16 %v831, %v830
      %v844 = vpack.c.b16 %v833, %v832
      %v845 = vpack.c.b16 %v835, %v834
      %v846 = vpack.c.b16 %v837, %v836
      %vm856 = vcmask 130048
      %v858 = vsel %vm856, %v755, 0
      %v861 = vsel %vm856, %v757, 0
      %v864 = vsel %vm856, %v759, 0
      %v867 = vsel %vm856, %v761, 0
      %v870 = vsel %vm856, %v763, 0
      %v873 = vsel %vm856, %v765, 0
      %v876 = vsel %vm856, %v767, 0
      %v879 = vsel %vm856, %v769, 0
      %v882 = vsel %vm856, %v771, 0
      %v885 = vsel %vm856, %v773, 0
      %v888 = vsel %vm856, %v775, 0
      %v891 = vsel %vm856, %v777, 0
      %v894 = vsel %vm856, %v779, 0
      %v897 = vsel %vm856, %v781, 0
      %v900 = vsel %vm856, %v783, 0
      %v903 = vsel %vm856, %v785, 0
      %905 = vmatprep.subr.bf16.mxu0 0
      %906 = vmatpush1.bf16.msra.mxu0 %v838
      %907 = vmatprep.subr.bf16.mxu0 0
      %908 = vmatpush1.bf16.msra.mxu0 %v839
      %909 = vmatprep.subr.bf16.mxu0 0
      %910 = vmatpush1.bf16.msra.mxu0 %v840
      %911 = vmatprep.subr.bf16.mxu0 0
      %912 = vmatpush1.bf16.msra.mxu0 %v841
      %913 = vmatprep.subr.bf16.mxu0 0
      %914 = vmatpush1.bf16.msra.mxu0 %v842
      %915 = vmatprep.subr.bf16.mxu0 0
      %916 = vmatpush1.bf16.msra.mxu0 %v843
      %917 = vmatprep.subr.bf16.mxu0 0
      %918 = vmatpush1.bf16.msra.mxu0 %v844
      %919 = vmatprep.subr.bf16.mxu0 0
      %920 = vmatpush1.bf16.msra.mxu0 %v845
      %921 = vmatprep.subr.bf16.mxu0 0
      %922 = vmatpush1.bf16.msra.mxu0 %v846
      %923 = vmatprep.subr.bf16.mxu0 0
      %924 = vmatpush1.bf16.msra.mxu0 0
      %925 = vmatprep.subr.bf16.mxu0 0
      %926 = vmatpush1.bf16.msra.mxu0 0
      %927 = vmatprep.subr.bf16.mxu0 0
      %928 = vmatpush1.bf16.msra.mxu0 0
      %929 = vmatprep.subr.bf16.mxu0 0
      %930 = vmatpush1.bf16.msra.mxu0 0
      %931 = vmatprep.subr.bf16.mxu0 0
      %932 = vmatpush1.bf16.msra.mxu0 0
      %933 = vmatprep.subr.bf16.mxu0 0
      %934 = vmatpush1.bf16.msra.mxu0 0
      %935 = vmatprep.subr.bf16.mxu0 0
      %936 = vmatpush1.bf16.msra.mxu0 0
      %937 = vmatprep.mubr.bf16.mxu0 %v858
      %938 = vmatmul.mubr.bf16.gmra.mrb[0].mxu0 %v754
      %v939 = vpop.f32.mrb[0].mxu0
      %v940 = vadd.f32 %v532, %v939
      %v941 = vpop.f32.mrb[0].mxu0
      %v942 = vpop.f32.mrb[0].mxu0
      %v943 = vadd.f32 %v535, %v942
      %v944 = vpop.f32.mrb[0].mxu0
      %945 = vmatprep.mubr.bf16.mxu0 %v861
      %946 = vmatmul.mubr.bf16.gmra.mrb[0].mxu0 %v756
      %v947 = vpop.f32.mrb[0].mxu0
      %v948 = vadd.f32 %v540, %v947
      %v949 = vpop.f32.mrb[0].mxu0
      %v950 = vpop.f32.mrb[0].mxu0
      %v951 = vadd.f32 %v543, %v950
      %v952 = vpop.f32.mrb[0].mxu0
      %953 = vmatprep.mubr.bf16.mxu0 %v864
      %954 = vmatmul.mubr.bf16.gmra.mrb[0].mxu0 %v758
      %v955 = vpop.f32.mrb[0].mxu0
      %v956 = vadd.f32 %v548, %v955
      %v957 = vpop.f32.mrb[0].mxu0
      %v958 = vpop.f32.mrb[0].mxu0
      %v959 = vadd.f32 %v551, %v958
      %v960 = vpop.f32.mrb[0].mxu0
      %961 = vmatprep.mubr.bf16.mxu0 %v867
      %962 = vmatmul.mubr.bf16.gmra.mrb[0].mxu0 %v760
      %v963 = vpop.f32.mrb[0].mxu0
      %v964 = vadd.f32 %v556, %v963
      %v965 = vpop.f32.mrb[0].mxu0
      %v966 = vpop.f32.mrb[0].mxu0
      %v967 = vadd.f32 %v559, %v966
      %v968 = vpop.f32.mrb[0].mxu0
      %969 = vmatprep.mubr.bf16.mxu0 %v870
      %970 = vmatmul.mubr.bf16.gmra.mrb[0].mxu0 %v762
      %v971 = vpop.f32.mrb[0].mxu0
      %v972 = vadd.f32 %v564, %v971
      %v973 = vpop.f32.mrb[0].mxu0
      %v974 = vpop.f32.mrb[0].mxu0
      %v975 = vadd.f32 %v567, %v974
      %v976 = vpop.f32.mrb[0].mxu0
      %977 = vmatprep.mubr.bf16.mxu0 %v873
      %978 = vmatmul.mubr.bf16.gmra.mrb[0].mxu0 %v764
      %v979 = vpop.f32.mrb[0].mxu0
      %v980 = vadd.f32 %v572, %v979
      %v981 = vpop.f32.mrb[0].mxu0
      %v982 = vpop.f32.mrb[0].mxu0
      %v983 = vadd.f32 %v575, %v982
      %v984 = vpop.f32.mrb[0].mxu0
      %985 = vmatprep.mubr.bf16.mxu0 %v876
      %986 = vmatmul.mubr.bf16.gmra.mrb[0].mxu0 %v766
      %v987 = vpop.f32.mrb[0].mxu0
      %v988 = vadd.f32 %v580, %v987
      %v989 = vpop.f32.mrb[0].mxu0
      %v990 = vpop.f32.mrb[0].mxu0
      %v991 = vadd.f32 %v583, %v990
      %v992 = vpop.f32.mrb[0].mxu0
      %993 = vmatprep.mubr.bf16.mxu0 %v879
      %994 = vmatmul.mubr.bf16.gmra.mrb[0].mxu0 %v768
      %v995 = vpop.f32.mrb[0].mxu0
      %v996 = vadd.f32 %v588, %v995
      %v997 = vpop.f32.mrb[0].mxu0
      %v998 = vpop.f32.mrb[0].mxu0
      %v999 = vadd.f32 %v591, %v998
      %v1000 = vpop.f32.mrb[0].mxu0
      %1001 = vmatprep.mubr.bf16.mxu0 %v882
      %1002 = vmatmul.mubr.bf16.gmra.mrb[0].mxu0 %v770
      %v1003 = vpop.f32.mrb[0].mxu0
      %v1004 = vadd.f32 %v596, %v1003
      %v1005 = vpop.f32.mrb[0].mxu0
      %v1006 = vpop.f32.mrb[0].mxu0
      %v1007 = vadd.f32 %v599, %v1006
      %v1008 = vpop.f32.mrb[0].mxu0
      %1009 = vmatprep.mubr.bf16.mxu0 %v885
      %1010 = vmatmul.mubr.bf16.gmra.mrb[0].mxu0 %v772
      %v1011 = vpop.f32.mrb[0].mxu0
      %v1012 = vadd.f32 %v604, %v1011
      %v1013 = vpop.f32.mrb[0].mxu0
      %v1014 = vpop.f32.mrb[0].mxu0
      %v1015 = vadd.f32 %v607, %v1014
      %v1016 = vpop.f32.mrb[0].mxu0
      %1017 = vmatprep.mubr.bf16.mxu0 %v888
      %1018 = vmatmul.mubr.bf16.gmra.mrb[0].mxu0 %v774
      %v1019 = vpop.f32.mrb[0].mxu0
      %v1020 = vadd.f32 %v612, %v1019
      %v1021 = vpop.f32.mrb[0].mxu0
      %v1022 = vpop.f32.mrb[0].mxu0
      %v1023 = vadd.f32 %v615, %v1022
      %v1024 = vpop.f32.mrb[0].mxu0
      %1025 = vmatprep.mubr.bf16.mxu0 %v891
      %1026 = vmatmul.mubr.bf16.gmra.mrb[0].mxu0 %v776
      %v1027 = vpop.f32.mrb[0].mxu0
      %v1028 = vadd.f32 %v620, %v1027
      %v1029 = vpop.f32.mrb[0].mxu0
      %v1030 = vpop.f32.mrb[0].mxu0
      %v1031 = vadd.f32 %v623, %v1030
      %v1032 = vpop.f32.mrb[0].mxu0
      %1033 = vmatprep.mubr.bf16.mxu0 %v894
      %1034 = vmatmul.mubr.bf16.gmra.mrb[0].mxu0 %v778
      %v1035 = vpop.f32.mrb[0].mxu0
      %v1036 = vadd.f32 %v628, %v1035
      %v1037 = vpop.f32.mrb[0].mxu0
      %v1038 = vpop.f32.mrb[0].mxu0
      %v1039 = vadd.f32 %v631, %v1038
      %v1040 = vpop.f32.mrb[0].mxu0
      %1041 = vmatprep.mubr.bf16.mxu0 %v897
      %1042 = vmatmul.mubr.bf16.gmra.mrb[0].mxu0 %v780
      %v1043 = vpop.f32.mrb[0].mxu0
      %v1044 = vadd.f32 %v636, %v1043
      %v1045 = vpop.f32.mrb[0].mxu0
      %v1046 = vpop.f32.mrb[0].mxu0
      %v1047 = vadd.f32 %v639, %v1046
      %v1048 = vpop.f32.mrb[0].mxu0
      %1049 = vmatprep.mubr.bf16.mxu0 %v900
      %1050 = vmatmul.mubr.bf16.gmra.mrb[0].mxu0 %v782
      %v1051 = vpop.f32.mrb[0].mxu0
      %v1052 = vadd.f32 %v644, %v1051
      %v1053 = vpop.f32.mrb[0].mxu0
      %v1054 = vpop.f32.mrb[0].mxu0
      %v1055 = vadd.f32 %v647, %v1054
      %v1056 = vpop.f32.mrb[0].mxu0
      %1057 = vmatprep.mubr.bf16.mxu0 %v903
      %1058 = vmatmul.mubr.bf16.gmra.mrb[0].mxu0 %v784
      %v1059 = vpop.f32.mrb[0].mxu0
      %v1060 = vadd.f32 %v652, %v1059
      %v1061 = vpop.f32.mrb[0].mxu0
      %v1062 = vpop.f32.mrb[0].mxu0
      %v1063 = vadd.f32 %v655, %v1062
      %v1064 = vpop.f32.mrb[0].mxu0
      %1065 = vdwg.mxu0
      %v1066 = vld [vmem:[%s4] sm:$0x1]
      %v1068 = vlaneseq
      %v1069 = vshrl.u32 %v1068, 7
      %v1070 = vsub.s32 0, %v1069
      %v1071 = vrot.slane %v1066, %v1070
      %v1073 = vmul.f32 %v940, %v1071
      %v1074 = vmul.f32 %v943, %v1071
      %v1075 = vmul.f32 %v948, %v1071
      %v1076 = vmul.f32 %v951, %v1071
      %v1077 = vmul.f32 %v956, %v1071
      %v1078 = vmul.f32 %v959, %v1071
      %v1079 = vmul.f32 %v964, %v1071
      %v1080 = vmul.f32 %v967, %v1071
      %v1081 = vmul.f32 %v972, %v1071
      %v1082 = vmul.f32 %v975, %v1071
      %v1083 = vmul.f32 %v980, %v1071
      %v1084 = vmul.f32 %v983, %v1071
      %v1085 = vmul.f32 %v988, %v1071
      %v1086 = vmul.f32 %v991, %v1071
      %v1087 = vmul.f32 %v996, %v1071
      %v1088 = vmul.f32 %v999, %v1071
      %v1089 = vmul.f32 %v1004, %v1071
      %v1090 = vmul.f32 %v1007, %v1071
      %v1091 = vmul.f32 %v1012, %v1071
      %v1092 = vmul.f32 %v1015, %v1071
      %v1093 = vmul.f32 %v1020, %v1071
      %v1094 = vmul.f32 %v1023, %v1071
      %v1095 = vmul.f32 %v1028, %v1071
      %v1096 = vmul.f32 %v1031, %v1071
      %v1097 = vmul.f32 %v1036, %v1071
      %v1098 = vmul.f32 %v1039, %v1071
      %v1099 = vmul.f32 %v1044, %v1071
      %v1100 = vmul.f32 %v1047, %v1071
      %v1101 = vmul.f32 %v1052, %v1071
      %v1102 = vmul.f32 %v1055, %v1071
      %v1103 = vmul.f32 %v1060, %v1071
      %v1104 = vmul.f32 %v1063, %v1071
      %v1105 = vld [vmem:[%s5] sm:$0x1]
      %v1107 = vlaneseq
      %v1108 = vshrl.u32 %v1107, 7
      %v1109 = vsub.s32 0, %v1108
      %v1110 = vrot.slane %v1105, %v1109
      %v1112 = vadd.f32 %v1073, %v1110
      %v1113 = vadd.f32 %v1074, %v1110
      %v1114 = vadd.f32 %v1075, %v1110
      %v1115 = vadd.f32 %v1076, %v1110
      %v1116 = vadd.f32 %v1077, %v1110
      %v1117 = vadd.f32 %v1078, %v1110
      %v1118 = vadd.f32 %v1079, %v1110
      %v1119 = vadd.f32 %v1080, %v1110
      %v1120 = vadd.f32 %v1081, %v1110
      %v1121 = vadd.f32 %v1082, %v1110
      %v1122 = vadd.f32 %v1083, %v1110
      %v1123 = vadd.f32 %v1084, %v1110
      %v1124 = vadd.f32 %v1085, %v1110
      %v1125 = vadd.f32 %v1086, %v1110
      %v1126 = vadd.f32 %v1087, %v1110
      %v1127 = vadd.f32 %v1088, %v1110
      %v1128 = vadd.f32 %v1089, %v1110
      %v1129 = vadd.f32 %v1090, %v1110
      %v1130 = vadd.f32 %v1091, %v1110
      %v1131 = vadd.f32 %v1092, %v1110
      %v1132 = vadd.f32 %v1093, %v1110
      %v1133 = vadd.f32 %v1094, %v1110
      %v1134 = vadd.f32 %v1095, %v1110
      %v1135 = vadd.f32 %v1096, %v1110
      %v1136 = vadd.f32 %v1097, %v1110
      %v1137 = vadd.f32 %v1098, %v1110
      %v1138 = vadd.f32 %v1099, %v1110
      %v1139 = vadd.f32 %v1100, %v1110
      %v1140 = vadd.f32 %v1101, %v1110
      %v1141 = vadd.f32 %v1102, %v1110
      %v1142 = vadd.f32 %v1103, %v1110
      %v1143 = vadd.f32 %v1104, %v1110
      %v1144 = vmax.f32 %v1112, 0.0
      %v1145 = vmax.f32 %v1113, 0.0
      %v1146 = vmax.f32 %v1114, 0.0
      %v1147 = vmax.f32 %v1115, 0.0
      %v1148 = vmax.f32 %v1116, 0.0
      %v1149 = vmax.f32 %v1117, 0.0
      %v1150 = vmax.f32 %v1118, 0.0
      %v1151 = vmax.f32 %v1119, 0.0
      %v1152 = vmax.f32 %v1120, 0.0
      %v1153 = vmax.f32 %v1121, 0.0
      %v1154 = vmax.f32 %v1122, 0.0
      %v1155 = vmax.f32 %v1123, 0.0
      %v1156 = vmax.f32 %v1124, 0.0
      %v1157 = vmax.f32 %v1125, 0.0
      %v1158 = vmax.f32 %v1126, 0.0
      %v1159 = vmax.f32 %v1127, 0.0
      %v1160 = vmax.f32 %v1128, 0.0
      %v1161 = vmax.f32 %v1129, 0.0
      %v1162 = vmax.f32 %v1130, 0.0
      %v1163 = vmax.f32 %v1131, 0.0
      %v1164 = vmax.f32 %v1132, 0.0
      %v1165 = vmax.f32 %v1133, 0.0
      %v1166 = vmax.f32 %v1134, 0.0
      %v1167 = vmax.f32 %v1135, 0.0
      %v1168 = vmax.f32 %v1136, 0.0
      %v1169 = vmax.f32 %v1137, 0.0
      %v1170 = vmax.f32 %v1138, 0.0
      %v1171 = vmax.f32 %v1139, 0.0
      %v1172 = vmax.f32 %v1140, 0.0
      %v1173 = vmax.f32 %v1141, 0.0
      %v1174 = vmax.f32 %v1142, 0.0
      %v1175 = vmax.f32 %v1143, 0.0
      %v1176 = vpack.c.bf16 %v1145, %v1144
      %v1177 = vpack.c.bf16 %v1147, %v1146
      %v1178 = vpack.c.bf16 %v1149, %v1148
      %v1179 = vpack.c.bf16 %v1151, %v1150
      %v1180 = vpack.c.bf16 %v1153, %v1152
      %v1181 = vpack.c.bf16 %v1155, %v1154
      %v1182 = vpack.c.bf16 %v1157, %v1156
      %v1183 = vpack.c.bf16 %v1159, %v1158
      %v1184 = vpack.c.bf16 %v1161, %v1160
      %v1185 = vpack.c.bf16 %v1163, %v1162
      %v1186 = vpack.c.bf16 %v1165, %v1164
      %v1187 = vpack.c.bf16 %v1167, %v1166
      %v1188 = vpack.c.bf16 %v1169, %v1168
      %v1189 = vpack.c.bf16 %v1171, %v1170
      %v1190 = vpack.c.bf16 %v1173, %v1172
      %v1191 = vpack.c.bf16 %v1175, %v1174
      %v1208 = vunpack.c.l.b16 %v1176
      %v1209 = vunpack.c.h.b16 %v1176
      %v1210 = vunpack.c.l.b16 %v1177
      %v1211 = vunpack.c.h.b16 %v1177
      %v1212 = vunpack.c.l.b16 %v1178
      %v1213 = vunpack.c.h.b16 %v1178
      %v1214 = vunpack.c.l.b16 %v1179
      %v1215 = vunpack.c.h.b16 %v1179
      %v1216 = vunpack.c.l.b16 %v1180
      %v1217 = vunpack.c.h.b16 %v1180
      %v1218 = vunpack.c.l.b16 %v1181
      %v1219 = vunpack.c.h.b16 %v1181
      %v1220 = vunpack.c.l.b16 %v1182
      %v1221 = vunpack.c.h.b16 %v1182
      %v1222 = vunpack.c.l.b16 %v1183
      %v1223 = vunpack.c.h.b16 %v1183
      %v1224 = vunpack.c.l.b16 %v1184
      %v1225 = vunpack.c.h.b16 %v1184
      %v1226 = vunpack.c.l.b16 %v1185
      %v1227 = vunpack.c.h.b16 %v1185
      %v1228 = vunpack.c.l.b16 %v1186
      %v1229 = vunpack.c.h.b16 %v1186
      %v1230 = vunpack.c.l.b16 %v1187
      %v1231 = vunpack.c.h.b16 %v1187
      %v1232 = vunpack.c.l.b16 %v1188
      %v1233 = vunpack.c.h.b16 %v1188
      %v1234 = vunpack.c.l.b16 %v1189
      %v1235 = vunpack.c.h.b16 %v1189
      %v1236 = vunpack.c.l.b16 %v1190
      %v1237 = vunpack.c.h.b16 %v1190
      %v1238 = vunpack.c.l.b16 %v1191
      %v1239 = vunpack.c.h.b16 %v1191
      %v1240 = vpack.c.b16 %v1208, %v1208
      %v1241 = vpack.c.b16 %v1209, %v1209
      %v1242 = vpack.c.b16 %v1210, %v1210
      %v1243 = vpack.c.b16 %v1211, %v1211
      %v1244 = vpack.c.b16 %v1212, %v1212
      %v1245 = vpack.c.b16 %v1213, %v1213
      %v1246 = vpack.c.b16 %v1214, %v1214
      %v1247 = vpack.c.b16 %v1215, %v1215
      %v1248 = vpack.c.b16 %v1216, %v1216
      %v1249 = vpack.c.b16 %v1217, %v1217
      %v1250 = vpack.c.b16 %v1218, %v1218
      %v1251 = vpack.c.b16 %v1219, %v1219
      %v1252 = vpack.c.b16 %v1220, %v1220
      %v1253 = vpack.c.b16 %v1221, %v1221
      %v1254 = vpack.c.b16 %v1222, %v1222
      %v1255 = vpack.c.b16 %v1223, %v1223
      %v1256 = vpack.c.b16 %v1224, %v1224
      %v1257 = vpack.c.b16 %v1225, %v1225
      %v1258 = vpack.c.b16 %v1226, %v1226
      %v1259 = vpack.c.b16 %v1227, %v1227
      %v1260 = vpack.c.b16 %v1228, %v1228
      %v1261 = vpack.c.b16 %v1229, %v1229
      %v1262 = vpack.c.b16 %v1230, %v1230
      %v1263 = vpack.c.b16 %v1231, %v1231
      %v1264 = vpack.c.b16 %v1232, %v1232
      %v1265 = vpack.c.b16 %v1233, %v1233
      %v1266 = vpack.c.b16 %v1234, %v1234
      %v1267 = vpack.c.b16 %v1235, %v1235
      %v1268 = vpack.c.b16 %v1236, %v1236
      %v1269 = vpack.c.b16 %v1237, %v1237
      %v1270 = vpack.c.b16 %v1238, %v1238
      %v1271 = vpack.c.b16 %v1239, %v1239
      %vm1304 = vcmask 125952
      %1305 = vst.msk [vmem:[%s278] sm:$0xf] %vm1304, %v1240
      %1306 = vst.msk [vmem:[%s278 + $0x4] sm:$0xf] %vm1304, %v1241
      %1307 = vst.msk [vmem:[%s278 + $0x8] sm:$0xf] %vm1304, %v1242
      %1308 = vst.msk [vmem:[%s278 + $0xc] sm:$0xf] %vm1304, %v1243
      %1309 = vst.msk [vmem:[%s278 + $0x10] sm:$0xf] %vm1304, %v1244
      %1310 = vst.msk [vmem:[%s278 + $0x14] sm:$0xf] %vm1304, %v1245
      %1311 = vst.msk [vmem:[%s278 + $0x18] sm:$0xf] %vm1304, %v1246
      %1312 = vst.msk [vmem:[%s278 + $0x1c] sm:$0xf] %vm1304, %v1247
      %1313 = vst.msk [vmem:[%s278 + $0x20] sm:$0xf] %vm1304, %v1248
      %1314 = vst.msk [vmem:[%s278 + $0x24] sm:$0xf] %vm1304, %v1249
      %1315 = vst.msk [vmem:[%s278 + $0x28] sm:$0xf] %vm1304, %v1250
      %1316 = vst.msk [vmem:[%s278 + $0x2c] sm:$0xf] %vm1304, %v1251
      %1317 = vst.msk [vmem:[%s278 + $0x30] sm:$0xf] %vm1304, %v1252
      %1318 = vst.msk [vmem:[%s278 + $0x34] sm:$0xf] %vm1304, %v1253
      %1319 = vst.msk [vmem:[%s278 + $0x38] sm:$0xf] %vm1304, %v1254
      %1320 = vst.msk [vmem:[%s278 + $0x3c] sm:$0xf] %vm1304, %v1255
      %1321 = vst.msk [vmem:[%s278 + $0x40] sm:$0xf] %vm1304, %v1256
      %1322 = vst.msk [vmem:[%s278 + $0x44] sm:$0xf] %vm1304, %v1257
      %1323 = vst.msk [vmem:[%s278 + $0x48] sm:$0xf] %vm1304, %v1258
      %1324 = vst.msk [vmem:[%s278 + $0x4c] sm:$0xf] %vm1304, %v1259
      %1325 = vst.msk [vmem:[%s278 + $0x50] sm:$0xf] %vm1304, %v1260
      %1326 = vst.msk [vmem:[%s278 + $0x54] sm:$0xf] %vm1304, %v1261
      %1327 = vst.msk [vmem:[%s278 + $0x58] sm:$0xf] %vm1304, %v1262
      %1328 = vst.msk [vmem:[%s278 + $0x5c] sm:$0xf] %vm1304, %v1263
      %1329 = vst.msk [vmem:[%s278 + $0x60] sm:$0xf] %vm1304, %v1264
      %1330 = vst.msk [vmem:[%s278 + $0x64] sm:$0xf] %vm1304, %v1265
      %1331 = vst.msk [vmem:[%s278 + $0x68] sm:$0xf] %vm1304, %v1266
      %1332 = vst.msk [vmem:[%s278 + $0x6c] sm:$0xf] %vm1304, %v1267
      %1333 = vst.msk [vmem:[%s278 + $0x70] sm:$0xf] %vm1304, %v1268
      %1334 = vst.msk [vmem:[%s278 + $0x74] sm:$0xf] %vm1304, %v1269
      %1335 = vst.msk [vmem:[%s278 + $0x78] sm:$0xf] %vm1304, %v1270
      %1336 = vst.msk [vmem:[%s278 + $0x7c] sm:$0xf] %vm1304, %v1271
      %s1337 = smul.u32 32, %s17
      %p1338 = scmp.lt.s32.totalorder %s1337, 63
      %s1339 = scalar_select %p1338, %s1337, 63
      %s1340 = smul.addr %s1339, 4
      %s1341 = scalar_lea.vmem %s6, %s1340
      // Predicated region
      $region45: #{forward_pruned.8} parent=43 // pred_check
        %p1342 = pneg %p171
      $region46: #{forward_pruned.8} parent=43 // pred_check_branch
        %1344 = sbr.rel (%p1342) target = $region48
      $region47: #{forward_pruned.8} parent=43 // pred_region
        %s1345 = smul.u32 32, %s17
      $region48: #{forward_pruned.8} parent=43 // pred_fallthru
        _
    $region44: #{forward_pruned.8} parent=5 // pred_fallthru
      _
    %p1346 = scmp.le.s32.totalorder 2, %s12
    // Predicated region
    $region49: #{forward_pruned.8} parent=5 // pred_check
      %p1347 = pneg %p1346
    $region50: #{forward_pruned.8} parent=5 // pred_check_branch
      %1349 = sbr.rel (%p1347) target = $region52
    $region51: #{forward_pruned.8} parent=5 // pred_region
      %s1350 = ssub.s32 %s12, 2
      // Predicated region
      $region53: #{forward_pruned.8} parent=51 // pred_check
        %p1351 = pneg %p177
      $region54: #{forward_pruned.8} parent=51 // pred_check_branch
        %1353 = sbr.rel (%p1351) target = $region56
      $region55: #{forward_pruned.8} parent=51 // pred_region
        %s1354 = smul.u32 32, %s18
        %p1355 = scmp.lt.s32.totalorder %s1354, 63
        %s1356 = scalar_select %p1355, %s1354, 63
        %s1357 = smul.addr %s1356, 4
        %s1358 = scalar_lea.vmem %s6, %s1357
      $region56: #{forward_pruned.8} parent=51 // pred_fallthru
        _
    $region52: #{forward_pruned.8} parent=5 // pred_fallthru
      _
  $region6: #{forward_pruned.8} parent=0 // loop_footer
    %s16 = sadd.s32 1, %s12
  $region7: #{forward_pruned.8} parent=0 // loop_footer_branch
    %11 = sbr.rel target = $region3
  $region8: #{forward_pruned.8} parent=0 // loop_exit
    _

// kernel: forward_pruned.9
$region0: #{forward_pruned.9}
  #allocation0 [shape = 'u32[]', space=smem, size = 0x4, offset = 0x4, fixed_abs, tag = 'smem constant byte address 0x4 - core index']
  #allocation1 [shape = 'u32[144,128]{1,0:T(1,128)}', space=vmem, size = 0x12000, scoped, tag = 'internal scratch']
  %s0 = inlined_call_operand.vmem [shape: bf16[128,144], index: 0, kind: input, shape index: {}]
  %s1 = inlined_call_operand.vmem [shape: bf16[144,32], index: 1, kind: input, shape index: {}]
  %s2 = inlined_call_operand.vmem [shape: f32[1,32], index: 2, kind: input, shape index: {}]
  %s3 = inlined_call_operand.vmem [shape: f32[1,32], index: 3, kind: input, shape index: {}]
  %s4 = inlined_call_operand.vmem [shape: bf16[128,32], index: 4, kind: output, shape index: {}]
  %s5 = sld [smem:[#allocation0]]
  $region26: #{forward_pruned.9} parent=0
    _
  %s7 = ssub.s32 1, %s5
  %s8 = scalar_select 0, %s7, %s5
  // Predicated region
  $region2: #{forward_pruned.9} parent=0 // pred_check
    _
  $region3: #{forward_pruned.9} parent=0 // pred_check_branch
    %10 = sbr.rel (0) target = $region5
  $region4: #{forward_pruned.9} parent=0 // pred_region
    _
  $region5: #{forward_pruned.9} parent=0 // pred_fallthru
    _
  // Predicated region
  $region6: #{forward_pruned.9} parent=0 // pred_check
    _
  $region7: #{forward_pruned.9} parent=0 // pred_check_branch
    %12 = sbr.rel (0) target = $region9
  $region8: #{forward_pruned.9} parent=0 // pred_region
    _
  $region9: #{forward_pruned.9} parent=0 // pred_fallthru
    _
  // Predicated region
  $region10: #{forward_pruned.9} parent=0 // pred_check
    _
  $region11: #{forward_pruned.9} parent=0 // pred_check_branch
    %14 = sbr.rel (0) target = $region13
  $region12: #{forward_pruned.9} parent=0 // pred_region
    _
  $region13: #{forward_pruned.9} parent=0 // pred_fallthru
    _
  // Predicated region
  $region14: #{forward_pruned.9} parent=0 // pred_check
    _
  $region15: #{forward_pruned.9} parent=0 // pred_check_branch
    %16 = sbr.rel (0) target = $region17
  $region16: #{forward_pruned.9} parent=0 // pred_region
    _
  $region17: #{forward_pruned.9} parent=0 // pred_fallthru
    _
  %v18 = vld [vmem:[%s0] sm:$0xff]
  %v19 = vld [vmem:[%s0 + $0x8] sm:$0xff]
  %v20 = vld [vmem:[%s0 + $0x10] sm:$0xff]
  %v21 = vld [vmem:[%s0 + $0x18] sm:$0xff]
  %v22 = vld [vmem:[%s0 + $0x20] sm:$0xff]
  %v23 = vld [vmem:[%s0 + $0x28] sm:$0xff]
  %v24 = vld [vmem:[%s0 + $0x30] sm:$0xff]
  %v25 = vld [vmem:[%s0 + $0x38] sm:$0xff]
  %v26 = vld [vmem:[%s0 + $0x40] sm:$0xff]
  %v27 = vld [vmem:[%s0 + $0x48] sm:$0xff]
  %v28 = vld [vmem:[%s0 + $0x50] sm:$0xff]
  %v29 = vld [vmem:[%s0 + $0x58] sm:$0xff]
  %v30 = vld [vmem:[%s0 + $0x60] sm:$0xff]
  %v31 = vld [vmem:[%s0 + $0x68] sm:$0xff]
  %v32 = vld [vmem:[%s0 + $0x70] sm:$0xff]
  %v33 = vld [vmem:[%s0 + $0x78] sm:$0xff]
  %v34 = vld [vmem:[%s1] sm:$0xf]
  %v35 = vld [vmem:[%s1 + $0x4] sm:$0xf]
  %v36 = vld [vmem:[%s1 + $0x8] sm:$0xf]
  %v37 = vld [vmem:[%s1 + $0xc] sm:$0xf]
  %v38 = vld [vmem:[%s1 + $0x10] sm:$0xf]
  %v39 = vld [vmem:[%s1 + $0x14] sm:$0xf]
  %v40 = vld [vmem:[%s1 + $0x18] sm:$0xf]
  %v41 = vld [vmem:[%s1 + $0x1c] sm:$0xf]
  %v42 = vld [vmem:[%s1 + $0x20] sm:$0xf]
  %v43 = vld [vmem:[%s1 + $0x24] sm:$0xf]
  %v44 = vld [vmem:[%s1 + $0x28] sm:$0xf]
  %v45 = vld [vmem:[%s1 + $0x2c] sm:$0xf]
  %v46 = vld [vmem:[%s1 + $0x30] sm:$0xf]
  %v47 = vld [vmem:[%s1 + $0x34] sm:$0xf]
  %v48 = vld [vmem:[%s1 + $0x38] sm:$0xf]
  %v49 = vld [vmem:[%s1 + $0x3c] sm:$0xf]
  %v50 = vld [vmem:[%s1 + $0x40] sm:$0xf]
  %v51 = vld [vmem:[%s1 + $0x44] sm:$0xf]
  %v68 = vunpack.c.l.b16 %v18
  %v69 = vunpack.c.h.b16 %v18
  %v70 = vunpack.c.l.b16 %v19
  %v71 = vunpack.c.h.b16 %v19
  %v72 = vunpack.c.l.b16 %v20
  %v73 = vunpack.c.h.b16 %v20
  %v74 = vunpack.c.l.b16 %v21
  %v75 = vunpack.c.h.b16 %v21
  %v76 = vunpack.c.l.b16 %v22
  %v77 = vunpack.c.h.b16 %v22
  %v78 = vunpack.c.l.b16 %v23
  %v79 = vunpack.c.h.b16 %v23
  %v80 = vunpack.c.l.b16 %v24
  %v81 = vunpack.c.h.b16 %v24
  %v82 = vunpack.c.l.b16 %v25
  %v83 = vunpack.c.h.b16 %v25
  %v84 = vunpack.c.l.b16 %v26
  %v85 = vunpack.c.h.b16 %v26
  %v86 = vunpack.c.l.b16 %v27
  %v87 = vunpack.c.h.b16 %v27
  %v88 = vunpack.c.l.b16 %v28
  %v89 = vunpack.c.h.b16 %v28
  %v90 = vunpack.c.l.b16 %v29
  %v91 = vunpack.c.h.b16 %v29
  %v92 = vunpack.c.l.b16 %v30
  %v93 = vunpack.c.h.b16 %v30
  %v94 = vunpack.c.l.b16 %v31
  %v95 = vunpack.c.h.b16 %v31
  %v96 = vunpack.c.l.b16 %v32
  %v97 = vunpack.c.h.b16 %v32
  %v98 = vunpack.c.l.b16 %v33
  %v99 = vunpack.c.h.b16 %v33
  %v100 = vpack.c.b16 %v70, %v68
  %v101 = vpack.c.b16 %v71, %v69
  %v102 = vpack.c.b16 %v74, %v72
  %v103 = vpack.c.b16 %v75, %v73
  %v104 = vpack.c.b16 %v78, %v76
  %v105 = vpack.c.b16 %v79, %v77
  %v106 = vpack.c.b16 %v82, %v80
  %v107 = vpack.c.b16 %v83, %v81
  %v108 = vpack.c.b16 %v86, %v84
  %v109 = vpack.c.b16 %v87, %v85
  %v110 = vpack.c.b16 %v90, %v88
  %v111 = vpack.c.b16 %v91, %v89
  %v112 = vpack.c.b16 %v94, %v92
  %v113 = vpack.c.b16 %v95, %v93
  %v114 = vpack.c.b16 %v98, %v96
  %v115 = vpack.c.b16 %v99, %v97
  %v142 = vunpack.c.l.b16 %v34
  %v143 = vunpack.c.l.b16 %v35
  %v144 = vunpack.c.l.b16 %v36
  %v145 = vunpack.c.l.b16 %v37
  %v146 = vunpack.c.l.b16 %v38
  %v147 = vunpack.c.l.b16 %v39
  %v148 = vunpack.c.l.b16 %v40
  %v149 = vunpack.c.l.b16 %v41
  %v150 = vunpack.c.l.b16 %v42
  %v151 = vunpack.c.l.b16 %v43
  %v152 = vunpack.c.l.b16 %v44
  %v153 = vunpack.c.l.b16 %v45
  %v154 = vunpack.c.l.b16 %v46
  %v155 = vunpack.c.l.b16 %v47
  %v156 = vunpack.c.l.b16 %v48
  %v157 = vunpack.c.l.b16 %v49
  %v158 = vunpack.c.l.b16 %v50
  %v159 = vunpack.c.l.b16 %v51
  %v160 = vpack.c.b16 %v143, %v142
  %v161 = vpack.c.b16 %v145, %v144
  %v162 = vpack.c.b16 %v147, %v146
  %v163 = vpack.c.b16 %v149, %v148
  %v164 = vpack.c.b16 %v151, %v150
  %v165 = vpack.c.b16 %v153, %v152
  %v166 = vpack.c.b16 %v155, %v154
  %v167 = vpack.c.b16 %v157, %v156
  %v168 = vpack.c.b16 %v159, %v158
  %vm178 = vcmask 130048
  %v180 = vsel %vm178, %v101, 0
  %v183 = vsel %vm178, %v103, 0
  %v186 = vsel %vm178, %v105, 0
  %v189 = vsel %vm178, %v107, 0
  %v192 = vsel %vm178, %v109, 0
  %v195 = vsel %vm178, %v111, 0
  %v198 = vsel %vm178, %v113, 0
  %v201 = vsel %vm178, %v115, 0
  %203 = vmatprep.subr.bf16.mxu0 0
  %204 = vmatpush1.bf16.msra.mxu0 %v160
  %205 = vmatprep.subr.bf16.mxu0 0
  %206 = vmatpush1.bf16.msra.mxu0 %v161
  %207 = vmatprep.subr.bf16.mxu0 0
  %208 = vmatpush1.bf16.msra.mxu0 %v162
  %209 = vmatprep.subr.bf16.mxu0 0
  %210 = vmatpush1.bf16.msra.mxu0 %v163
  %211 = vmatprep.subr.bf16.mxu0 0
  %212 = vmatpush1.bf16.msra.mxu0 %v164
  %213 = vmatprep.subr.bf16.mxu0 0
  %214 = vmatpush1.bf16.msra.mxu0 %v165
  %215 = vmatprep.subr.bf16.mxu0 0
  %216 = vmatpush1.bf16.msra.mxu0 %v166
  %217 = vmatprep.subr.bf16.mxu0 0
  %218 = vmatpush1.bf16.msra.mxu0 %v167
  %219 = vmatprep.subr.bf16.mxu0 0
  %220 = vmatpush1.bf16.msra.mxu0 %v168
  %221 = vmatprep.subr.bf16.mxu0 0
  %222 = vmatpush1.bf16.msra.mxu0 0
  %223 = vmatprep.subr.bf16.mxu0 0
  %224 = vmatpush1.bf16.msra.mxu0 0
  %225 = vmatprep.subr.bf16.mxu0 0
  %226 = vmatpush1.bf16.msra.mxu0 0
  %227 = vmatprep.subr.bf16.mxu0 0
  %228 = vmatpush1.bf16.msra.mxu0 0
  %229 = vmatprep.subr.bf16.mxu0 0
  %230 = vmatpush1.bf16.msra.mxu0 0
  %231 = vmatprep.subr.bf16.mxu0 0
  %232 = vmatpush1.bf16.msra.mxu0 0
  %233 = vmatprep.subr.bf16.mxu0 0
  %234 = vmatpush1.bf16.msra.mxu0 0
  %235 = vmatprep.mubr.bf16.mxu0 %v180
  %236 = vmatmul.mubr.bf16.gmra.mrb[0].mxu0 %v100
  %v237 = vpop.f32.mrb[0].mxu0
  %v238 = vadd.f32 0.0, %v237
  %v239 = vpop.f32.mrb[0].mxu0
  %v240 = vpop.f32.mrb[0].mxu0
  %v241 = vadd.f32 0.0, %v240
  %v242 = vpop.f32.mrb[0].mxu0
  %243 = vmatprep.mubr.bf16.mxu0 %v183
  %244 = vmatmul.mubr.bf16.gmra.mrb[0].mxu0 %v102
  %v245 = vpop.f32.mrb[0].mxu0
  %v246 = vadd.f32 0.0, %v245
  %v247 = vpop.f32.mrb[0].mxu0
  %v248 = vpop.f32.mrb[0].mxu0
  %v249 = vadd.f32 0.0, %v248
  %v250 = vpop.f32.mrb[0].mxu0
  %251 = vmatprep.mubr.bf16.mxu0 %v186
  %252 = vmatmul.mubr.bf16.gmra.mrb[0].mxu0 %v104
  %v253 = vpop.f32.mrb[0].mxu0
  %v254 = vadd.f32 0.0, %v253
  %v255 = vpop.f32.mrb[0].mxu0
  %v256 = vpop.f32.mrb[0].mxu0
  %v257 = vadd.f32 0.0, %v256
  %v258 = vpop.f32.mrb[0].mxu0
  %259 = vmatprep.mubr.bf16.mxu0 %v189
  %260 = vmatmul.mubr.bf16.gmra.mrb[0].mxu0 %v106
  %v261 = vpop.f32.mrb[0].mxu0
  %v262 = vadd.f32 0.0, %v261
  %v263 = vpop.f32.mrb[0].mxu0
  %v264 = vpop.f32.mrb[0].mxu0
  %v265 = vadd.f32 0.0, %v264
  %v266 = vpop.f32.mrb[0].mxu0
  %267 = vmatprep.mubr.bf16.mxu0 %v192
  %268 = vmatmul.mubr.bf16.gmra.mrb[0].mxu0 %v108
  %v269 = vpop.f32.mrb[0].mxu0
  %v270 = vadd.f32 0.0, %v269
  %v271 = vpop.f32.mrb[0].mxu0
  %v272 = vpop.f32.mrb[0].mxu0
  %v273 = vadd.f32 0.0, %v272
  %v274 = vpop.f32.mrb[0].mxu0
  %275 = vmatprep.mubr.bf16.mxu0 %v195
  %276 = vmatmul.mubr.bf16.gmra.mrb[0].mxu0 %v110
  %v277 = vpop.f32.mrb[0].mxu0
  %v278 = vadd.f32 0.0, %v277
  %v279 = vpop.f32.mrb[0].mxu0
  %v280 = vpop.f32.mrb[0].mxu0
  %v281 = vadd.f32 0.0, %v280
  %v282 = vpop.f32.mrb[0].mxu0
  %283 = vmatprep.mubr.bf16.mxu0 %v198
  %284 = vmatmul.mubr.bf16.gmra.mrb[0].mxu0 %v112
  %v285 = vpop.f32.mrb[0].mxu0
  %v286 = vadd.f32 0.0, %v285
  %v287 = vpop.f32.mrb[0].mxu0
  %v288 = vpop.f32.mrb[0].mxu0
  %v289 = vadd.f32 0.0, %v288
  %v290 = vpop.f32.mrb[0].mxu0
  %291 = vmatprep.mubr.bf16.mxu0 %v201
  %292 = vmatmul.mubr.bf16.gmra.mrb[0].mxu0 %v114
  %v293 = vpop.f32.mrb[0].mxu0
  %v294 = vadd.f32 0.0, %v293
  %v295 = vpop.f32.mrb[0].mxu0
  %v296 = vpop.f32.mrb[0].mxu0
  %v297 = vadd.f32 0.0, %v296
  %v298 = vpop.f32.mrb[0].mxu0
  %299 = vdwg.mxu0
  %v300 = vld [vmem:[%s2] sm:$0x1]
  %v302 = vlaneseq
  %v303 = vshrl.u32 %v302, 7
  %v304 = vsub.s32 0, %v303
  %v305 = vrot.slane %v300, %v304
  %v307 = vmul.f32 %v238, %v305
  %v308 = vmul.f32 %v241, %v305
  %v309 = vmul.f32 %v246, %v305
  %v310 = vmul.f32 %v249, %v305
  %v311 = vmul.f32 %v254, %v305
  %v312 = vmul.f32 %v257, %v305
  %v313 = vmul.f32 %v262, %v305
  %v314 = vmul.f32 %v265, %v305
  %v315 = vmul.f32 %v270, %v305
  %v316 = vmul.f32 %v273, %v305
  %v317 = vmul.f32 %v278, %v305
  %v318 = vmul.f32 %v281, %v305
  %v319 = vmul.f32 %v286, %v305
  %v320 = vmul.f32 %v289, %v305
  %v321 = vmul.f32 %v294, %v305
  %v322 = vmul.f32 %v297, %v305
  %v323 = vld [vmem:[%s3] sm:$0x1]
  %v325 = vlaneseq
  %v326 = vshrl.u32 %v325, 7
  %v327 = vsub.s32 0, %v326
  %v328 = vrot.slane %v323, %v327
  %v330 = vadd.f32 %v307, %v328
  %v331 = vadd.f32 %v308, %v328
  %v332 = vadd.f32 %v309, %v328
  %v333 = vadd.f32 %v310, %v328
  %v334 = vadd.f32 %v311, %v328
  %v335 = vadd.f32 %v312, %v328
  %v336 = vadd.f32 %v313, %v328
  %v337 = vadd.f32 %v314, %v328
  %v338 = vadd.f32 %v315, %v328
  %v339 = vadd.f32 %v316, %v328
  %v340 = vadd.f32 %v317, %v328
  %v341 = vadd.f32 %v318, %v328
  %v342 = vadd.f32 %v319, %v328
  %v343 = vadd.f32 %v320, %v328
  %v344 = vadd.f32 %v321, %v328
  %v345 = vadd.f32 %v322, %v328
  %v346 = vmax.f32 %v330, 0.0
  %v347 = vmax.f32 %v331, 0.0
  %v348 = vmax.f32 %v332, 0.0
  %v349 = vmax.f32 %v333, 0.0
  %v350 = vmax.f32 %v334, 0.0
  %v351 = vmax.f32 %v335, 0.0
  %v352 = vmax.f32 %v336, 0.0
  %v353 = vmax.f32 %v337, 0.0
  %v354 = vmax.f32 %v338, 0.0
  %v355 = vmax.f32 %v339, 0.0
  %v356 = vmax.f32 %v340, 0.0
  %v357 = vmax.f32 %v341, 0.0
  %v358 = vmax.f32 %v342, 0.0
  %v359 = vmax.f32 %v343, 0.0
  %v360 = vmax.f32 %v344, 0.0
  %v361 = vmax.f32 %v345, 0.0
  %v362 = vpack.c.bf16 %v347, %v346
  %v363 = vpack.c.bf16 %v349, %v348
  %v364 = vpack.c.bf16 %v351, %v350
  %v365 = vpack.c.bf16 %v353, %v352
  %v366 = vpack.c.bf16 %v355, %v354
  %v367 = vpack.c.bf16 %v357, %v356
  %v368 = vpack.c.bf16 %v359, %v358
  %v369 = vpack.c.bf16 %v361, %v360
  %v378 = vunpack.c.l.b16 %v362
  %v379 = vunpack.c.h.b16 %v362
  %v380 = vunpack.c.l.b16 %v363
  %v381 = vunpack.c.h.b16 %v363
  %v382 = vunpack.c.l.b16 %v364
  %v383 = vunpack.c.h.b16 %v364
  %v384 = vunpack.c.l.b16 %v365
  %v385 = vunpack.c.h.b16 %v365
  %v386 = vunpack.c.l.b16 %v366
  %v387 = vunpack.c.h.b16 %v366
  %v388 = vunpack.c.l.b16 %v367
  %v389 = vunpack.c.h.b16 %v367
  %v390 = vunpack.c.l.b16 %v368
  %v391 = vunpack.c.h.b16 %v368
  %v392 = vunpack.c.l.b16 %v369
  %v393 = vunpack.c.h.b16 %v369
  %v394 = vpack.c.b16 %v378, %v378
  %v395 = vpack.c.b16 %v379, %v379
  %v396 = vpack.c.b16 %v380, %v380
  %v397 = vpack.c.b16 %v381, %v381
  %v398 = vpack.c.b16 %v382, %v382
  %v399 = vpack.c.b16 %v383, %v383
  %v400 = vpack.c.b16 %v384, %v384
  %v401 = vpack.c.b16 %v385, %v385
  %v402 = vpack.c.b16 %v386, %v386
  %v403 = vpack.c.b16 %v387, %v387
  %v404 = vpack.c.b16 %v388, %v388
  %v405 = vpack.c.b16 %v389, %v389
  %v406 = vpack.c.b16 %v390, %v390
  %v407 = vpack.c.b16 %v391, %v391
  %v408 = vpack.c.b16 %v392, %v392
  %v409 = vpack.c.b16 %v393, %v393
  %vm426 = vcmask 257024
  %427 = vst.msk [vmem:[%s4] sm:$0xf] %vm426, %v394
  %428 = vst.msk [vmem:[%s4 + $0x4] sm:$0xf] %vm426, %v395
  %429 = vst.msk [vmem:[%s4 + $0x8] sm:$0xf] %vm426, %v396
  %430 = vst.msk [vmem:[%s4 + $0xc] sm:$0xf] %vm426, %v397
  %431 = vst.msk [vmem:[%s4 + $0x10] sm:$0xf] %vm426, %v398
  %432 = vst.msk [vmem:[%s4 + $0x14] sm:$0xf] %vm426, %v399
  %433 = vst.msk [vmem:[%s4 + $0x18] sm:$0xf] %vm426, %v400
  %434 = vst.msk [vmem:[%s4 + $0x1c] sm:$0xf] %vm426, %v401
  %435 = vst.msk [vmem:[%s4 + $0x20] sm:$0xf] %vm426, %v402
  %436 = vst.msk [vmem:[%s4 + $0x24] sm:$0xf] %vm426, %v403
  %437 = vst.msk [vmem:[%s4 + $0x28] sm:$0xf] %vm426, %v404
  %438 = vst.msk [vmem:[%s4 + $0x2c] sm:$0xf] %vm426, %v405
  %439 = vst.msk [vmem:[%s4 + $0x30] sm:$0xf] %vm426, %v406
  %440 = vst.msk [vmem:[%s4 + $0x34] sm:$0xf] %vm426, %v407
  %441 = vst.msk [vmem:[%s4 + $0x38] sm:$0xf] %vm426, %v408
  %442 = vst.msk [vmem:[%s4 + $0x3c] sm:$0xf] %vm426, %v409
  // Predicated region
  $region18: #{forward_pruned.9} parent=0 // pred_check
    _
  $region19: #{forward_pruned.9} parent=0 // pred_check_branch
    %444 = sbr.rel (0) target = $region21
  $region20: #{forward_pruned.9} parent=0 // pred_region
    _
  $region21: #{forward_pruned.9} parent=0 // pred_fallthru
    _
  // Predicated region
  $region22: #{forward_pruned.9} parent=0 // pred_check
    _
  $region23: #{forward_pruned.9} parent=0 // pred_check_branch
    %446 = sbr.rel (0) target = $region25
  $region24: #{forward_pruned.9} parent=0 // pred_region
    _
  $region25: #{forward_pruned.9} parent=0 // pred_fallthru
    _

// kernel: forward_pruned.11
$region0: #{forward_pruned.11}
  #allocation0 [shape = 'u32[]', space=smem, size = 0x4, offset = 0x4, fixed_abs, tag = 'smem constant byte address 0x4 - core index']
  #allocation1 [shape = 'u32[144,128]{1,0:T(1,128)}', space=vmem, size = 0x12000, scoped, tag = 'internal scratch']
  %s0 = inlined_call_operand.vmem [shape: f32[2,64,32], index: 0, kind: input, shape index: {}]
  %s1 = inlined_call_operand.vmem [shape: f32[1,1,32], index: 1, kind: input, shape index: {}]
  %s2 = inlined_call_operand.vmem [shape: f32[1,1,32], index: 2, kind: input, shape index: {}]
  %s3 = inlined_call_operand.vmem [shape: f32[32,10], index: 3, kind: input, shape index: {}]
  %s4 = inlined_call_operand.vmem [shape: f32[1,10], index: 4, kind: input, shape index: {}]
  %s5 = inlined_call_operand.hbm [shape: f32[2,10], index: 5, kind: output, shape index: {}]
  %s6 = sld [smem:[#allocation0]]
  $region30: #{forward_pruned.11} parent=0
    _
  %s8 = ssub.s32 1, %s6
  %s9 = scalar_select 0, %s8, %s6
  $region1: #{forward_pruned.11} parent=0
    #allocation2 [shape = 'u8[1024]{0}', space=vmem, size = 0x400, scoped, tag = 'output window, operand 0, single buffered']
    #allocation3 [shape = 's32[1]{0}', space=sflag, size = 0x4, scoped, tag = 'scoped memory for forward_pruned.11']
    %10 = vsyncpa [#allocation3], 0
    // Predicated region
    $region2: #{forward_pruned.11} parent=1 // pred_check
      _
    $region3: #{forward_pruned.11} parent=1 // pred_check_branch
      %12 = sbr.rel (0) target = $region5
    $region4: #{forward_pruned.11} parent=1 // pred_region
      _
    $region5: #{forward_pruned.11} parent=1 // pred_fallthru
      _
    // Predicated region
    $region6: #{forward_pruned.11} parent=1 // pred_check
      _
    $region7: #{forward_pruned.11} parent=1 // pred_check_branch
      %14 = sbr.rel (0) target = $region9
    $region8: #{forward_pruned.11} parent=1 // pred_region
      _
    $region9: #{forward_pruned.11} parent=1 // pred_fallthru
      _
    // Predicated region
    $region10: #{forward_pruned.11} parent=1 // pred_check
      _
    $region11: #{forward_pruned.11} parent=1 // pred_check_branch
      %16 = sbr.rel (0) target = $region13
    $region12: #{forward_pruned.11} parent=1 // pred_region
      _
    $region13: #{forward_pruned.11} parent=1 // pred_fallthru
      _
    // Predicated region
    $region14: #{forward_pruned.11} parent=1 // pred_check
      _
    $region15: #{forward_pruned.11} parent=1 // pred_check_branch
      %18 = sbr.rel (0) target = $region17
    $region16: #{forward_pruned.11} parent=1 // pred_region
      _
    $region17: #{forward_pruned.11} parent=1 // pred_fallthru
      _
    // Predicated region
    $region18: #{forward_pruned.11} parent=1 // pred_check
      _
    $region19: #{forward_pruned.11} parent=1 // pred_check_branch
      %20 = sbr.rel (0) target = $region21
    $region20: #{forward_pruned.11} parent=1 // pred_region
      _
    $region21: #{forward_pruned.11} parent=1 // pred_fallthru
      _
    %v21 = vld [vmem:[%s0] sm:$0xff]
    %v22 = vld [vmem:[%s0 + $0x8] sm:$0xff]
    %v23 = vld [vmem:[%s0 + $0x10] sm:$0xff]
    %v24 = vld [vmem:[%s0 + $0x18] sm:$0xff]
    %v25 = vld [vmem:[%s0 + $0x20] sm:$0xff]
    %v26 = vld [vmem:[%s0 + $0x28] sm:$0xff]
    %v27 = vld [vmem:[%s0 + $0x30] sm:$0xff]
    %v28 = vld [vmem:[%s0 + $0x38] sm:$0xff]
    %v29 = vld [vmem:[%s0 + $0x40] sm:$0xff]
    %v30 = vld [vmem:[%s0 + $0x48] sm:$0xff]
    %v31 = vld [vmem:[%s0 + $0x50] sm:$0xff]
    %v32 = vld [vmem:[%s0 + $0x58] sm:$0xff]
    %v33 = vld [vmem:[%s0 + $0x60] sm:$0xff]
    %v34 = vld [vmem:[%s0 + $0x68] sm:$0xff]
    %v35 = vld [vmem:[%s0 + $0x70] sm:$0xff]
    %v36 = vld [vmem:[%s0 + $0x78] sm:$0xff]
    %v37 = vld [vmem:[%s1] sm:$0x1]
    %v39 = vlaneseq
    %v40 = vshrl.u32 %v39, 7
    %v41 = vsub.s32 0, %v40
    %v42 = vrot.slane %v37, %v41
    %v44 = vmul.f32 %v21, %v42
    %v45 = vmul.f32 %v22, %v42
    %v46 = vmul.f32 %v23, %v42
    %v47 = vmul.f32 %v24, %v42
    %v48 = vmul.f32 %v25, %v42
    %v49 = vmul.f32 %v26, %v42
    %v50 = vmul.f32 %v27, %v42
    %v51 = vmul.f32 %v28, %v42
    %v52 = vmul.f32 %v29, %v42
    %v53 = vmul.f32 %v30, %v42
    %v54 = vmul.f32 %v31, %v42
    %v55 = vmul.f32 %v32, %v42
    %v56 = vmul.f32 %v33, %v42
    %v57 = vmul.f32 %v34, %v42
    %v58 = vmul.f32 %v35, %v42
    %v59 = vmul.f32 %v36, %v42
    %v60 = vld [vmem:[%s2] sm:$0x1]
    %v62 = vlaneseq
    %v63 = vshrl.u32 %v62, 7
    %v64 = vsub.s32 0, %v63
    %v65 = vrot.slane %v60, %v64
    %v67 = vadd.f32 %v44, %v65
    %v68 = vadd.f32 %v45, %v65
    %v69 = vadd.f32 %v46, %v65
    %v70 = vadd.f32 %v47, %v65
    %v71 = vadd.f32 %v48, %v65
    %v72 = vadd.f32 %v49, %v65
    %v73 = vadd.f32 %v50, %v65
    %v74 = vadd.f32 %v51, %v65
    %v75 = vadd.f32 %v52, %v65
    %v76 = vadd.f32 %v53, %v65
    %v77 = vadd.f32 %v54, %v65
    %v78 = vadd.f32 %v55, %v65
    %v79 = vadd.f32 %v56, %v65
    %v80 = vadd.f32 %v57, %v65
    %v81 = vadd.f32 %v58, %v65
    %v82 = vadd.f32 %v59, %v65
    %v83 = vmax.f32 %v67, 0.0
    %v84 = vmax.f32 %v68, 0.0
    %v85 = vmax.f32 %v69, 0.0
    %v86 = vmax.f32 %v70, 0.0
    %v87 = vmax.f32 %v71, 0.0
    %v88 = vmax.f32 %v72, 0.0
    %v89 = vmax.f32 %v73, 0.0
    %v90 = vmax.f32 %v74, 0.0
    %v91 = vmax.f32 %v75, 0.0
    %v92 = vmax.f32 %v76, 0.0
    %v93 = vmax.f32 %v77, 0.0
    %v94 = vmax.f32 %v78, 0.0
    %v95 = vmax.f32 %v79, 0.0
    %v96 = vmax.f32 %v80, 0.0
    %v97 = vmax.f32 %v81, 0.0
    %v98 = vmax.f32 %v82, 0.0
    %vm99 = vcmask 261120
    %v100 = vsel %vm99, %v83, 0.0
    %v101 = vsel %vm99, %v84, 0.0
    %v102 = vadd.f32 %v100, %v101
    %v103 = vsel %vm99, %v85, 0.0
    %v104 = vadd.f32 %v102, %v103
    %v105 = vsel %vm99, %v86, 0.0
    %v106 = vadd.f32 %v104, %v105
    %v107 = vsel %vm99, %v87, 0.0
    %v108 = vadd.f32 %v106, %v107
    %v109 = vsel %vm99, %v88, 0.0
    %v110 = vadd.f32 %v108, %v109
    %v111 = vsel %vm99, %v89, 0.0
    %v112 = vadd.f32 %v110, %v111
    %v113 = vsel %vm99, %v90, 0.0
    %v114 = vadd.f32 %v112, %v113
    %v115 = vrot.slane %v114, 4
    %v116 = vadd.f32 %v114, %v115
    %v117 = vrot.slane %v116, 2
    %v118 = vadd.f32 %v116, %v117
    %v119 = vrot.slane %v118, 1
    %v120 = vadd.f32 %v118, %v119
    %v121 = vsel %vm99, %v91, 0.0
    %v122 = vsel %vm99, %v92, 0.0
    %v123 = vadd.f32 %v121, %v122
    %v124 = vsel %vm99, %v93, 0.0
    %v125 = vadd.f32 %v123, %v124
    %v126 = vsel %vm99, %v94, 0.0
    %v127 = vadd.f32 %v125, %v126
    %v128 = vsel %vm99, %v95, 0.0
    %v129 = vadd.f32 %v127, %v128
    %v130 = vsel %vm99, %v96, 0.0
    %v131 = vadd.f32 %v129, %v130
    %v132 = vsel %vm99, %v97, 0.0
    %v133 = vadd.f32 %v131, %v132
    %v134 = vsel %vm99, %v98, 0.0
    %v135 = vadd.f32 %v133, %v134
    %v136 = vrot.slane %v135, 4
    %v137 = vadd.f32 %v135, %v136
    %v138 = vrot.slane %v137, 2
    %v139 = vadd.f32 %v137, %v138
    %v140 = vrot.slane %v139, 1
    %v141 = vadd.f32 %v139, %v140
    %v142 = vrcp.pop 64.0
    %v143 = vmul.f32 %v120, %v142
    %v144 = vmul.f32 %v141, %v142
    %v145 = vld [vmem:[%s3] sm:$0xff]
    %v146 = vld [vmem:[%s3 + $0x8] sm:$0xff]
    %v147 = vld [vmem:[%s3 + $0x10] sm:$0xff]
    %v148 = vld [vmem:[%s3 + $0x18] sm:$0xff]
    %v149 = vld [vmem:[%s4] sm:$0x1]
    %v151 = vlaneseq
    %v152 = vshrl.u32 %v151, 7
    %v153 = vsub.s32 0, %v152
    %v154 = vrot.slane %v149, %v153
    %vm158 = vcmask 1041409
    %v159 = vsel %vm158, %v144, %v143
    %v160 = vsel %vm99, %v159, 0
    %162 = vmatprep.subr.mxu0 0.0
    %163 = vmatpush1.msra.mxu0 %v145
    %164 = vmatprep.subr.mxu0 0.0
    %165 = vmatpush1.msra.mxu0 %v146
    %166 = vmatprep.subr.mxu0 0.0
    %167 = vmatpush1.msra.mxu0 %v147
    %168 = vmatprep.subr.mxu0 0.0
    %169 = vmatpush1.msra.mxu0 %v148
    %170 = vmatprep.subr.mxu0 0.0
    %171 = vmatpush1.msra.mxu0 0.0
    %172 = vmatprep.subr.mxu0 0.0
    %173 = vmatpush1.msra.mxu0 0.0
    %174 = vmatprep.subr.mxu0 0.0
    %175 = vmatpush1.msra.mxu0 0.0
    %176 = vmatprep.subr.mxu0 0.0
    %177 = vmatpush1.msra.mxu0 0.0
    %178 = vmatprep.subr.mxu0 0.0
    %179 = vmatpush1.msra.mxu0 0.0
    %180 = vmatprep.subr.mxu0 0.0
    %181 = vmatpush1.msra.mxu0 0.0
    %182 = vmatprep.subr.mxu0 0.0
    %183 = vmatpush1.msra.mxu0 0.0
    %184 = vmatprep.subr.mxu0 0.0
    %185 = vmatpush1.msra.mxu0 0.0
    %186 = vmatprep.subr.mxu0 0.0
    %187 = vmatpush1.msra.mxu0 0.0
    %188 = vmatprep.subr.mxu0 0.0
    %189 = vmatpush1.msra.mxu0 0.0
    %190 = vmatprep.subr.mxu0 0.0
    %191 = vmatpush1.msra.mxu0 0.0
    %192 = vmatprep.subr.mxu0 0.0
    %193 = vmatpush1.msra.mxu0 0.0
    %194 = vmatprep.subr.mxu0 0.0
    %195 = vmatpush1.msra.mxu0 0.0
    %196 = vmatprep.subr.mxu0 0.0
    %197 = vmatpush1.msra.mxu0 0.0
    %198 = vmatprep.subr.mxu0 0.0
    %199 = vmatpush1.msra.mxu0 0.0
    %200 = vmatprep.subr.mxu0 0.0
    %201 = vmatpush1.msra.mxu0 0.0
    %202 = vmatprep.subr.mxu0 0.0
    %203 = vmatpush1.msra.mxu0 0.0
    %204 = vmatprep.subr.mxu0 0.0
    %205 = vmatpush1.msra.mxu0 0.0
    %206 = vmatprep.subr.mxu0 0.0
    %207 = vmatpush1.msra.mxu0 0.0
    %208 = vmatprep.subr.mxu0 0.0
    %209 = vmatpush1.msra.mxu0 0.0
    %210 = vmatprep.subr.mxu0 0.0
    %211 = vmatpush1.msra.mxu0 0.0
    %212 = vmatprep.subr.mxu0 0.0
    %213 = vmatpush1.msra.mxu0 0.0
    %214 = vmatprep.subr.mxu0 0.0
    %215 = vmatpush1.msra.mxu0 0.0
    %216 = vmatprep.subr.mxu0 0.0
    %217 = vmatpush1.msra.mxu0 0.0
    %218 = vmatprep.subr.mxu0 0.0
    %219 = vmatpush1.msra.mxu0 0.0
    %220 = vmatprep.subr.mxu0 0.0
    %221 = vmatpush1.msra.mxu0 0.0
    %222 = vmatprep.subr.mxu0 0.0
    %223 = vmatpush1.msra.mxu0 0.0
    %224 = vmatprep.subr.mxu0 0.0
    %225 = vmatpush1.msra.mxu0 0.0
    %226 = vmatprep.mubr.f32.mxu0 0.0
    %227 = vmatmul.mubr.f32.gmra.mrb[0].mxu0 %v160
    %v228 = vpop.f32.mrb[0].mxu0
    %v229 = vadd.f32 %v154, %v228
    %v230 = vpop.f32.mrb[0].mxu0
    %231 = vdwg.mxu0
    %vm232 = vcmask 74752
    %233 = vst.msk [vmem:[#allocation2] sm:$0x3] %vm232, %v229
    // Predicated region
    $region22: #{forward_pruned.11} parent=1 // pred_check
      _
    $region23: #{forward_pruned.11} parent=1 // pred_check_branch
      %235 = sbr.rel (0) target = $region25
    $region24: #{forward_pruned.11} parent=1 // pred_region
      %s237 = ssub.s32 32, 32
      %238 = vsyncadd [#allocation3], %s237
      %s240 = sshll.u32 [#allocation2], 4
      %s241 = int_to_ptr.vmem [resolvable:$true] %s240
      %243 = dma.vmem_to_hbm [thread:$0]  %s241, 32, %s5, [#allocation3]
    $region25: #{forward_pruned.11} parent=1 // pred_fallthru
      _
    // Predicated region
    $region26: #{forward_pruned.11} parent=1 // pred_check
      _
    $region27: #{forward_pruned.11} parent=1 // pred_check_branch
      %245 = sbr.rel (0) target = $region29
    $region28: #{forward_pruned.11} parent=1 // pred_region
      %246 = dma.done [#allocation3], 32
    $region29: #{forward_pruned.11} parent=1 // pred_fallthru
      _
    %247 = vsyncpa [#allocation3], 1

// kernel: forward_pruned.10
$region0: #{forward_pruned.10}
  #allocation0 [shape = 'u32[]', space=smem, size = 0x4, offset = 0x4, fixed_abs, tag = 'smem constant byte address 0x4 - core index']
  #allocation1 [shape = 'u32[144,128]{1,0:T(1,128)}', space=vmem, size = 0x12000, scoped, tag = 'internal scratch']
  %s0 = inlined_call_operand.vmem [shape: bf16[128,288], index: 0, kind: input, shape index: {}]
  %s1 = inlined_call_operand.vmem [shape: bf16[288,32], index: 1, kind: input, shape index: {}]
  %s2 = inlined_call_operand.vmem [shape: bf16[128,16], index: 2, kind: input, shape index: {}]
  %s3 = inlined_call_operand.vmem [shape: bf16[16,32], index: 3, kind: input, shape index: {}]
  %s4 = inlined_call_operand.vmem [shape: f32[128,32], index: 4, kind: output, shape index: {}]
  %s5 = sld [smem:[#allocation0]]
  $region26: #{forward_pruned.10} parent=0
    _
  %s7 = ssub.s32 1, %s5
  %s8 = scalar_select 0, %s7, %s5
  // Predicated region
  $region2: #{forward_pruned.10} parent=0 // pred_check
    _
  $region3: #{forward_pruned.10} parent=0 // pred_check_branch
    %10 = sbr.rel (0) target = $region5
  $region4: #{forward_pruned.10} parent=0 // pred_region
    _
  $region5: #{forward_pruned.10} parent=0 // pred_fallthru
    _
  // Predicated region
  $region6: #{forward_pruned.10} parent=0 // pred_check
    _
  $region7: #{forward_pruned.10} parent=0 // pred_check_branch
    %12 = sbr.rel (0) target = $region9
  $region8: #{forward_pruned.10} parent=0 // pred_region
    _
  $region9: #{forward_pruned.10} parent=0 // pred_fallthru
    _
  // Predicated region
  $region10: #{forward_pruned.10} parent=0 // pred_check
    _
  $region11: #{forward_pruned.10} parent=0 // pred_check_branch
    %14 = sbr.rel (0) target = $region13
  $region12: #{forward_pruned.10} parent=0 // pred_region
    _
  $region13: #{forward_pruned.10} parent=0 // pred_fallthru
    _
  // Predicated region
  $region14: #{forward_pruned.10} parent=0 // pred_check
    _
  $region15: #{forward_pruned.10} parent=0 // pred_check_branch
    %16 = sbr.rel (0) target = $region17
  $region16: #{forward_pruned.10} parent=0 // pred_region
    _
  $region17: #{forward_pruned.10} parent=0 // pred_fallthru
    _
  %v18 = vld [vmem:[%s0] sm:$0xff]
  %v19 = vld [vmem:[%s0 + $0x8] sm:$0xf]
  %v20 = vld [vmem:[%s0 + $0xc] sm:$0xff]
  %v21 = vld [vmem:[%s0 + $0x14] sm:$0xf]
  %v22 = vld [vmem:[%s0 + $0x18] sm:$0xff]
  %v23 = vld [vmem:[%s0 + $0x20] sm:$0xf]
  %v24 = vld [vmem:[%s0 + $0x24] sm:$0xff]
  %v25 = vld [vmem:[%s0 + $0x2c] sm:$0xf]
  %v26 = vld [vmem:[%s0 + $0x30] sm:$0xff]
  %v27 = vld [vmem:[%s0 + $0x38] sm:$0xf]
  %v28 = vld [vmem:[%s0 + $0x3c] sm:$0xff]
  %v29 = vld [vmem:[%s0 + $0x44] sm:$0xf]
  %v30 = vld [vmem:[%s0 + $0x48] sm:$0xff]
  %v31 = vld [vmem:[%s0 + $0x50] sm:$0xf]
  %v32 = vld [vmem:[%s0 + $0x54] sm:$0xff]
  %v33 = vld [vmem:[%s0 + $0x5c] sm:$0xf]
  %v34 = vld [vmem:[%s0 + $0x60] sm:$0xff]
  %v35 = vld [vmem:[%s0 + $0x68] sm:$0xf]
  %v36 = vld [vmem:[%s0 + $0x6c] sm:$0xff]
  %v37 = vld [vmem:[%s0 + $0x74] sm:$0xf]
  %v38 = vld [vmem:[%s0 + $0x78] sm:$0xff]
  %v39 = vld [vmem:[%s0 + $0x80] sm:$0xf]
  %v40 = vld [vmem:[%s0 + $0x84] sm:$0xff]
  %v41 = vld [vmem:[%s0 + $0x8c] sm:$0xf]
  %v42 = vld [vmem:[%s0 + $0x90] sm:$0xff]
  %v43 = vld [vmem:[%s0 + $0x98] sm:$0xf]
  %v44 = vld [vmem:[%s0 + $0x9c] sm:$0xff]
  %v45 = vld [vmem:[%s0 + $0xa4] sm:$0xf]
  %v46 = vld [vmem:[%s0 + $0xa8] sm:$0xff]
  %v47 = vld [vmem:[%s0 + $0xb0] sm:$0xf]
  %v48 = vld [vmem:[%s0 + $0xb4] sm:$0xff]
  %v49 = vld [vmem:[%s0 + $0xbc] sm:$0xf]
  %v50 = vld [vmem:[%s1] sm:$0xf]
  %v51 = vld [vmem:[%s1 + $0x4] sm:$0xf]
  %v52 = vld [vmem:[%s1 + $0x8] sm:$0xf]
  %v53 = vld [vmem:[%s1 + $0xc] sm:$0xf]
  %v54 = vld [vmem:[%s1 + $0x10] sm:$0xf]
  %v55 = vld [vmem:[%s1 + $0x14] sm:$0xf]
  %v56 = vld [vmem:[%s1 + $0x18] sm:$0xf]
  %v57 = vld [vmem:[%s1 + $0x1c] sm:$0xf]
  %v58 = vld [vmem:[%s1 + $0x20] sm:$0xf]
  %v59 = vld [vmem:[%s1 + $0x24] sm:$0xf]
  %v60 = vld [vmem:[%s1 + $0x28] sm:$0xf]
  %v61 = vld [vmem:[%s1 + $0x2c] sm:$0xf]
  %v62 = vld [vmem:[%s1 + $0x30] sm:$0xf]
  %v63 = vld [vmem:[%s1 + $0x34] sm:$0xf]
  %v64 = vld [vmem:[%s1 + $0x38] sm:$0xf]
  %v65 = vld [vmem:[%s1 + $0x3c] sm:$0xf]
  %v66 = vld [vmem:[%s1 + $0x40] sm:$0xf]
  %v67 = vld [vmem:[%s1 + $0x44] sm:$0xf]
  %v68 = vld [vmem:[%s1 + $0x48] sm:$0xf]
  %v69 = vld [vmem:[%s1 + $0x4c] sm:$0xf]
  %v70 = vld [vmem:[%s1 + $0x50] sm:$0xf]
  %v71 = vld [vmem:[%s1 + $0x54] sm:$0xf]
  %v72 = vld [vmem:[%s1 + $0x58] sm:$0xf]
  %v73 = vld [vmem:[%s1 + $0x5c] sm:$0xf]
  %v74 = vld [vmem:[%s1 + $0x60] sm:$0xf]
  %v75 = vld [vmem:[%s1 + $0x64] sm:$0xf]
  %v76 = vld [vmem:[%s1 + $0x68] sm:$0xf]
  %v77 = vld [vmem:[%s1 + $0x6c] sm:$0xf]
  %v78 = vld [vmem:[%s1 + $0x70] sm:$0xf]
  %v79 = vld [vmem:[%s1 + $0x74] sm:$0xf]
  %v80 = vld [vmem:[%s1 + $0x78] sm:$0xf]
  %v81 = vld [vmem:[%s1 + $0x7c] sm:$0xf]
  %v82 = vld [vmem:[%s1 + $0x80] sm:$0xf]
  %v83 = vld [vmem:[%s1 + $0x84] sm:$0xf]
  %v84 = vld [vmem:[%s1 + $0x88] sm:$0xf]
  %v85 = vld [vmem:[%s1 + $0x8c] sm:$0xf]
  %v86 = vld [vmem:[%s2] sm:$0xf]
  %v87 = vld [vmem:[%s2 + $0x4] sm:$0xf]
  %v88 = vld [vmem:[%s2 + $0x8] sm:$0xf]
  %v89 = vld [vmem:[%s2 + $0xc] sm:$0xf]
  %v90 = vld [vmem:[%s2 + $0x10] sm:$0xf]
  %v91 = vld [vmem:[%s2 + $0x14] sm:$0xf]
  %v92 = vld [vmem:[%s2 + $0x18] sm:$0xf]
  %v93 = vld [vmem:[%s2 + $0x1c] sm:$0xf]
  %v94 = vld [vmem:[%s2 + $0x20] sm:$0xf]
  %v95 = vld [vmem:[%s2 + $0x24] sm:$0xf]
  %v96 = vld [vmem:[%s2 + $0x28] sm:$0xf]
  %v97 = vld [vmem:[%s2 + $0x2c] sm:$0xf]
  %v98 = vld [vmem:[%s2 + $0x30] sm:$0xf]
  %v99 = vld [vmem:[%s2 + $0x34] sm:$0xf]
  %v100 = vld [vmem:[%s2 + $0x38] sm:$0xf]
  %v101 = vld [vmem:[%s2 + $0x3c] sm:$0xf]
  %v102 = vld [vmem:[%s3] sm:$0xf]
  %v103 = vld [vmem:[%s3 + $0x4] sm:$0xf]
  %v120 = vunpack.c.l.b16 %v86
  %v121 = vunpack.c.l.b16 %v87
  %v122 = vunpack.c.l.b16 %v88
  %v123 = vunpack.c.l.b16 %v89
  %v124 = vunpack.c.l.b16 %v90
  %v125 = vunpack.c.l.b16 %v91
  %v126 = vunpack.c.l.b16 %v92
  %v127 = vunpack.c.l.b16 %v93
  %v128 = vunpack.c.l.b16 %v94
  %v129 = vunpack.c.l.b16 %v95
  %v130 = vunpack.c.l.b16 %v96
  %v131 = vunpack.c.l.b16 %v97
  %v132 = vunpack.c.l.b16 %v98
  %v133 = vunpack.c.l.b16 %v99
  %v134 = vunpack.c.l.b16 %v100
  %v135 = vunpack.c.l.b16 %v101
  %v136 = vpack.c.b16 %v121, %v120
  %v137 = vpack.c.b16 %v123, %v122
  %v138 = vpack.c.b16 %v125, %v124
  %v139 = vpack.c.b16 %v127, %v126
  %v140 = vpack.c.b16 %v129, %v128
  %v141 = vpack.c.b16 %v131, %v130
  %v142 = vpack.c.b16 %v133, %v132
  %v143 = vpack.c.b16 %v135, %v134
  %v146 = vunpack.c.l.b16 %v102
  %v147 = vunpack.c.l.b16 %v103
  %v148 = vpack.c.b16 %v147, %v146
  %vm150 = vcmask 130048
  %v152 = vsel %vm150, %v136, 0
  %v155 = vsel %vm150, %v137, 0
  %v158 = vsel %vm150, %v138, 0
  %v161 = vsel %vm150, %v139, 0
  %v164 = vsel %vm150, %v140, 0
  %v167 = vsel %vm150, %v141, 0
  %v170 = vsel %vm150, %v142, 0
  %v173 = vsel %vm150, %v143, 0
  %175 = vmatprep.subr.bf16.mxu0 0
  %176 = vmatpush1.bf16.msra.mxu0 %v148
  %177 = vmatprep.subr.bf16.mxu0 0
  %178 = vmatpush1.bf16.msra.mxu0 0
  %179 = vmatprep.subr.bf16.mxu0 0
  %180 = vmatpush1.bf16.msra.mxu0 0
  %181 = vmatprep.subr.bf16.mxu0 0
  %182 = vmatpush1.bf16.msra.mxu0 0
  %183 = vmatprep.subr.bf16.mxu0 0
  %184 = vmatpush1.bf16.msra.mxu0 0
  %185 = vmatprep.subr.bf16.mxu0 0
  %186 = vmatpush1.bf16.msra.mxu0 0
  %187 = vmatprep.subr.bf16.mxu0 0
  %188 = vmatpush1.bf16.msra.mxu0 0
  %189 = vmatprep.subr.bf16.mxu0 0
  %190 = vmatpush1.bf16.msra.mxu0 0
  %191 = vmatprep.subr.bf16.mxu0 0
  %192 = vmatpush1.bf16.msra.mxu0 0
  %193 = vmatprep.subr.bf16.mxu0 0
  %194 = vmatpush1.bf16.msra.mxu0 0
  %195 = vmatprep.subr.bf16.mxu0 0
  %196 = vmatpush1.bf16.msra.mxu0 0
  %197 = vmatprep.subr.bf16.mxu0 0
  %198 = vmatpush1.bf16.msra.mxu0 0
  %199 = vmatprep.subr.bf16.mxu0 0
  %200 = vmatpush1.bf16.msra.mxu0 0
  %201 = vmatprep.subr.bf16.mxu0 0
  %202 = vmatpush1.bf16.msra.mxu0 0
  %203 = vmatprep.subr.bf16.mxu0 0
  %204 = vmatpush1.bf16.msra.mxu0 0
  %205 = vmatprep.subr.bf16.mxu0 0
  %206 = vmatpush1.bf16.msra.mxu0 0
  %207 = vmatprep.mubr.bf16.mxu0 0
  %208 = vmatmul.mubr.bf16.gmra.mrb[0].mxu0 %v152
  %v209 = vpop.f32.mrb[0].mxu0
  %v210 = vadd.f32 0.0, %v209
  %v211 = vpop.f32.mrb[0].mxu0
  %v212 = vpop.f32.mrb[0].mxu0
  %v213 = vadd.f32 0.0, %v212
  %v214 = vpop.f32.mrb[0].mxu0
  %215 = vmatprep.mubr.bf16.mxu0 0
  %216 = vmatmul.mubr.bf16.gmra.mrb[0].mxu0 %v155
  %v217 = vpop.f32.mrb[0].mxu0
  %v218 = vadd.f32 0.0, %v217
  %v219 = vpop.f32.mrb[0].mxu0
  %v220 = vpop.f32.mrb[0].mxu0
  %v221 = vadd.f32 0.0, %v220
  %v222 = vpop.f32.mrb[0].mxu0
  %223 = vmatprep.mubr.bf16.mxu0 0
  %224 = vmatmul.mubr.bf16.gmra.mrb[0].mxu0 %v158
  %v225 = vpop.f32.mrb[0].mxu0
  %v226 = vadd.f32 0.0, %v225
  %v227 = vpop.f32.mrb[0].mxu0
  %v228 = vpop.f32.mrb[0].mxu0
  %v229 = vadd.f32 0.0, %v228
  %v230 = vpop.f32.mrb[0].mxu0
  %231 = vmatprep.mubr.bf16.mxu0 0
  %232 = vmatmul.mubr.bf16.gmra.mrb[0].mxu0 %v161
  %v233 = vpop.f32.mrb[0].mxu0
  %v234 = vadd.f32 0.0, %v233
  %v235 = vpop.f32.mrb[0].mxu0
  %v236 = vpop.f32.mrb[0].mxu0
  %v237 = vadd.f32 0.0, %v236
  %v238 = vpop.f32.mrb[0].mxu0
  %239 = vmatprep.mubr.bf16.mxu0 0
  %240 = vmatmul.mubr.bf16.gmra.mrb[0].mxu0 %v164
  %v241 = vpop.f32.mrb[0].mxu0
  %v242 = vadd.f32 0.0, %v241
  %v243 = vpop.f32.mrb[0].mxu0
  %v244 = vpop.f32.mrb[0].mxu0
  %v245 = vadd.f32 0.0, %v244
  %v246 = vpop.f32.mrb[0].mxu0
  %247 = vmatprep.mubr.bf16.mxu0 0
  %248 = vmatmul.mubr.bf16.gmra.mrb[0].mxu0 %v167
  %v249 = vpop.f32.mrb[0].mxu0
  %v250 = vadd.f32 0.0, %v249
  %v251 = vpop.f32.mrb[0].mxu0
  %v252 = vpop.f32.mrb[0].mxu0
  %v253 = vadd.f32 0.0, %v252
  %v254 = vpop.f32.mrb[0].mxu0
  %255 = vmatprep.mubr.bf16.mxu0 0
  %256 = vmatmul.mubr.bf16.gmra.mrb[0].mxu0 %v170
  %v257 = vpop.f32.mrb[0].mxu0
  %v258 = vadd.f32 0.0, %v257
  %v259 = vpop.f32.mrb[0].mxu0
  %v260 = vpop.f32.mrb[0].mxu0
  %v261 = vadd.f32 0.0, %v260
  %v262 = vpop.f32.mrb[0].mxu0
  %263 = vmatprep.mubr.bf16.mxu0 0
  %264 = vmatmul.mubr.bf16.gmra.mrb[0].mxu0 %v173
  %v265 = vpop.f32.mrb[0].mxu0
  %v266 = vadd.f32 0.0, %v265
  %v267 = vpop.f32.mrb[0].mxu0
  %v268 = vpop.f32.mrb[0].mxu0
  %v269 = vadd.f32 0.0, %v268
  %v270 = vpop.f32.mrb[0].mxu0
  %271 = vdwg.mxu0
  %v304 = vunpack.c.l.b16 %v18
  %v305 = vunpack.c.h.b16 %v18
  %v306 = vunpack.c.l.b16 %v19
  %v307 = vunpack.c.l.b16 %v20
  %v308 = vunpack.c.h.b16 %v20
  %v309 = vunpack.c.l.b16 %v21
  %v310 = vunpack.c.l.b16 %v22
  %v311 = vunpack.c.h.b16 %v22
  %v312 = vunpack.c.l.b16 %v23
  %v313 = vunpack.c.l.b16 %v24
  %v314 = vunpack.c.h.b16 %v24
  %v315 = vunpack.c.l.b16 %v25
  %v316 = vunpack.c.l.b16 %v26
  %v317 = vunpack.c.h.b16 %v26
  %v318 = vunpack.c.l.b16 %v27
  %v319 = vunpack.c.l.b16 %v28
  %v320 = vunpack.c.h.b16 %v28
  %v321 = vunpack.c.l.b16 %v29
  %v322 = vunpack.c.l.b16 %v30
  %v323 = vunpack.c.h.b16 %v30
  %v324 = vunpack.c.l.b16 %v31
  %v325 = vunpack.c.l.b16 %v32
  %v326 = vunpack.c.h.b16 %v32
  %v327 = vunpack.c.l.b16 %v33
  %v328 = vunpack.c.l.b16 %v34
  %v329 = vunpack.c.h.b16 %v34
  %v330 = vunpack.c.l.b16 %v35
  %v331 = vunpack.c.l.b16 %v36
  %v332 = vunpack.c.h.b16 %v36
  %v333 = vunpack.c.l.b16 %v37
  %v334 = vunpack.c.l.b16 %v38
  %v335 = vunpack.c.h.b16 %v38
  %v336 = vunpack.c.l.b16 %v39
  %v337 = vunpack.c.l.b16 %v40
  %v338 = vunpack.c.h.b16 %v40
  %v339 = vunpack.c.l.b16 %v41
  %v340 = vunpack.c.l.b16 %v42
  %v341 = vunpack.c.h.b16 %v42
  %v342 = vunpack.c.l.b16 %v43
  %v343 = vunpack.c.l.b16 %v44
  %v344 = vunpack.c.h.b16 %v44
  %v345 = vunpack.c.l.b16 %v45
  %v346 = vunpack.c.l.b16 %v46
  %v347 = vunpack.c.h.b16 %v46
  %v348 = vunpack.c.l.b16 %v47
  %v349 = vunpack.c.l.b16 %v48
  %v350 = vunpack.c.h.b16 %v48
  %v351 = vunpack.c.l.b16 %v49
  %v352 = vpack.c.b16 %v307, %v304
  %v353 = vpack.c.b16 %v308, %v305
  %v354 = vpack.c.b16 %v309, %v306
  %v355 = vpack.c.b16 %v313, %v310
  %v356 = vpack.c.b16 %v314, %v311
  %v357 = vpack.c.b16 %v315, %v312
  %v358 = vpack.c.b16 %v319, %v316
  %v359 = vpack.c.b16 %v320, %v317
  %v360 = vpack.c.b16 %v321, %v318
  %v361 = vpack.c.b16 %v325, %v322
  %v362 = vpack.c.b16 %v326, %v323
  %v363 = vpack.c.b16 %v327, %v324
  %v364 = vpack.c.b16 %v331, %v328
  %v365 = vpack.c.b16 %v332, %v329
  %v366 = vpack.c.b16 %v333, %v330
  %v367 = vpack.c.b16 %v337, %v334
  %v368 = vpack.c.b16 %v338, %v335
  %v369 = vpack.c.b16 %v339, %v336
  %v370 = vpack.c.b16 %v343, %v340
  %v371 = vpack.c.b16 %v344, %v341
  %v372 = vpack.c.b16 %v345, %v342
  %v373 = vpack.c.b16 %v349, %v346
  %v374 = vpack.c.b16 %v350, %v347
  %v375 = vpack.c.b16 %v351, %v348
  %v428 = vunpack.c.l.b16 %v50
  %v429 = vunpack.c.l.b16 %v51
  %v430 = vunpack.c.l.b16 %v52
  %v431 = vunpack.c.l.b16 %v53
  %v432 = vunpack.c.l.b16 %v54
  %v433 = vunpack.c.l.b16 %v55
  %v434 = vunpack.c.l.b16 %v56
  %v435 = vunpack.c.l.b16 %v57
  %v436 = vunpack.c.l.b16 %v58
  %v437 = vunpack.c.l.b16 %v59
  %v438 = vunpack.c.l.b16 %v60
  %v439 = vunpack.c.l.b16 %v61
  %v440 = vunpack.c.l.b16 %v62
  %v441 = vunpack.c.l.b16 %v63
  %v442 = vunpack.c.l.b16 %v64
  %v443 = vunpack.c.l.b16 %v65
  %v444 = vunpack.c.l.b16 %v66
  %v445 = vunpack.c.l.b16 %v67
  %v446 = vunpack.c.l.b16 %v68
  %v447 = vunpack.c.l.b16 %v69
  %v448 = vunpack.c.l.b16 %v70
  %v449 = vunpack.c.l.b16 %v71
  %v450 = vunpack.c.l.b16 %v72
  %v451 = vunpack.c.l.b16 %v73
  %v452 = vunpack.c.l.b16 %v74
  %v453 = vunpack.c.l.b16 %v75
  %v454 = vunpack.c.l.b16 %v76
  %v455 = vunpack.c.l.b16 %v77
  %v456 = vunpack.c.l.b16 %v78
  %v457 = vunpack.c.l.b16 %v79
  %v458 = vunpack.c.l.b16 %v80
  %v459 = vunpack.c.l.b16 %v81
  %v460 = vunpack.c.l.b16 %v82
  %v461 = vunpack.c.l.b16 %v83
  %v462 = vunpack.c.l.b16 %v84
  %v463 = vunpack.c.l.b16 %v85
  %v464 = vpack.c.b16 %v429, %v428
  %v465 = vpack.c.b16 %v431, %v430
  %v466 = vpack.c.b16 %v433, %v432
  %v467 = vpack.c.b16 %v435, %v434
  %v468 = vpack.c.b16 %v437, %v436
  %v469 = vpack.c.b16 %v439, %v438
  %v470 = vpack.c.b16 %v441, %v440
  %v471 = vpack.c.b16 %v443, %v442
  %v472 = vpack.c.b16 %v445, %v444
  %v473 = vpack.c.b16 %v447, %v446
  %v474 = vpack.c.b16 %v449, %v448
  %v475 = vpack.c.b16 %v451, %v450
  %v476 = vpack.c.b16 %v453, %v452
  %v477 = vpack.c.b16 %v455, %v454
  %v478 = vpack.c.b16 %v457, %v456
  %v479 = vpack.c.b16 %v459, %v458
  %v480 = vpack.c.b16 %v461, %v460
  %v481 = vpack.c.b16 %v463, %v462
  %vm500 = vcmask 261120
  %v502 = vsel %vm500, %v354, 0
  %v505 = vsel %vm500, %v357, 0
  %v508 = vsel %vm500, %v360, 0
  %v511 = vsel %vm500, %v363, 0
  %v514 = vsel %vm500, %v366, 0
  %v517 = vsel %vm500, %v369, 0
  %v520 = vsel %vm500, %v372, 0
  %v523 = vsel %vm500, %v375, 0
  %525 = vmatprep.subr.bf16.mxu0 0
  %526 = vmatpush1.bf16.msra.mxu0 %v464
  %527 = vmatprep.subr.bf16.mxu0 0
  %528 = vmatpush1.bf16.msra.mxu0 %v465
  %529 = vmatprep.subr.bf16.mxu0 0
  %530 = vmatpush1.bf16.msra.mxu0 %v466
  %531 = vmatprep.subr.bf16.mxu0 0
  %532 = vmatpush1.bf16.msra.mxu0 %v467
  %533 = vmatprep.subr.bf16.mxu0 0
  %534 = vmatpush1.bf16.msra.mxu0 %v468
  %535 = vmatprep.subr.bf16.mxu0 0
  %536 = vmatpush1.bf16.msra.mxu0 %v469
  %537 = vmatprep.subr.bf16.mxu0 0
  %538 = vmatpush1.bf16.msra.mxu0 %v470
  %539 = vmatprep.subr.bf16.mxu0 0
  %540 = vmatpush1.bf16.msra.mxu0 %v471
  %541 = vmatprep.subr.bf16.mxu0 0
  %542 = vmatpush1.bf16.msra.mxu0 %v472
  %543 = vmatprep.subr.bf16.mxu0 0
  %544 = vmatpush1.bf16.msra.mxu0 %v473
  %545 = vmatprep.subr.bf16.mxu0 0
  %546 = vmatpush1.bf16.msra.mxu0 %v474
  %547 = vmatprep.subr.bf16.mxu0 0
  %548 = vmatpush1.bf16.msra.mxu0 %v475
  %549 = vmatprep.subr.bf16.mxu0 0
  %550 = vmatpush1.bf16.msra.mxu0 %v476
  %551 = vmatprep.subr.bf16.mxu0 0
  %552 = vmatpush1.bf16.msra.mxu0 %v477
  %553 = vmatprep.subr.bf16.mxu0 0
  %554 = vmatpush1.bf16.msra.mxu0 %v478
  %555 = vmatprep.subr.bf16.mxu0 0
  %556 = vmatpush1.bf16.msra.mxu0 %v479
  %557 = vmatprep.mubr.bf16.mxu0 %v353
  %558 = vmatmul.mubr.bf16.gmra.mrb[0].mxu0 %v352
  %v559 = vpop.f32.mrb[0].mxu0
  %v560 = vadd.f32 %v210, %v559
  %v561 = vpop.f32.mrb[0].mxu0
  %v562 = vpop.f32.mrb[0].mxu0
  %v563 = vadd.f32 %v213, %v562
  %v564 = vpop.f32.mrb[0].mxu0
  %565 = vmatprep.mubr.bf16.mxu0 %v356
  %566 = vmatmul.mubr.bf16.gmra.mrb[0].mxu0 %v355
  %v567 = vpop.f32.mrb[0].mxu0
  %v568 = vadd.f32 %v218, %v567
  %v569 = vpop.f32.mrb[0].mxu0
  %v570 = vpop.f32.mrb[0].mxu0
  %v571 = vadd.f32 %v221, %v570
  %v572 = vpop.f32.mrb[0].mxu0
  %573 = vmatprep.mubr.bf16.mxu0 %v359
  %574 = vmatmul.mubr.bf16.gmra.mrb[0].mxu0 %v358
  %v575 = vpop.f32.mrb[0].mxu0
  %v576 = vadd.f32 %v226, %v575
  %v577 = vpop.f32.mrb[0].mxu0
  %v578 = vpop.f32.mrb[0].mxu0
  %v579 = vadd.f32 %v229, %v578
  %v580 = vpop.f32.mrb[0].mxu0
  %581 = vmatprep.mubr.bf16.mxu0 %v362
  %582 = vmatmul.mubr.bf16.gmra.mrb[0].mxu0 %v361
  %v583 = vpop.f32.mrb[0].mxu0
  %v584 = vadd.f32 %v234, %v583
  %v585 = vpop.f32.mrb[0].mxu0
  %v586 = vpop.f32.mrb[0].mxu0
  %v587 = vadd.f32 %v237, %v586
  %v588 = vpop.f32.mrb[0].mxu0
  %589 = vmatprep.mubr.bf16.mxu0 %v365
  %590 = vmatmul.mubr.bf16.gmra.mrb[0].mxu0 %v364
  %v591 = vpop.f32.mrb[0].mxu0
  %v592 = vadd.f32 %v242, %v591
  %v593 = vpop.f32.mrb[0].mxu0
  %v594 = vpop.f32.mrb[0].mxu0
  %v595 = vadd.f32 %v245, %v594
  %v596 = vpop.f32.mrb[0].mxu0
  %597 = vmatprep.mubr.bf16.mxu0 %v368
  %598 = vmatmul.mubr.bf16.gmra.mrb[0].mxu0 %v367
  %v599 = vpop.f32.mrb[0].mxu0
  %v600 = vadd.f32 %v250, %v599
  %v601 = vpop.f32.mrb[0].mxu0
  %v602 = vpop.f32.mrb[0].mxu0
  %v603 = vadd.f32 %v253, %v602
  %v604 = vpop.f32.mrb[0].mxu0
  %605 = vmatprep.mubr.bf16.mxu0 %v371
  %606 = vmatmul.mubr.bf16.gmra.mrb[0].mxu0 %v370
  %v607 = vpop.f32.mrb[0].mxu0
  %v608 = vadd.f32 %v258, %v607
  %v609 = vpop.f32.mrb[0].mxu0
  %v610 = vpop.f32.mrb[0].mxu0
  %v611 = vadd.f32 %v261, %v610
  %v612 = vpop.f32.mrb[0].mxu0
  %613 = vmatprep.mubr.bf16.mxu0 %v374
  %614 = vmatmul.mubr.bf16.gmra.mrb[0].mxu0 %v373
  %v615 = vpop.f32.mrb[0].mxu0
  %v616 = vadd.f32 %v266, %v615
  %v617 = vpop.f32.mrb[0].mxu0
  %v618 = vpop.f32.mrb[0].mxu0
  %v619 = vadd.f32 %v269, %v618
  %v620 = vpop.f32.mrb[0].mxu0
  %621 = vdwg.mxu0
  %622 = vmatprep.subr.bf16.mxu0 0
  %623 = vmatpush1.bf16.msra.mxu0 %v480
  %624 = vmatprep.subr.bf16.mxu0 0
  %625 = vmatpush1.bf16.msra.mxu0 %v481
  %626 = vmatprep.subr.bf16.mxu0 0
  %627 = vmatpush1.bf16.msra.mxu0 0
  %628 = vmatprep.subr.bf16.mxu0 0
  %629 = vmatpush1.bf16.msra.mxu0 0
  %630 = vmatprep.subr.bf16.mxu0 0
  %631 = vmatpush1.bf16.msra.mxu0 0
  %632 = vmatprep.subr.bf16.mxu0 0
  %633 = vmatpush1.bf16.msra.mxu0 0
  %634 = vmatprep.subr.bf16.mxu0 0
  %635 = vmatpush1.bf16.msra.mxu0 0
  %636 = vmatprep.subr.bf16.mxu0 0
  %637 = vmatpush1.bf16.msra.mxu0 0
  %638 = vmatprep.subr.bf16.mxu0 0
  %639 = vmatpush1.bf16.msra.mxu0 0
  %640 = vmatprep.subr.bf16.mxu0 0
  %641 = vmatpush1.bf16.msra.mxu0 0
  %642 = vmatprep.subr.bf16.mxu0 0
  %643 = vmatpush1.bf16.msra.mxu0 0
  %644 = vmatprep.subr.bf16.mxu0 0
  %645 = vmatpush1.bf16.msra.mxu0 0
  %646 = vmatprep.subr.bf16.mxu0 0
  %647 = vmatpush1.bf16.msra.mxu0 0
  %648 = vmatprep.subr.bf16.mxu0 0
  %649 = vmatpush1.bf16.msra.mxu0 0
  %650 = vmatprep.subr.bf16.mxu0 0
  %651 = vmatpush1.bf16.msra.mxu0 0
  %652 = vmatprep.subr.bf16.mxu0 0
  %653 = vmatpush1.bf16.msra.mxu0 0
  %654 = vmatprep.mubr.bf16.mxu0 0
  %655 = vmatmul.mubr.bf16.gmra.mrb[0].mxu0 %v502
  %v656 = vpop.f32.mrb[0].mxu0
  %v657 = vadd.f32 %v560, %v656
  %v658 = vpop.f32.mrb[0].mxu0
  %v659 = vpop.f32.mrb[0].mxu0
  %v660 = vadd.f32 %v563, %v659
  %v661 = vpop.f32.mrb[0].mxu0
  %662 = vmatprep.mubr.bf16.mxu0 0
  %663 = vmatmul.mubr.bf16.gmra.mrb[0].mxu0 %v505
  %v664 = vpop.f32.mrb[0].mxu0
  %v665 = vadd.f32 %v568, %v664
  %v666 = vpop.f32.mrb[0].mxu0
  %v667 = vpop.f32.mrb[0].mxu0
  %v668 = vadd.f32 %v571, %v667
  %v669 = vpop.f32.mrb[0].mxu0
  %670 = vmatprep.mubr.bf16.mxu0 0
  %671 = vmatmul.mubr.bf16.gmra.mrb[0].mxu0 %v508
  %v672 = vpop.f32.mrb[0].mxu0
  %v673 = vadd.f32 %v576, %v672
  %v674 = vpop.f32.mrb[0].mxu0
  %v675 = vpop.f32.mrb[0].mxu0
  %v676 = vadd.f32 %v579, %v675
  %v677 = vpop.f32.mrb[0].mxu0
  %678 = vmatprep.mubr.bf16.mxu0 0
  %679 = vmatmul.mubr.bf16.gmra.mrb[0].mxu0 %v511
  %v680 = vpop.f32.mrb[0].mxu0
  %v681 = vadd.f32 %v584, %v680
  %v682 = vpop.f32.mrb[0].mxu0
  %v683 = vpop.f32.mrb[0].mxu0
  %v684 = vadd.f32 %v587, %v683
  %v685 = vpop.f32.mrb[0].mxu0
  %686 = vmatprep.mubr.bf16.mxu0 0
  %687 = vmatmul.mubr.bf16.gmra.mrb[0].mxu0 %v514
  %v688 = vpop.f32.mrb[0].mxu0
  %v689 = vadd.f32 %v592, %v688
  %v690 = vpop.f32.mrb[0].mxu0
  %v691 = vpop.f32.mrb[0].mxu0
  %v692 = vadd.f32 %v595, %v691
  %v693 = vpop.f32.mrb[0].mxu0
  %694 = vmatprep.mubr.bf16.mxu0 0
  %695 = vmatmul.mubr.bf16.gmra.mrb[0].mxu0 %v517
  %v696 = vpop.f32.mrb[0].mxu0
  %v697 = vadd.f32 %v600, %v696
  %v698 = vpop.f32.mrb[0].mxu0
  %v699 = vpop.f32.mrb[0].mxu0
  %v700 = vadd.f32 %v603, %v699
  %v701 = vpop.f32.mrb[0].mxu0
  %702 = vmatprep.mubr.bf16.mxu0 0
  %703 = vmatmul.mubr.bf16.gmra.mrb[0].mxu0 %v520
  %v704 = vpop.f32.mrb[0].mxu0
  %v705 = vadd.f32 %v608, %v704
  %v706 = vpop.f32.mrb[0].mxu0
  %v707 = vpop.f32.mrb[0].mxu0
  %v708 = vadd.f32 %v611, %v707
  %v709 = vpop.f32.mrb[0].mxu0
  %710 = vmatprep.mubr.bf16.mxu0 0
  %711 = vmatmul.mubr.bf16.gmra.mrb[0].mxu0 %v523
  %v712 = vpop.f32.mrb[0].mxu0
  %v713 = vadd.f32 %v616, %v712
  %v714 = vpop.f32.mrb[0].mxu0
  %v715 = vpop.f32.mrb[0].mxu0
  %v716 = vadd.f32 %v619, %v715
  %v717 = vpop.f32.mrb[0].mxu0
  %718 = vdwg.mxu0
  %719 = vst.msk [vmem:[%s4] sm:$0xff] %vm500, %v657
  %720 = vst.msk [vmem:[%s4 + $0x8] sm:$0xff] %vm500, %v660
  %721 = vst.msk [vmem:[%s4 + $0x10] sm:$0xff] %vm500, %v665
  %722 = vst.msk [vmem:[%s4 + $0x18] sm:$0xff] %vm500, %v668
  %723 = vst.msk [vmem:[%s4 + $0x20] sm:$0xff] %vm500, %v673
  %724 = vst.msk [vmem:[%s4 + $0x28] sm:$0xff] %vm500, %v676
  %725 = vst.msk [vmem:[%s4 + $0x30] sm:$0xff] %vm500, %v681
  %726 = vst.msk [vmem:[%s4 + $0x38] sm:$0xff] %vm500, %v684
  %727 = vst.msk [vmem:[%s4 + $0x40] sm:$0xff] %vm500, %v689
  %728 = vst.msk [vmem:[%s4 + $0x48] sm:$0xff] %vm500, %v692
  %729 = vst.msk [vmem:[%s4 + $0x50] sm:$0xff] %vm500, %v697
  %730 = vst.msk [vmem:[%s4 + $0x58] sm:$0xff] %vm500, %v700
  %731 = vst.msk [vmem:[%s4 + $0x60] sm:$0xff] %vm500, %v705
  %732 = vst.msk [vmem:[%s4 + $0x68] sm:$0xff] %vm500, %v708
  %733 = vst.msk [vmem:[%s4 + $0x70] sm:$0xff] %vm500, %v713
  %734 = vst.msk [vmem:[%s4 + $0x78] sm:$0xff] %vm500, %v716
  // Predicated region
  $region18: #{forward_pruned.10} parent=0 // pred_check
    _
  $region19: #{forward_pruned.10} parent=0 // pred_check_branch
    %736 = sbr.rel (0) target = $region21
  $region20: #{forward_pruned.10} parent=0 // pred_region
    _
  $region21: #{forward_pruned.10} parent=0 // pred_fallthru
    _
  // Predicated region
  $region22: #{forward_pruned.10} parent=0 // pred_check
    _
  $region23: #{forward_pruned.10} parent=0 // pred_check_branch
    %738 = sbr.rel (0) target = $region25
  $region24: #{forward_pruned.10} parent=0 // pred_region
    _
  $region25: #{forward_pruned.10} parent=0 // pred_fallthru
    _

</llo_original>
